<compile_context>
chip_gen: v5e
topology: v5e:2x2
jax: 0.10.0
libtpu: 0.0.40
codegen_flags: <defaults>
</compile_context>

<pallas_src>
import functools

import jax
import jax.numpy as jnp
from jax.experimental import pallas as pl
from jax.experimental.pallas import tpu as pltpu

BN_EPS = 1e-5


# ----------------------------------------------------------------------------
# Fused kernel: one grid step = one image of one parallel branch.
# ----------------------------------------------------------------------------
def _basic_block_kernel(x_ref, w1_ref, w2_ref, s1_ref, b1_ref, s2_ref, b2_ref,
                        o_ref, xp_scr, y1p_scr, *, compute_dtype):
    # x_ref  : (1, 1, H, W, Cin)   one image of one branch (NHWC)
    # w1_ref : (3, 3*Cin,  Cmid)   shared conv1 weight, (kw, ci) folded into K
    # w2_ref : (3, 3*Cmid, Cout)   shared conv2 weight
    # s*/b*  : (1, 1, C)           folded per-branch BN scale / bias (f32)
    # o_ref  : (1, 1, H, W, Cout)
    # xp_scr : (H+2, W+2, Cin)     VMEM, zero-haloed input
    # y1p_scr: (H+2, W+2, Cmid)    VMEM, zero-haloed conv1 activation
    _, _, H, W, Cin = x_ref.shape
    Cmid = y1p_scr.shape[-1]
    Cout = o_ref.shape[-1]
    M = H * W

    def stage_padded(dst, interior):
        # Zero ONLY the 1-pixel halo ring; the interior is overwritten next,
        # so full-buffer zeroing would be pure wasted store traffic.
        c = dst.shape[-1]
        zrow = jnp.zeros((1, W + 2, c), dst.dtype)
        zcol = jnp.zeros((H + 2, 1, c), dst.dtype)
        dst[0:1, :, :] = zrow
        dst[H + 1:H + 2, :, :] = zrow
        dst[:, 0:1, :] = zcol
        dst[:, W + 1:W + 2, :] = zcol
        dst[1:H + 1, 1:W + 1, :] = interior.astype(dst.dtype)

    def conv3x3(src, w_ref, cin, cout):
        # src: zero-haloed (H+2, W+2, cin) scratch; w_ref: (3, 3*cin, cout).
        # One matmul per kernel row (K = 3*cin): no (M, 9*cin) im2col patch.
        acc = jnp.zeros((M, cout), jnp.float32)
        for kh in range(3):                       # static, unrolled
            taps = [src[kh:kh + H, kw:kw + W, :].reshape(M, cin)
                    for kw in range(3)]
            lhs = jnp.concatenate(taps, axis=-1).astype(compute_dtype)
            acc = acc + jnp.dot(lhs, w_ref[kh],
                                preferred_element_type=jnp.float32)
        return acc

    # -- conv1 (shared weight) + per-branch bn1 + relu ------------------------
    stage_padded(xp_scr, x_ref[0, 0])
    y1 = conv3x3(xp_scr, w1_ref, Cin, Cmid)
    y1 = jnp.maximum(y1 * s1_ref[0] + b1_ref[0], 0.0)      # f32 VPU math

    # -- conv2 + per-branch bn2 + residual + relu (activation stays in VMEM) --
    stage_padded(y1p_scr, y1.reshape(H, W, Cmid))
    y2 = conv3x3(y1p_scr, w2_ref, Cmid, Cout)
    y2 = y2 * s2_ref[0] + b2_ref[0]
    # Residual straight from the resident input block (Cin == Cout).
    y2 = y2.reshape(H, W, Cout) + x_ref[0, 0].astype(jnp.float32)
    o_ref[0, 0] = jnp.maximum(y2, 0.0).astype(o_ref.dtype)


def _basic_block_pallas(x, w1, w2, s1, b1, s2, b2, *, compute_dtype):
    """x: (P, N, H, W, Cin) NHWC branches.  w1/w2: (3,3,Ci,Co) HWIO, shared.
    s*/b*: (P, 1, C) folded per-branch BN affine.  Returns (P, N, H, W, Cout)."""
    P, N, H, W, Cin = x.shape
    Cmid = w1.shape[-1]
    Cout = w2.shape[-1]
    assert Cin == Cout, (
        "residual add needs inplanes == planes (stride=1, downsample=None)")

    # Fold (kw, ci) into the contraction dim and pre-cast the (constant)
    # weights once in the wrapper instead of on every grid step.
    w1r = w1.reshape(3, 3 * Cin, Cmid).astype(compute_dtype)
    w2r = w2.reshape(3, 3 * Cmid, Cout).astype(compute_dtype)

    return pl.pallas_call(
        functools.partial(_basic_block_kernel, compute_dtype=compute_dtype),
        out_shape=jax.ShapeDtypeStruct((P, N, H, W, Cout), x.dtype),
        grid=(P, N),
        in_specs=[
            pl.BlockSpec((1, 1, H, W, Cin), lambda p, n: (p, n, 0, 0, 0)),
            pl.BlockSpec((3, 3 * Cin, Cmid), lambda p, n: (0, 0, 0)),
            pl.BlockSpec((3, 3 * Cmid, Cout), lambda p, n: (0, 0, 0)),
            pl.BlockSpec((1, 1, Cmid), lambda p, n: (p, 0, 0)),
            pl.BlockSpec((1, 1, Cmid), lambda p, n: (p, 0, 0)),
            pl.BlockSpec((1, 1, Cout), lambda p, n: (p, 0, 0)),
            pl.BlockSpec((1, 1, Cout), lambda p, n: (p, 0, 0)),
        ],
        out_specs=pl.BlockSpec((1, 1, H, W, Cout),
                               lambda p, n: (p, n, 0, 0, 0)),
        scratch_shapes=[
            pltpu.VMEM((H + 2, W + 2, Cin), jnp.float32),   # zero-haloed input
            pltpu.VMEM((H + 2, W + 2, Cmid), jnp.float32),  # conv1 activation
        ],
        # Every (p, n) step is independent: both axes "parallel" shards work
        # over v7x's two TensorCores even when P == 1.  Per-step footprint is
        # tiny here, so the default scoped-VMEM limit is kept (safe on v7x's
        # 64 MiB physical VMEM).
        compiler_params=pltpu.CompilerParams(
            dimension_semantics=("parallel", "parallel")),
    )(x, w1r, w2r, s1, b1, s2, b2)


# ----------------------------------------------------------------------------
# Module wrapper (glue in plain JAX)
# ----------------------------------------------------------------------------
def _fold_bn(gamma, beta, mean, var):
    # gamma/beta/mean/var: (P, C) -> scale/bias: (P, 1, C)
    scale = gamma * jax.lax.rsqrt(var + BN_EPS)
    bias = beta - mean * scale
    return scale[:, None, :], bias[:, None, :]


@functools.partial(jax.jit, static_argnames=("compute_dtype",))
def _forward_impl(x_stacked_nchw, params, *, compute_dtype):
    x = jnp.transpose(x_stacked_nchw, (0, 1, 3, 4, 2))  # NCHW -> NHWC
    s1, b1 = _fold_bn(params["bn1_gamma"], params["bn1_beta"],
                      params["bn1_mean"], params["bn1_var"])
    s2, b2 = _fold_bn(params["bn2_gamma"], params["bn2_beta"],
                      params["bn2_mean"], params["bn2_var"])
    out = _basic_block_pallas(x, params["w1"], params["w2"], s1, b1, s2, b2,
                              compute_dtype=compute_dtype)
    return jnp.transpose(out, (0, 1, 4, 2, 3))  # back to NCHW


def basic_block_forward(x_stacked_nchw, params, compute_dtype=jnp.float32):
    """x_stacked_nchw: (P, N, C, H, W) -- the stacked list of parallel branches.
    compute_dtype=jnp.bfloat16 runs the conv matmuls at full MXU rate on
    v6e/v7x (f32 accumulation, f32 BN/ReLU).  Returns (P, N, C, H, W)."""
    return _forward_impl(x_stacked_nchw, params, compute_dtype=compute_dtype)


# ----------------------------------------------------------------------------
# Pure-JAX reference (for correctness check)
# ----------------------------------------------------------------------------
def _reference_forward(x_stacked_nchw, params):
    x = jnp.transpose(x_stacked_nchw, (0, 1, 3, 4, 2))  # NHWC
    s1, b1 = _fold_bn(params["bn1_gamma"], params["bn1_beta"],
                      params["bn1_mean"], params["bn1_var"])
    s2, b2 = _fold_bn(params["bn2_gamma"], params["bn2_beta"],
                      params["bn2_mean"], params["bn2_var"])

    def conv(z, w):  # z: (P,N,H,W,C)
        P = z.shape[0]
        return jnp.stack([
            jax.lax.conv_general_dilated(
                z[p], w, window_strides=(1, 1), padding="SAME",
                dimension_numbers=("NHWC", "HWIO", "NHWC"))
            for p in range(P)], axis=0)

    out = jnp.maximum(conv(x, params["w1"]) * s1[:, None, None]
                      + b1[:, None, None], 0.0)
    out = conv(out, params["w2"]) * s2[:, None, None] + b2[:, None, None]
    out = jnp.maximum(out + x, 0.0)
    return jnp.transpose(out, (0, 1, 4, 2, 3))


# ----------------------------------------------------------------------------
if __name__ == "__main__":
    # Small shapes: num_parallel=2, batch=2, inplanes=planes=32, spatial=16x16
    P, N, C, H, W = 2, 2, 32, 16, 16

    key = jax.random.PRNGKey(0)
    ks = jax.random.split(key, 11)

    x = jax.random.normal(ks[0], (P, N, C, H, W), jnp.float32)

    params = {
        # conv weights (HWIO), shared across branches, bias=False
        "w1": jax.random.normal(ks[1], (3, 3, C, C), jnp.float32) * 0.1,
        "w2": jax.random.normal(ks[2], (3, 3, C, C), jnp.float32) * 0.1,
        # per-branch BatchNorm (eval mode: running stats + affine)
        "bn1_gamma": jax.random.uniform(ks[3], (P, C), jnp.float32, 0.5, 1.5),
        "bn1_beta": jax.random.normal(ks[4], (P, C), jnp.float32) * 0.1,
        "bn1_mean": jax.random.normal(ks[5], (P, C), jnp.float32) * 0.1,
        "bn1_var": jax.random.uniform(ks[6], (P, C), jnp.float32, 0.5, 1.5),
        "bn2_gamma": jax.random.uniform(ks[7], (P, C), jnp.float32, 0.5, 1.5),
        "bn2_beta": jax.random.normal(ks[8], (P, C), jnp.float32) * 0.1,
        "bn2_mean": jax.random.normal(ks[9], (P, C), jnp.float32) * 0.1,
        "bn2_var": jax.random.uniform(ks[10], (P, C), jnp.float32, 0.5, 1.5),
    }

    ref = jax.block_until_ready(_reference_forward(x, params))

    # f32 path: strict check.
    out = jax.block_until_ready(basic_block_forward(x, params))
    assert out.shape == (P, N, C, H, W), out.shape
    err_f32 = float(jnp.max(jnp.abs(out - ref)))
    assert err_f32 < 1e-3, f"f32 kernel mismatch vs reference: {err_f32}"

    # bf16 MXU path (f32 accumulation): coarse sanity bound for the
    # reduced-precision matmuls (a real bug would be O(1)+ off).
    out_bf16 = jax.block_until_ready(
        basic_block_forward(x, params, compute_dtype=jnp.bfloat16))
    err_bf16 = float(jnp.max(jnp.abs(out_bf16 - ref)))
    assert err_bf16 < 5e-1, f"bf16 kernel mismatch vs reference: {err_bf16}"

    print("KERNEL_OK")
</pallas_src>

<mosaic_0001>
module attributes {stable_mosaic.version = 11 : i64} {
  func.func @_basic_block_kernel(%arg0: i32, %arg1: i32, %arg2: memref<1x1x16x16x32xf32, #tpu.memory_space<vmem>>, %arg3: memref<3x96x32xf32, #tpu.memory_space<vmem>>, %arg4: memref<3x96x32xf32, #tpu.memory_space<vmem>>, %arg5: memref<1x1x32xf32, #tpu.memory_space<vmem>>, %arg6: memref<1x1x32xf32, #tpu.memory_space<vmem>>, %arg7: memref<1x1x32xf32, #tpu.memory_space<vmem>>, %arg8: memref<1x1x32xf32, #tpu.memory_space<vmem>>, %arg9: memref<1x1x16x16x32xf32, #tpu.memory_space<vmem>>, %arg10: memref<18x18x32xf32, #tpu.memory_space<vmem>>, %arg11: memref<18x18x32xf32, #tpu.memory_space<vmem>>) attributes {dimension_semantics = [#tpu.dimension_semantics<parallel>, #tpu.dimension_semantics<parallel>], iteration_bounds = array<i64: 2, 2>, scalar_prefetch = 0 : i64, scratch_operands = 2 : i64, tpu.core_type = #tpu.core_type<tc>, window_params = [{transform_indices = @transform_0, window_bounds = array<i64: 1, 1, 16, 16, 32>}, {pipeline_mode = #tpu.pipeline_mode<synchronous>, transform_indices = @transform_1, window_bounds = array<i64: 3, 96, 32>}, {pipeline_mode = #tpu.pipeline_mode<synchronous>, transform_indices = @transform_2, window_bounds = array<i64: 3, 96, 32>}, {transform_indices = @transform_3, window_bounds = array<i64: 1, 1, 32>}, {transform_indices = @transform_4, window_bounds = array<i64: 1, 1, 32>}, {transform_indices = @transform_5, window_bounds = array<i64: 1, 1, 32>}, {transform_indices = @transform_6, window_bounds = array<i64: 1, 1, 32>}, {transform_indices = @transform_7, window_bounds = array<i64: 1, 1, 16, 16, 32>}]} {
    %c0 = arith.constant 0 : index
    %c0_0 = arith.constant 0 : index
    %c0_1 = arith.constant 0 : index
    %c0_2 = arith.constant 0 : index
    %c0_3 = arith.constant 0 : index
    %0 = vector.load %arg2[%c0, %c0_0, %c0_1, %c0_2, %c0_3] : memref<1x1x16x16x32xf32, #tpu.memory_space<vmem>>, vector<1x1x16x16x32xf32>
    %1 = vector.shape_cast %0 : vector<1x1x16x16x32xf32> to vector<16x16x32xf32>
    %cst = arith.constant 0.000000e+00 : f32
    %2 = vector.broadcast %cst : f32 to vector<1x18x32xf32>
    %cst_4 = arith.constant 0.000000e+00 : f32
    %3 = vector.broadcast %cst_4 : f32 to vector<18x1x32xf32>
    %c0_5 = arith.constant 0 : index
    %c0_6 = arith.constant 0 : index
    %c0_7 = arith.constant 0 : index
    %4 = vector.load %arg10[%c0_5, %c0_6, %c0_7] : memref<18x18x32xf32, #tpu.memory_space<vmem>>, vector<1x18x32xf32>
    tpu.vector_store %arg10[%c0_5, %c0_6, %c0_7], %2 {strides = array<i32>} : memref<18x18x32xf32, #tpu.memory_space<vmem>>, vector<1x18x32xf32>,
    %c17 = arith.constant 17 : index
    %c0_8 = arith.constant 0 : index
    %c0_9 = arith.constant 0 : index
    %5 = vector.load %arg10[%c17, %c0_8, %c0_9] : memref<18x18x32xf32, #tpu.memory_space<vmem>>, vector<1x18x32xf32>
    tpu.vector_store %arg10[%c17, %c0_8, %c0_9], %2 {strides = array<i32>} : memref<18x18x32xf32, #tpu.memory_space<vmem>>, vector<1x18x32xf32>,
    %c0_10 = arith.constant 0 : index
    %c0_11 = arith.constant 0 : index
    %c0_12 = arith.constant 0 : index
    %6 = vector.load %arg10[%c0_10, %c0_11, %c0_12] : memref<18x18x32xf32, #tpu.memory_space<vmem>>, vector<18x1x32xf32>
    tpu.vector_store %arg10[%c0_10, %c0_11, %c0_12], %3 {strides = array<i32>} : memref<18x18x32xf32, #tpu.memory_space<vmem>>, vector<18x1x32xf32>,
    %c0_13 = arith.constant 0 : index
    %c17_14 = arith.constant 17 : index
    %c0_15 = arith.constant 0 : index
    %7 = vector.load %arg10[%c0_13, %c17_14, %c0_15] : memref<18x18x32xf32, #tpu.memory_space<vmem>>, vector<18x1x32xf32>
    tpu.vector_store %arg10[%c0_13, %c17_14, %c0_15], %3 {strides = array<i32>} : memref<18x18x32xf32, #tpu.memory_space<vmem>>, vector<18x1x32xf32>,
    %c1 = arith.constant 1 : index
    %c1_16 = arith.constant 1 : index
    %c0_17 = arith.constant 0 : index
    %8 = vector.load %arg10[%c1, %c1_16, %c0_17] : memref<18x18x32xf32, #tpu.memory_space<vmem>>, vector<16x16x32xf32>
    tpu.vector_store %arg10[%c1, %c1_16, %c0_17], %1 {strides = array<i32>} : memref<18x18x32xf32, #tpu.memory_space<vmem>>, vector<16x16x32xf32>,
    %cst_18 = arith.constant 0.000000e+00 : f32
    %9 = vector.broadcast %cst_18 : f32 to vector<256x32xf32>
    %c0_19 = arith.constant 0 : index
    %c0_20 = arith.constant 0 : index
    %c0_21 = arith.constant 0 : index
    %10 = vector.load %arg10[%c0_19, %c0_20, %c0_21] : memref<18x18x32xf32, #tpu.memory_space<vmem>>, vector<16x16x32xf32>
    %11 = vector.shape_cast %10 : vector<16x16x32xf32> to vector<256x32xf32>
    %c0_22 = arith.constant 0 : index
    %c1_23 = arith.constant 1 : index
    %c0_24 = arith.constant 0 : index
    %12 = vector.load %arg10[%c0_22, %c1_23, %c0_24] : memref<18x18x32xf32, #tpu.memory_space<vmem>>, vector<16x16x32xf32>
    %13 = vector.shape_cast %12 : vector<16x16x32xf32> to vector<256x32xf32>
    %c0_25 = arith.constant 0 : index
    %c2 = arith.constant 2 : index
    %c0_26 = arith.constant 0 : index
    %14 = vector.load %arg10[%c0_25, %c2, %c0_26] : memref<18x18x32xf32, #tpu.memory_space<vmem>>, vector<16x16x32xf32>
    %15 = vector.shape_cast %14 : vector<16x16x32xf32> to vector<256x32xf32>
    %16 = tpu.concatenate %11, %13, %15 in 1 : vector<256x32xf32>, vector<256x32xf32>, vector<256x32xf32> -> vector<256x96xf32>
    %c0_27 = arith.constant 0 : index
    %c0_28 = arith.constant 0 : index
    %c0_29 = arith.constant 0 : index
    %17 = vector.load %arg3[%c0_27, %c0_28, %c0_29] : memref<3x96x32xf32, #tpu.memory_space<vmem>>, vector<1x96x32xf32>
    %18 = vector.shape_cast %17 : vector<1x96x32xf32> to vector<96x32xf32>
    %cst_30 = arith.constant dense<0.000000e+00> : vector<256x32xf32>
    %19 = tpu.matmul %16, %18, %cst_30 {dimension_numbers = #tpu.dot_dimension_numbers<[1], [0], [0], [1], [0, 0, 1, 1], [], []>} : vector<256x96xf32>, vector<96x32xf32>, vector<256x32xf32> -> vector<256x32xf32>
    %20 = arith.addf %9, %19 : vector<256x32xf32>
    %c1_31 = arith.constant 1 : index
    %c0_32 = arith.constant 0 : index
    %c0_33 = arith.constant 0 : index
    %21 = vector.load %arg10[%c1_31, %c0_32, %c0_33] : memref<18x18x32xf32, #tpu.memory_space<vmem>>, vector<16x16x32xf32>
    %22 = vector.shape_cast %21 : vector<16x16x32xf32> to vector<256x32xf32>
    %c1_34 = arith.constant 1 : index
    %c1_35 = arith.constant 1 : index
    %c0_36 = arith.constant 0 : index
    %23 = vector.load %arg10[%c1_34, %c1_35, %c0_36] : memref<18x18x32xf32, #tpu.memory_space<vmem>>, vector<16x16x32xf32>
    %24 = vector.shape_cast %23 : vector<16x16x32xf32> to vector<256x32xf32>
    %c1_37 = arith.constant 1 : index
    %c2_38 = arith.constant 2 : index
    %c0_39 = arith.constant 0 : index
    %25 = vector.load %arg10[%c1_37, %c2_38, %c0_39] : memref<18x18x32xf32, #tpu.memory_space<vmem>>, vector<16x16x32xf32>
    %26 = vector.shape_cast %25 : vector<16x16x32xf32> to vector<256x32xf32>
    %27 = tpu.concatenate %22, %24, %26 in 1 : vector<256x32xf32>, vector<256x32xf32>, vector<256x32xf32> -> vector<256x96xf32>
    %c1_40 = arith.constant 1 : index
    %c0_41 = arith.constant 0 : index
    %c0_42 = arith.constant 0 : index
    %28 = vector.load %arg3[%c1_40, %c0_41, %c0_42] : memref<3x96x32xf32, #tpu.memory_space<vmem>>, vector<1x96x32xf32>
    %29 = vector.shape_cast %28 : vector<1x96x32xf32> to vector<96x32xf32>
    %cst_43 = arith.constant dense<0.000000e+00> : vector<256x32xf32>
    %30 = tpu.matmul %27, %29, %cst_43 {dimension_numbers = #tpu.dot_dimension_numbers<[1], [0], [0], [1], [0, 0, 1, 1], [], []>} : vector<256x96xf32>, vector<96x32xf32>, vector<256x32xf32> -> vector<256x32xf32>
    %31 = arith.addf %20, %30 : vector<256x32xf32>
    %c2_44 = arith.constant 2 : index
    %c0_45 = arith.constant 0 : index
    %c0_46 = arith.constant 0 : index
    %32 = vector.load %arg10[%c2_44, %c0_45, %c0_46] : memref<18x18x32xf32, #tpu.memory_space<vmem>>, vector<16x16x32xf32>
    %33 = vector.shape_cast %32 : vector<16x16x32xf32> to vector<256x32xf32>
    %c2_47 = arith.constant 2 : index
    %c1_48 = arith.constant 1 : index
    %c0_49 = arith.constant 0 : index
    %34 = vector.load %arg10[%c2_47, %c1_48, %c0_49] : memref<18x18x32xf32, #tpu.memory_space<vmem>>, vector<16x16x32xf32>
    %35 = vector.shape_cast %34 : vector<16x16x32xf32> to vector<256x32xf32>
    %c2_50 = arith.constant 2 : index
    %c2_51 = arith.constant 2 : index
    %c0_52 = arith.constant 0 : index
    %36 = vector.load %arg10[%c2_50, %c2_51, %c0_52] : memref<18x18x32xf32, #tpu.memory_space<vmem>>, vector<16x16x32xf32>
    %37 = vector.shape_cast %36 : vector<16x16x32xf32> to vector<256x32xf32>
    %38 = tpu.concatenate %33, %35, %37 in 1 : vector<256x32xf32>, vector<256x32xf32>, vector<256x32xf32> -> vector<256x96xf32>
    %c2_53 = arith.constant 2 : index
    %c0_54 = arith.constant 0 : index
    %c0_55 = arith.constant 0 : index
    %39 = vector.load %arg3[%c2_53, %c0_54, %c0_55] : memref<3x96x32xf32, #tpu.memory_space<vmem>>, vector<1x96x32xf32>
    %40 = vector.shape_cast %39 : vector<1x96x32xf32> to vector<96x32xf32>
    %cst_56 = arith.constant dense<0.000000e+00> : vector<256x32xf32>
    %41 = tpu.matmul %38, %40, %cst_56 {dimension_numbers = #tpu.dot_dimension_numbers<[1], [0], [0], [1], [0, 0, 1, 1], [], []>} : vector<256x96xf32>, vector<96x32xf32>, vector<256x32xf32> -> vector<256x32xf32>
    %42 = arith.addf %31, %41 : vector<256x32xf32>
    %c0_57 = arith.constant 0 : index
    %c0_58 = arith.constant 0 : index
    %c0_59 = arith.constant 0 : index
    %43 = vector.load %arg5[%c0_57, %c0_58, %c0_59] : memref<1x1x32xf32, #tpu.memory_space<vmem>>, vector<1x1x32xf32>
    %44 = vector.shape_cast %43 : vector<1x1x32xf32> to vector<1x32xf32>
    %45 = vector.broadcast %44 : vector<1x32xf32> to vector<256x32xf32>
    %46 = arith.mulf %42, %45 : vector<256x32xf32>
    %c0_60 = arith.constant 0 : index
    %c0_61 = arith.constant 0 : index
    %c0_62 = arith.constant 0 : index
    %47 = vector.load %arg6[%c0_60, %c0_61, %c0_62] : memref<1x1x32xf32, #tpu.memory_space<vmem>>, vector<1x1x32xf32>
    %48 = vector.shape_cast %47 : vector<1x1x32xf32> to vector<1x32xf32>
    %49 = vector.broadcast %48 : vector<1x32xf32> to vector<256x32xf32>
    %50 = arith.addf %46, %49 : vector<256x32xf32>
    %cst_63 = arith.constant 0.000000e+00 : f32
    %51 = vector.broadcast %cst_63 : f32 to vector<256x32xf32>
    %52 = arith.maximumf %50, %51 : vector<256x32xf32>
    %53 = vector.shape_cast %52 : vector<256x32xf32> to vector<16x16x32xf32>
    %cst_64 = arith.constant 0.000000e+00 : f32
    %54 = vector.broadcast %cst_64 : f32 to vector<1x18x32xf32>
    %cst_65 = arith.constant 0.000000e+00 : f32
    %55 = vector.broadcast %cst_65 : f32 to vector<18x1x32xf32>
    %c0_66 = arith.constant 0 : index
    %c0_67 = arith.constant 0 : index
    %c0_68 = arith.constant 0 : index
    %56 = vector.load %arg11[%c0_66, %c0_67, %c0_68] : memref<18x18x32xf32, #tpu.memory_space<vmem>>, vector<1x18x32xf32>
    tpu.vector_store %arg11[%c0_66, %c0_67, %c0_68], %54 {strides = array<i32>} : memref<18x18x32xf32, #tpu.memory_space<vmem>>, vector<1x18x32xf32>,
    %c17_69 = arith.constant 17 : index
    %c0_70 = arith.constant 0 : index
    %c0_71 = arith.constant 0 : index
    %57 = vector.load %arg11[%c17_69, %c0_70, %c0_71] : memref<18x18x32xf32, #tpu.memory_space<vmem>>, vector<1x18x32xf32>
    tpu.vector_store %arg11[%c17_69, %c0_70, %c0_71], %54 {strides = array<i32>} : memref<18x18x32xf32, #tpu.memory_space<vmem>>, vector<1x18x32xf32>,
    %c0_72 = arith.constant 0 : index
    %c0_73 = arith.constant 0 : index
    %c0_74 = arith.constant 0 : index
    %58 = vector.load %arg11[%c0_72, %c0_73, %c0_74] : memref<18x18x32xf32, #tpu.memory_space<vmem>>, vector<18x1x32xf32>
    tpu.vector_store %arg11[%c0_72, %c0_73, %c0_74], %55 {strides = array<i32>} : memref<18x18x32xf32, #tpu.memory_space<vmem>>, vector<18x1x32xf32>,
    %c0_75 = arith.constant 0 : index
    %c17_76 = arith.constant 17 : index
    %c0_77 = arith.constant 0 : index
    %59 = vector.load %arg11[%c0_75, %c17_76, %c0_77] : memref<18x18x32xf32, #tpu.memory_space<vmem>>, vector<18x1x32xf32>
    tpu.vector_store %arg11[%c0_75, %c17_76, %c0_77], %55 {strides = array<i32>} : memref<18x18x32xf32, #tpu.memory_space<vmem>>, vector<18x1x32xf32>,
    %c1_78 = arith.constant 1 : index
    %c1_79 = arith.constant 1 : index
    %c0_80 = arith.constant 0 : index
    %60 = vector.load %arg11[%c1_78, %c1_79, %c0_80] : memref<18x18x32xf32, #tpu.memory_space<vmem>>, vector<16x16x32xf32>
    tpu.vector_store %arg11[%c1_78, %c1_79, %c0_80], %53 {strides = array<i32>} : memref<18x18x32xf32, #tpu.memory_space<vmem>>, vector<16x16x32xf32>,
    %cst_81 = arith.constant 0.000000e+00 : f32
    %61 = vector.broadcast %cst_81 : f32 to vector<256x32xf32>
    %c0_82 = arith.constant 0 : index
    %c0_83 = arith.constant 0 : index
    %c0_84 = arith.constant 0 : index
    %62 = vector.load %arg11[%c0_82, %c0_83, %c0_84] : memref<18x18x32xf32, #tpu.memory_space<vmem>>, vector<16x16x32xf32>
    %63 = vector.shape_cast %62 : vector<16x16x32xf32> to vector<256x32xf32>
    %c0_85 = arith.constant 0 : index
    %c1_86 = arith.constant 1 : index
    %c0_87 = arith.constant 0 : index
    %64 = vector.load %arg11[%c0_85, %c1_86, %c0_87] : memref<18x18x32xf32, #tpu.memory_space<vmem>>, vector<16x16x32xf32>
    %65 = vector.shape_cast %64 : vector<16x16x32xf32> to vector<256x32xf32>
    %c0_88 = arith.constant 0 : index
    %c2_89 = arith.constant 2 : index
    %c0_90 = arith.constant 0 : index
    %66 = vector.load %arg11[%c0_88, %c2_89, %c0_90] : memref<18x18x32xf32, #tpu.memory_space<vmem>>, vector<16x16x32xf32>
    %67 = vector.shape_cast %66 : vector<16x16x32xf32> to vector<256x32xf32>
    %68 = tpu.concatenate %63, %65, %67 in 1 : vector<256x32xf32>, vector<256x32xf32>, vector<256x32xf32> -> vector<256x96xf32>
    %c0_91 = arith.constant 0 : index
    %c0_92 = arith.constant 0 : index
    %c0_93 = arith.constant 0 : index
    %69 = vector.load %arg4[%c0_91, %c0_92, %c0_93] : memref<3x96x32xf32, #tpu.memory_space<vmem>>, vector<1x96x32xf32>
    %70 = vector.shape_cast %69 : vector<1x96x32xf32> to vector<96x32xf32>
    %cst_94 = arith.constant dense<0.000000e+00> : vector<256x32xf32>
    %71 = tpu.matmul %68, %70, %cst_94 {dimension_numbers = #tpu.dot_dimension_numbers<[1], [0], [0], [1], [0, 0, 1, 1], [], []>} : vector<256x96xf32>, vector<96x32xf32>, vector<256x32xf32> -> vector<256x32xf32>
    %72 = arith.addf %61, %71 : vector<256x32xf32>
    %c1_95 = arith.constant 1 : index
    %c0_96 = arith.constant 0 : index
    %c0_97 = arith.constant 0 : index
    %73 = vector.load %arg11[%c1_95, %c0_96, %c0_97] : memref<18x18x32xf32, #tpu.memory_space<vmem>>, vector<16x16x32xf32>
    %74 = vector.shape_cast %73 : vector<16x16x32xf32> to vector<256x32xf32>
    %c1_98 = arith.constant 1 : index
    %c1_99 = arith.constant 1 : index
    %c0_100 = arith.constant 0 : index
    %75 = vector.load %arg11[%c1_98, %c1_99, %c0_100] : memref<18x18x32xf32, #tpu.memory_space<vmem>>, vector<16x16x32xf32>
    %76 = vector.shape_cast %75 : vector<16x16x32xf32> to vector<256x32xf32>
    %c1_101 = arith.constant 1 : index
    %c2_102 = arith.constant 2 : index
    %c0_103 = arith.constant 0 : index
    %77 = vector.load %arg11[%c1_101, %c2_102, %c0_103] : memref<18x18x32xf32, #tpu.memory_space<vmem>>, vector<16x16x32xf32>
    %78 = vector.shape_cast %77 : vector<16x16x32xf32> to vector<256x32xf32>
    %79 = tpu.concatenate %74, %76, %78 in 1 : vector<256x32xf32>, vector<256x32xf32>, vector<256x32xf32> -> vector<256x96xf32>
    %c1_104 = arith.constant 1 : index
    %c0_105 = arith.constant 0 : index
    %c0_106 = arith.constant 0 : index
    %80 = vector.load %arg4[%c1_104, %c0_105, %c0_106] : memref<3x96x32xf32, #tpu.memory_space<vmem>>, vector<1x96x32xf32>
    %81 = vector.shape_cast %80 : vector<1x96x32xf32> to vector<96x32xf32>
    %cst_107 = arith.constant dense<0.000000e+00> : vector<256x32xf32>
    %82 = tpu.matmul %79, %81, %cst_107 {dimension_numbers = #tpu.dot_dimension_numbers<[1], [0], [0], [1], [0, 0, 1, 1], [], []>} : vector<256x96xf32>, vector<96x32xf32>, vector<256x32xf32> -> vector<256x32xf32>
    %83 = arith.addf %72, %82 : vector<256x32xf32>
    %c2_108 = arith.constant 2 : index
    %c0_109 = arith.constant 0 : index
    %c0_110 = arith.constant 0 : index
    %84 = vector.load %arg11[%c2_108, %c0_109, %c0_110] : memref<18x18x32xf32, #tpu.memory_space<vmem>>, vector<16x16x32xf32>
    %85 = vector.shape_cast %84 : vector<16x16x32xf32> to vector<256x32xf32>
    %c2_111 = arith.constant 2 : index
    %c1_112 = arith.constant 1 : index
    %c0_113 = arith.constant 0 : index
    %86 = vector.load %arg11[%c2_111, %c1_112, %c0_113] : memref<18x18x32xf32, #tpu.memory_space<vmem>>, vector<16x16x32xf32>
    %87 = vector.shape_cast %86 : vector<16x16x32xf32> to vector<256x32xf32>
    %c2_114 = arith.constant 2 : index
    %c2_115 = arith.constant 2 : index
    %c0_116 = arith.constant 0 : index
    %88 = vector.load %arg11[%c2_114, %c2_115, %c0_116] : memref<18x18x32xf32, #tpu.memory_space<vmem>>, vector<16x16x32xf32>
    %89 = vector.shape_cast %88 : vector<16x16x32xf32> to vector<256x32xf32>
    %90 = tpu.concatenate %85, %87, %89 in 1 : vector<256x32xf32>, vector<256x32xf32>, vector<256x32xf32> -> vector<256x96xf32>
    %c2_117 = arith.constant 2 : index
    %c0_118 = arith.constant 0 : index
    %c0_119 = arith.constant 0 : index
    %91 = vector.load %arg4[%c2_117, %c0_118, %c0_119] : memref<3x96x32xf32, #tpu.memory_space<vmem>>, vector<1x96x32xf32>
    %92 = vector.shape_cast %91 : vector<1x96x32xf32> to vector<96x32xf32>
    %cst_120 = arith.constant dense<0.000000e+00> : vector<256x32xf32>
    %93 = tpu.matmul %90, %92, %cst_120 {dimension_numbers = #tpu.dot_dimension_numbers<[1], [0], [0], [1], [0, 0, 1, 1], [], []>} : vector<256x96xf32>, vector<96x32xf32>, vector<256x32xf32> -> vector<256x32xf32>
    %94 = arith.addf %83, %93 : vector<256x32xf32>
    %c0_121 = arith.constant 0 : index
    %c0_122 = arith.constant 0 : index
    %c0_123 = arith.constant 0 : index
    %95 = vector.load %arg7[%c0_121, %c0_122, %c0_123] : memref<1x1x32xf32, #tpu.memory_space<vmem>>, vector<1x1x32xf32>
    %96 = vector.shape_cast %95 : vector<1x1x32xf32> to vector<1x32xf32>
    %97 = vector.broadcast %96 : vector<1x32xf32> to vector<256x32xf32>
    %98 = arith.mulf %94, %97 : vector<256x32xf32>
    %c0_124 = arith.constant 0 : index
    %c0_125 = arith.constant 0 : index
    %c0_126 = arith.constant 0 : index
    %99 = vector.load %arg8[%c0_124, %c0_125, %c0_126] : memref<1x1x32xf32, #tpu.memory_space<vmem>>, vector<1x1x32xf32>
    %100 = vector.shape_cast %99 : vector<1x1x32xf32> to vector<1x32xf32>
    %101 = vector.broadcast %100 : vector<1x32xf32> to vector<256x32xf32>
    %102 = arith.addf %98, %101 : vector<256x32xf32>
    %103 = vector.shape_cast %102 : vector<256x32xf32> to vector<16x16x32xf32>
    %c0_127 = arith.constant 0 : index
    %c0_128 = arith.constant 0 : index
    %c0_129 = arith.constant 0 : index
    %c0_130 = arith.constant 0 : index
    %c0_131 = arith.constant 0 : index
    %104 = vector.load %arg2[%c0_127, %c0_128, %c0_129, %c0_130, %c0_131] : memref<1x1x16x16x32xf32, #tpu.memory_space<vmem>>, vector<1x1x16x16x32xf32>
    %105 = vector.shape_cast %104 : vector<1x1x16x16x32xf32> to vector<16x16x32xf32>
    %106 = arith.addf %103, %105 : vector<16x16x32xf32>
    %cst_132 = arith.constant 0.000000e+00 : f32
    %107 = vector.broadcast %cst_132 : f32 to vector<16x16x32xf32>
    %108 = arith.maximumf %106, %107 : vector<16x16x32xf32>
    %c0_133 = arith.constant 0 : index
    %c0_134 = arith.constant 0 : index
    %c0_135 = arith.constant 0 : index
    %c0_136 = arith.constant 0 : index
    %c0_137 = arith.constant 0 : index
    %109 = vector.load %arg9[%c0_133, %c0_134, %c0_135, %c0_136, %c0_137] : memref<1x1x16x16x32xf32, #tpu.memory_space<vmem>>, vector<1x1x16x16x32xf32>
    %110 = vector.shape_cast %109 : vector<1x1x16x16x32xf32> to vector<16x16x32xf32>
    %111 = vector.shape_cast %108 : vector<16x16x32xf32> to vector<1x1x16x16x32xf32>
    tpu.vector_store %arg9[%c0_133, %c0_134, %c0_135, %c0_136, %c0_137], %111 {strides = array<i32>} : memref<1x1x16x16x32xf32, #tpu.memory_space<vmem>>, vector<1x1x16x16x32xf32>,
    return
  }
  func.func @transform_0(%arg0: i32, %arg1: i32) -> (i32, i32, i32, i32, i32) {
    %c0_i32 = arith.constant 0 : i32
    %c0_i32_0 = arith.constant 0 : i32
    %c0_i32_1 = arith.constant 0 : i32
    %c0_i32_2 = arith.constant 0 : i32
    return %arg0, %arg1, %c0_i32, %c0_i32_0, %c0_i32_1 : i32, i32, i32, i32, i32
  }
  func.func @transform_1(%arg0: i32, %arg1: i32) -> (i32, i32, i32) {
    %c0_i32 = arith.constant 0 : i32
    %c0_i32_0 = arith.constant 0 : i32
    %c0_i32_1 = arith.constant 0 : i32
    %c0_i32_2 = arith.constant 0 : i32
    return %c0_i32, %c0_i32_0, %c0_i32_1 : i32, i32, i32
  }
  func.func @transform_2(%arg0: i32, %arg1: i32) -> (i32, i32, i32) {
    %c0_i32 = arith.constant 0 : i32
    %c0_i32_0 = arith.constant 0 : i32
    %c0_i32_1 = arith.constant 0 : i32
    %c0_i32_2 = arith.constant 0 : i32
    return %c0_i32, %c0_i32_0, %c0_i32_1 : i32, i32, i32
  }
  func.func @transform_3(%arg0: i32, %arg1: i32) -> (i32, i32, i32) {
    %c0_i32 = arith.constant 0 : i32
    %c0_i32_0 = arith.constant 0 : i32
    %c0_i32_1 = arith.constant 0 : i32
    return %arg0, %c0_i32, %c0_i32_0 : i32, i32, i32
  }
  func.func @transform_4(%arg0: i32, %arg1: i32) -> (i32, i32, i32) {
    %c0_i32 = arith.constant 0 : i32
    %c0_i32_0 = arith.constant 0 : i32
    %c0_i32_1 = arith.constant 0 : i32
    return %arg0, %c0_i32, %c0_i32_0 : i32, i32, i32
  }
  func.func @transform_5(%arg0: i32, %arg1: i32) -> (i32, i32, i32) {
    %c0_i32 = arith.constant 0 : i32
    %c0_i32_0 = arith.constant 0 : i32
    %c0_i32_1 = arith.constant 0 : i32
    return %arg0, %c0_i32, %c0_i32_0 : i32, i32, i32
  }
  func.func @transform_6(%arg0: i32, %arg1: i32) -> (i32, i32, i32) {
    %c0_i32 = arith.constant 0 : i32
    %c0_i32_0 = arith.constant 0 : i32
    %c0_i32_1 = arith.constant 0 : i32
    return %arg0, %c0_i32, %c0_i32_0 : i32, i32, i32
  }
  func.func @transform_7(%arg0: i32, %arg1: i32) -> (i32, i32, i32, i32, i32) {
    %c0_i32 = arith.constant 0 : i32
    %c0_i32_0 = arith.constant 0 : i32
    %c0_i32_1 = arith.constant 0 : i32
    %c0_i32_2 = arith.constant 0 : i32
    return %arg0, %arg1, %c0_i32, %c0_i32_0, %c0_i32_1 : i32, i32, i32, i32, i32
  }
}

</mosaic_0001>

<llo_original>
// kernel: _forward_impl.1
$region0: #{_forward_impl.1}
  #allocation0 [shape = 'u32[]', space=smem, size = 0x4, offset = 0x4, fixed_abs, tag = 'smem constant byte address 0x4 - core index']
  #allocation1 [shape = 'u32[72,128]{1,0:T(1,128)}', space=vmem, size = 0x9000, scoped, tag = 'internal scratch']
  #allocation2 [shape = 'f32[18,18,32]{2,1,0:T(8,128)}', space=vmem, size = 0x36000, scoped, tag = 'scratch operand']
  #allocation3 [shape = 'f32[18,18,32]{2,1,0:T(8,128)}', space=vmem, size = 0x36000, scoped, tag = 'scratch operand']
  %s0 = inlined_call_operand.hbm [shape: f32[2,2,16,16,32], index: 0, kind: input, shape index: {}]
  %s1 = inlined_call_operand.hbm [shape: f32[3,96,32], index: 1, kind: input, shape index: {}]
  %s2 = inlined_call_operand.hbm [shape: f32[3,96,32], index: 2, kind: input, shape index: {}]
  %s3 = inlined_call_operand.vmem [shape: f32[2,1,32], index: 3, kind: input, shape index: {}]
  %s4 = inlined_call_operand.vmem [shape: f32[2,1,32], index: 4, kind: input, shape index: {}]
  %s5 = inlined_call_operand.vmem [shape: f32[2,1,32], index: 5, kind: input, shape index: {}]
  %s6 = inlined_call_operand.vmem [shape: f32[2,1,32], index: 6, kind: input, shape index: {}]
  %s7 = inlined_call_operand.hbm [shape: f32[2,2,16,16,32], index: 7, kind: output, shape index: {}]
  %s8 = sld [smem:[#allocation0]]
  $region73: #{_forward_impl.1} parent=0
    _
  %s10 = ssub.s32 1, %s8
  %s11 = scalar_select 0, %s10, %s8
  $region1: #{_forward_impl.1} parent=0
    #allocation4 [shape = 'u8[262144]{0}', space=vmem, size = 0x40000, scoped, tag = 'input window, operand 0']
    #allocation5 [shape = 's32[2]{0}', space=sflag, size = 0x8, scoped, tag = 'scoped memory for _forward_impl.1']
    #allocation6 [shape = 's32[2]{0}', space=sflag, size = 0x8, scoped, tag = 'scoped memory for _forward_impl.1']
    #allocation7 [shape = 'u8[147456]{0}', space=vmem, size = 0x24000, scoped, tag = 'input window, operand 1, single buffered']
    #allocation8 [shape = 's32[1]{0}', space=sflag, size = 0x4, scoped, tag = 'scoped memory for _forward_impl.1']
    #allocation9 [shape = 'u8[147456]{0}', space=vmem, size = 0x24000, scoped, tag = 'input window, operand 2, single buffered']
    #allocation10 [shape = 'u8[262144]{0}', space=vmem, size = 0x40000, scoped, tag = 'output window, operand 0']
    %12 = vsyncpa [#allocation5], 0
    %s13 = scalar_lea.sflag [#allocation5], 1
    %14 = vsyncpa %s13, 0
    %15 = vsyncpa [#allocation8], 0
    %16 = vsyncpa [#allocation6], 0
    %s17 = scalar_lea.sflag [#allocation6], 1
    %18 = vsyncpa %s17, 0
    loop: start=0, step=1, limit=6
    $region2: #{_forward_impl.1} parent=1 // loop_pre_header
      _
    $region3: #{_forward_impl.1} parent=1 // loop_header
      %s20 = sphi 0, %s24
      %p21 = scmp.ge.s32.totalorder %s20, 6
      %s27 = sphi 0, %s39
      %s28 = sphi 0, %s35
      %s29 = sphi 0, %s27
      %s30 = sphi 0, %s28
      %s31 = sphi 0, %s29
      %s32 = sphi 0, %s30
      %s44 = sphi 0, %s46
      %s47 = sphi 0, %s44
      %s48 = sphi 0, %s47
      %s64 = sphi 0, %s48
      %s68 = sphi 0, %s68
      %s70 = sphi 0, %s68
      %s71 = sphi 0, %s70
      %s85 = sphi 0, %s71
      %s89 = sphi 0, %s89
      %s91 = sphi 0, %s89
      %s92 = sphi 0, %s91
      %s106 = sphi 0, %s92
      %s112 = sphi 0, %s114
      %s115 = sphi 0, %s112
      %s116 = sphi 0, %s115
      %s132 = sphi 0, %s116
      %s138 = sphi 0, %s140
      %s141 = sphi 0, %s138
      %s142 = sphi 0, %s141
      %s158 = sphi 0, %s142
      %s164 = sphi 0, %s166
      %s167 = sphi 0, %s164
      %s168 = sphi 0, %s167
      %s184 = sphi 0, %s168
      %s190 = sphi 0, %s192
      %s193 = sphi 0, %s190
      %s194 = sphi 0, %s193
      %s210 = sphi 0, %s194
      %s218 = sphi 0, %s220
      %s221 = sphi 0, %s218
      %s222 = sphi 0, %s221
      %s238 = sphi 0, %s222
    $region4: #{_forward_impl.1} parent=1 // loop_header_branch
      %23 = sbr.rel (%p21) target = $region8
    $region5: #{_forward_impl.1} parent=1 // loop_body
      %s25 = ssub.s32 %s20, 1
      %s26 = ssub.s32 %s20, 2
      %s33 = sadd.s32 1, %s28
      %p34 = scmp.ge.s32.totalorder %s33, 2
      %s35 = scalar_select %p34, 0, %s33
      %s36 = sadd.s32 1, %s27
      %s37 = scalar_select %p34, %s36, %s27
      %p38 = scmp.ge.s32.totalorder %s37, 2
      %s39 = scalar_select %p38, 0, %s37
      %s40 = ssub.s32 %s27, %s39
      %s41 = ssub.s32 %s28, %s35
      %s42 = sor.u32 %s40, %s41
      %p43 = scmp.eq.s32.totalorder %s42, 0
      %s45 = sadd.s32 %s44, 1
      %s46 = scalar_select %p43, %s44, %s45
      %p49 = pneg %p43
      %p50 = scmp.eq.s32.totalorder %s20, 3
      %p51 = por %p49, %p50
      %p52 = scmp.ne.s32.totalorder %s44, %s47
      %p53 = scmp.eq.s32.totalorder %s20, 0
      %p54 = por %p52, %p53
      %p55 = scmp.ne.s32.totalorder %s44, %s47
      %p56 = scmp.eq.s32.totalorder %s25, 3
      %p57 = por %p55, %p56
      %p58 = scmp.ne.s32.totalorder %s47, %s48
      %p59 = scmp.eq.s32.totalorder %s25, 0
      %p60 = por %p58, %p59
      %p61 = scmp.ne.s32.totalorder %s47, %s48
      %p62 = scmp.eq.s32.totalorder %s26, 3
      %p63 = por %p61, %p62
      %p65 = scmp.ne.s32.totalorder %s48, %s64
      %p66 = scmp.eq.s32.totalorder %s26, 0
      %p67 = por %p65, %p66
      %s69 = sadd.s32 %s68, 1
      %p72 = scmp.eq.s32.totalorder %s20, 3
      %p73 = scmp.ne.s32.totalorder %s68, %s70
      %p74 = scmp.eq.s32.totalorder %s20, 0
      %p75 = por %p73, %p74
      %p76 = scmp.ne.s32.totalorder %s68, %s70
      %p77 = scmp.eq.s32.totalorder %s25, 3
      %p78 = por %p76, %p77
      %p79 = scmp.ne.s32.totalorder %s70, %s71
      %p80 = scmp.eq.s32.totalorder %s25, 0
      %p81 = por %p79, %p80
      %p82 = scmp.ne.s32.totalorder %s70, %s71
      %p83 = scmp.eq.s32.totalorder %s26, 3
      %p84 = por %p82, %p83
      %p86 = scmp.ne.s32.totalorder %s71, %s85
      %p87 = scmp.eq.s32.totalorder %s26, 0
      %p88 = por %p86, %p87
      %s90 = sadd.s32 %s89, 1
      %p93 = scmp.eq.s32.totalorder %s20, 3
      %p94 = scmp.ne.s32.totalorder %s89, %s91
      %p95 = scmp.eq.s32.totalorder %s20, 0
      %p96 = por %p94, %p95
      %p97 = scmp.ne.s32.totalorder %s89, %s91
      %p98 = scmp.eq.s32.totalorder %s25, 3
      %p99 = por %p97, %p98
      %p100 = scmp.ne.s32.totalorder %s91, %s92
      %p101 = scmp.eq.s32.totalorder %s25, 0
      %p102 = por %p100, %p101
      %p103 = scmp.ne.s32.totalorder %s91, %s92
      %p104 = scmp.eq.s32.totalorder %s26, 3
      %p105 = por %p103, %p104
      %p107 = scmp.ne.s32.totalorder %s92, %s106
      %p108 = scmp.eq.s32.totalorder %s26, 0
      %p109 = por %p107, %p108
      %s110 = ssub.s32 %s27, %s39
      %p111 = scmp.eq.s32.totalorder %s110, 0
      %s113 = sadd.s32 %s112, 1
      %s114 = scalar_select %p111, %s112, %s113
      %p117 = pneg %p111
      %p118 = scmp.eq.s32.totalorder %s20, 3
      %p119 = por %p117, %p118
      %p120 = scmp.ne.s32.totalorder %s112, %s115
      %p121 = scmp.eq.s32.totalorder %s20, 0
      %p122 = por %p120, %p121
      %p123 = scmp.ne.s32.totalorder %s112, %s115
      %p124 = scmp.eq.s32.totalorder %s25, 3
      %p125 = por %p123, %p124
      %p126 = scmp.ne.s32.totalorder %s115, %s116
      %p127 = scmp.eq.s32.totalorder %s25, 0
      %p128 = por %p126, %p127
      %p129 = scmp.ne.s32.totalorder %s115, %s116
      %p130 = scmp.eq.s32.totalorder %s26, 3
      %p131 = por %p129, %p130
      %p133 = scmp.ne.s32.totalorder %s116, %s132
      %p134 = scmp.eq.s32.totalorder %s26, 0
      %p135 = por %p133, %p134
      %s136 = ssub.s32 %s27, %s39
      %p137 = scmp.eq.s32.totalorder %s136, 0
      %s139 = sadd.s32 %s138, 1
      %s140 = scalar_select %p137, %s138, %s139
      %p143 = pneg %p137
      %p144 = scmp.eq.s32.totalorder %s20, 3
      %p145 = por %p143, %p144
      %p146 = scmp.ne.s32.totalorder %s138, %s141
      %p147 = scmp.eq.s32.totalorder %s20, 0
      %p148 = por %p146, %p147
      %p149 = scmp.ne.s32.totalorder %s138, %s141
      %p150 = scmp.eq.s32.totalorder %s25, 3
      %p151 = por %p149, %p150
      %p152 = scmp.ne.s32.totalorder %s141, %s142
      %p153 = scmp.eq.s32.totalorder %s25, 0
      %p154 = por %p152, %p153
      %p155 = scmp.ne.s32.totalorder %s141, %s142
      %p156 = scmp.eq.s32.totalorder %s26, 3
      %p157 = por %p155, %p156
      %p159 = scmp.ne.s32.totalorder %s142, %s158
      %p160 = scmp.eq.s32.totalorder %s26, 0
      %p161 = por %p159, %p160
      %s162 = ssub.s32 %s27, %s39
      %p163 = scmp.eq.s32.totalorder %s162, 0
      %s165 = sadd.s32 %s164, 1
      %s166 = scalar_select %p163, %s164, %s165
      %p169 = pneg %p163
      %p170 = scmp.eq.s32.totalorder %s20, 3
      %p171 = por %p169, %p170
      %p172 = scmp.ne.s32.totalorder %s164, %s167
      %p173 = scmp.eq.s32.totalorder %s20, 0
      %p174 = por %p172, %p173
      %p175 = scmp.ne.s32.totalorder %s164, %s167
      %p176 = scmp.eq.s32.totalorder %s25, 3
      %p177 = por %p175, %p176
      %p178 = scmp.ne.s32.totalorder %s167, %s168
      %p179 = scmp.eq.s32.totalorder %s25, 0
      %p180 = por %p178, %p179
      %p181 = scmp.ne.s32.totalorder %s167, %s168
      %p182 = scmp.eq.s32.totalorder %s26, 3
      %p183 = por %p181, %p182
      %p185 = scmp.ne.s32.totalorder %s168, %s184
      %p186 = scmp.eq.s32.totalorder %s26, 0
      %p187 = por %p185, %p186
      %s188 = ssub.s32 %s27, %s39
      %p189 = scmp.eq.s32.totalorder %s188, 0
      %s191 = sadd.s32 %s190, 1
      %s192 = scalar_select %p189, %s190, %s191
      %p195 = pneg %p189
      %p196 = scmp.eq.s32.totalorder %s20, 3
      %p197 = por %p195, %p196
      %p198 = scmp.ne.s32.totalorder %s190, %s193
      %p199 = scmp.eq.s32.totalorder %s20, 0
      %p200 = por %p198, %p199
      %p201 = scmp.ne.s32.totalorder %s190, %s193
      %p202 = scmp.eq.s32.totalorder %s25, 3
      %p203 = por %p201, %p202
      %p204 = scmp.ne.s32.totalorder %s193, %s194
      %p205 = scmp.eq.s32.totalorder %s25, 0
      %p206 = por %p204, %p205
      %p207 = scmp.ne.s32.totalorder %s193, %s194
      %p208 = scmp.eq.s32.totalorder %s26, 3
      %p209 = por %p207, %p208
      %p211 = scmp.ne.s32.totalorder %s194, %s210
      %p212 = scmp.eq.s32.totalorder %s26, 0
      %p213 = por %p211, %p212
      %s214 = ssub.s32 %s27, %s39
      %s215 = ssub.s32 %s28, %s35
      %s216 = sor.u32 %s214, %s215
      %p217 = scmp.eq.s32.totalorder %s216, 0
      %s219 = sadd.s32 %s218, 1
      %s220 = scalar_select %p217, %s218, %s219
      %p223 = pneg %p217
      %p224 = scmp.eq.s32.totalorder %s20, 3
      %p225 = por %p223, %p224
      %p226 = scmp.ne.s32.totalorder %s218, %s221
      %p227 = scmp.eq.s32.totalorder %s20, 0
      %p228 = por %p226, %p227
      %p229 = scmp.ne.s32.totalorder %s218, %s221
      %p230 = scmp.eq.s32.totalorder %s25, 3
      %p231 = por %p229, %p230
      %p232 = scmp.ne.s32.totalorder %s221, %s222
      %p233 = scmp.eq.s32.totalorder %s25, 0
      %p234 = por %p232, %p233
      %p235 = scmp.ne.s32.totalorder %s221, %s222
      %p236 = scmp.eq.s32.totalorder %s26, 3
      %p237 = por %p235, %p236
      %p239 = scmp.ne.s32.totalorder %s222, %s238
      %p240 = scmp.eq.s32.totalorder %s26, 0
      %p241 = por %p239, %p240
      %p242 = scmp.le.s32.totalorder 1, %s20
      %p243 = scmp.lt.s32.totalorder %s20, 5
      %p244 = pnand %p242, %p243
      %p245 = pneg %p244
      // Predicated region
      $region9: #{_forward_impl.1} parent=5 // pred_check
        _
      $region10: #{_forward_impl.1} parent=5 // pred_check_branch
        %247 = sbr.rel (%p244) target = $region12
      $region11: #{_forward_impl.1} parent=5 // pred_region
        %s248 = ssub.s32 %s20, 1
        // Predicated region
        $region13: #{_forward_impl.1} parent=11 // pred_check
          %p249 = pneg %p81
        $region14: #{_forward_impl.1} parent=11 // pred_check_branch
          %251 = sbr.rel (%p249) target = $region16
        $region15: #{_forward_impl.1} parent=11 // pred_region
          %253 = vsyncadd [#allocation8], 0
          %s254 = sshll.u32 %s1, 4
          %s255 = int_to_ptr.hbm [resolvable:$true] %s254
          %s256 = sshll.u32 [#allocation7], 4
          %s257 = int_to_ptr.vmem [resolvable:$true] %s256
          %262 = dma.hbm_to_vmem [thread:$0]  %s255, 4608, %s257, [#allocation8], 128, 128, 8
        $region16: #{_forward_impl.1} parent=11 // pred_fallthru
          _
        // Predicated region
        $region17: #{_forward_impl.1} parent=11 // pred_check
          %p263 = pneg %p102
        $region18: #{_forward_impl.1} parent=11 // pred_check_branch
          %265 = sbr.rel (%p263) target = $region20
        $region19: #{_forward_impl.1} parent=11 // pred_region
          %267 = vsyncadd [#allocation8], 0
          %s268 = sshll.u32 %s2, 4
          %s269 = int_to_ptr.hbm [resolvable:$true] %s268
          %s270 = sshll.u32 [#allocation9], 4
          %s271 = int_to_ptr.vmem [resolvable:$true] %s270
          %276 = dma.hbm_to_vmem [thread:$0]  %s269, 4608, %s271, [#allocation8], 128, 128, 8
        $region20: #{_forward_impl.1} parent=11 // pred_fallthru
          _
      $region12: #{_forward_impl.1} parent=5 // pred_fallthru
        _
      %p277 = scmp.lt.s32.totalorder %s20, 4
      // Predicated region
      $region21: #{_forward_impl.1} parent=5 // pred_check
        %p278 = pneg %p277
      $region22: #{_forward_impl.1} parent=5 // pred_check_branch
        %280 = sbr.rel (%p278) target = $region24
      $region23: #{_forward_impl.1} parent=5 // pred_region
        // Predicated region
        $region25: #{_forward_impl.1} parent=23 // pred_check
          %p281 = pneg %p54
        $region26: #{_forward_impl.1} parent=23 // pred_check_branch
          %283 = sbr.rel (%p281) target = $region28
        $region27: #{_forward_impl.1} parent=23 // pred_region
          %s284 = sand.u32 %s44, 1
          %s285 = scalar_lea.sflag [#allocation5], %s284
          %s286 = sand.u32 %s44, 1
          %s287 = smul.addr %s286, 256
          %s288 = scalar_lea.vmem [#allocation4], %s287
          %290 = vsyncadd %s285, 0
          %s291 = smul.addr %s28, 32
          %s292 = smul.addr %s27, 64
          %s293 = sadd.s32 %s291, %s292
          %s294 = smul.addr %s293, 8
          %s295 = scalar_lea.hbm %s0, %s294
          %s296 = sshll.u32 %s295, 4
          %s297 = int_to_ptr.hbm [resolvable:$true] %s296
          %s298 = sshll.u32 %s288, 4
          %s299 = int_to_ptr.vmem [resolvable:$true] %s298
          %304 = dma.hbm_to_vmem [thread:$0]  %s297, 4096, %s299, %s285, 128, 128, 8
        $region28: #{_forward_impl.1} parent=23 // pred_fallthru
          _
        // Predicated region
        $region29: #{_forward_impl.1} parent=23 // pred_check
          %p305 = pneg %p122
        $region30: #{_forward_impl.1} parent=23 // pred_check_branch
          %307 = sbr.rel (%p305) target = $region32
        $region31: #{_forward_impl.1} parent=23 // pred_region
          %p308 = scmp.lt.s32.totalorder %s27, 1
          %s309 = scalar_select %p308, %s27, 1
          %s310 = scalar_lea.vmem %s3, %s309
        $region32: #{_forward_impl.1} parent=23 // pred_fallthru
          _
        // Predicated region
        $region33: #{_forward_impl.1} parent=23 // pred_check
          %p311 = pneg %p148
        $region34: #{_forward_impl.1} parent=23 // pred_check_branch
          %313 = sbr.rel (%p311) target = $region36
        $region35: #{_forward_impl.1} parent=23 // pred_region
          %p314 = scmp.lt.s32.totalorder %s27, 1
          %s315 = scalar_select %p314, %s27, 1
          %s316 = scalar_lea.vmem %s4, %s315
        $region36: #{_forward_impl.1} parent=23 // pred_fallthru
          _
        // Predicated region
        $region37: #{_forward_impl.1} parent=23 // pred_check
          %p317 = pneg %p174
        $region38: #{_forward_impl.1} parent=23 // pred_check_branch
          %319 = sbr.rel (%p317) target = $region40
        $region39: #{_forward_impl.1} parent=23 // pred_region
          %p320 = scmp.lt.s32.totalorder %s27, 1
          %s321 = scalar_select %p320, %s27, 1
          %s322 = scalar_lea.vmem %s5, %s321
        $region40: #{_forward_impl.1} parent=23 // pred_fallthru
          _
        // Predicated region
        $region41: #{_forward_impl.1} parent=23 // pred_check
          %p323 = pneg %p200
        $region42: #{_forward_impl.1} parent=23 // pred_check_branch
          %325 = sbr.rel (%p323) target = $region44
        $region43: #{_forward_impl.1} parent=23 // pred_region
          %p326 = scmp.lt.s32.totalorder %s27, 1
          %s327 = scalar_select %p326, %s27, 1
          %s328 = scalar_lea.vmem %s6, %s327
        $region44: #{_forward_impl.1} parent=23 // pred_fallthru
          _
      $region24: #{_forward_impl.1} parent=5 // pred_fallthru
        _
      %p329 = scmp.le.s32.totalorder 1, %s20
      %p330 = scmp.lt.s32.totalorder %s20, 5
      %p331 = pnand %p329, %p330
      %p332 = pneg %p331
      // Predicated region
      $region45: #{_forward_impl.1} parent=5 // pred_check
        _
      $region46: #{_forward_impl.1} parent=5 // pred_check_branch
        %334 = sbr.rel (%p331) target = $region48
      $region47: #{_forward_impl.1} parent=5 // pred_region
        %s335 = ssub.s32 %s20, 1
        %s336 = sand.u32 %s47, 1
        %s337 = scalar_lea.sflag [#allocation5], %s336
        %s338 = sand.u32 %s47, 1
        %s339 = smul.addr %s338, 256
        %s340 = scalar_lea.vmem [#allocation4], %s339
        // Predicated region
        $region49: #{_forward_impl.1} parent=47 // pred_check
          %p341 = pneg %p60
        $region50: #{_forward_impl.1} parent=47 // pred_check_branch
          %343 = sbr.rel (%p341) target = $region52
        $region51: #{_forward_impl.1} parent=47 // pred_region
          %345 = dma.done %s337, 4096
        $region52: #{_forward_impl.1} parent=47 // pred_fallthru
          _
        // Predicated region
        $region53: #{_forward_impl.1} parent=47 // pred_check
          %p346 = pneg %p81
        $region54: #{_forward_impl.1} parent=47 // pred_check_branch
          %348 = sbr.rel (%p346) target = $region56
        $region55: #{_forward_impl.1} parent=47 // pred_region
          %350 = dma.done [#allocation8], 4608
        $region56: #{_forward_impl.1} parent=47 // pred_fallthru
          _
        // Predicated region
        $region57: #{_forward_impl.1} parent=47 // pred_check
          %p351 = pneg %p102
        $region58: #{_forward_impl.1} parent=47 // pred_check_branch
          %353 = sbr.rel (%p351) target = $region60
        $region59: #{_forward_impl.1} parent=47 // pred_region
          %355 = dma.done [#allocation8], 4608
        $region60: #{_forward_impl.1} parent=47 // pred_fallthru
          _
        %s356 = sand.u32 %s47, 1
        %s357 = scalar_lea.sflag [#allocation5], %s356
        %s358 = sand.u32 %s47, 1
        %s359 = smul.addr %s358, 256
        %s360 = scalar_lea.vmem [#allocation4], %s359
        %p361 = pneg %p60
        %p362 = pneg %p57
        %p363 = pneg %p81
        %p364 = pneg %p78
        %p365 = pneg %p102
        %p366 = pneg %p99
        %p367 = scmp.lt.s32.totalorder %s29, 1
        %s368 = scalar_select %p367, %s29, 1
        %s369 = scalar_lea.vmem %s3, %s368
        %p370 = pneg %p128
        %p371 = pneg %p125
        %p372 = scmp.lt.s32.totalorder %s29, 1
        %s373 = scalar_select %p372, %s29, 1
        %s374 = scalar_lea.vmem %s4, %s373
        %p375 = pneg %p154
        %p376 = pneg %p151
        %p377 = scmp.lt.s32.totalorder %s29, 1
        %s378 = scalar_select %p377, %s29, 1
        %s379 = scalar_lea.vmem %s5, %s378
        %p380 = pneg %p180
        %p381 = pneg %p177
        %p382 = scmp.lt.s32.totalorder %s29, 1
        %s383 = scalar_select %p382, %s29, 1
        %s384 = scalar_lea.vmem %s6, %s383
        %p385 = pneg %p206
        %p386 = pneg %p203
        %p387 = pneg %p234
        %p388 = pneg %p231
        %s389 = sand.u32 %s221, 1
        %s390 = scalar_lea.sflag [#allocation6], %s389
        %s391 = sand.u32 %s221, 1
        %s392 = smul.addr %s391, 256
        %s393 = scalar_lea.vmem [#allocation10], %s392
        %p394 = scmp.lt.s32.totalorder %s29, 1
        %s395 = scalar_select %p394, %s29, 1
        %s396 = scalar_lea.vmem %s3, %s395
        %p397 = scmp.lt.s32.totalorder %s29, 1
        %s398 = scalar_select %p397, %s29, 1
        %s399 = scalar_lea.vmem %s4, %s398
        %p400 = scmp.lt.s32.totalorder %s29, 1
        %s401 = scalar_select %p400, %s29, 1
        %s402 = scalar_lea.vmem %s5, %s401
        %p403 = scmp.lt.s32.totalorder %s29, 1
        %s404 = scalar_select %p403, %s29, 1
        %s405 = scalar_lea.vmem %s6, %s404
        %v406 = vld [vmem:[%s340] sm:$0xff]
        %v407 = vld [vmem:[%s340 + $0x8] sm:$0xff]
        %v408 = vld [vmem:[%s340 + $0x10] sm:$0xff]
        %v409 = vld [vmem:[%s340 + $0x18] sm:$0xff]
        %v410 = vld [vmem:[%s340 + $0x20] sm:$0xff]
        %v411 = vld [vmem:[%s340 + $0x28] sm:$0xff]
        %v412 = vld [vmem:[%s340 + $0x30] sm:$0xff]
        %v413 = vld [vmem:[%s340 + $0x38] sm:$0xff]
        %v414 = vld [vmem:[%s340 + $0x40] sm:$0xff]
        %v415 = vld [vmem:[%s340 + $0x48] sm:$0xff]
        %v416 = vld [vmem:[%s340 + $0x50] sm:$0xff]
        %v417 = vld [vmem:[%s340 + $0x58] sm:$0xff]
        %v418 = vld [vmem:[%s340 + $0x60] sm:$0xff]
        %v419 = vld [vmem:[%s340 + $0x68] sm:$0xff]
        %v420 = vld [vmem:[%s340 + $0x70] sm:$0xff]
        %v421 = vld [vmem:[%s340 + $0x78] sm:$0xff]
        %v422 = vld [vmem:[%s340 + $0x80] sm:$0xff]
        %v423 = vld [vmem:[%s340 + $0x88] sm:$0xff]
        %v424 = vld [vmem:[%s340 + $0x90] sm:$0xff]
        %v425 = vld [vmem:[%s340 + $0x98] sm:$0xff]
        %v426 = vld [vmem:[%s340 + $0xa0] sm:$0xff]
        %v427 = vld [vmem:[%s340 + $0xa8] sm:$0xff]
        %v428 = vld [vmem:[%s340 + $0xb0] sm:$0xff]
        %v429 = vld [vmem:[%s340 + $0xb8] sm:$0xff]
        %v430 = vld [vmem:[%s340 + $0xc0] sm:$0xff]
        %v431 = vld [vmem:[%s340 + $0xc8] sm:$0xff]
        %v432 = vld [vmem:[%s340 + $0xd0] sm:$0xff]
        %v433 = vld [vmem:[%s340 + $0xd8] sm:$0xff]
        %v434 = vld [vmem:[%s340 + $0xe0] sm:$0xff]
        %v435 = vld [vmem:[%s340 + $0xe8] sm:$0xff]
        %v436 = vld [vmem:[%s340 + $0xf0] sm:$0xff]
        %v437 = vld [vmem:[%s340 + $0xf8] sm:$0xff]
        %vm438 = vcmask 261120
        %439 = vst.msk [vmem:[#allocation2] sm:$0xff] %vm438, 0.0
        %440 = vst.msk [vmem:[#allocation2 + $0x8] sm:$0xff] %vm438, 0.0
        %vm441 = vcmask 254976
        %442 = vst.msk [vmem:[#allocation2 + $0x10] sm:$0x3] %vm441, 0.0
        %s443 = scalar_lea.vmem [#allocation2], 408
        %444 = vst.msk [vmem:[%s443] sm:$0xff] %vm438, 0.0
        %445 = vst.msk [vmem:[%s443 + $0x8] sm:$0xff] %vm438, 0.0
        %446 = vst.msk [vmem:[%s443 + $0x10] sm:$0x3] %vm441, 0.0
        %vm447 = vcmask 253952
        %448 = vst.msk [vmem:[#allocation2] sm:$0x1] %vm447, 0.0
        %449 = vst.msk [vmem:[#allocation2 + $0x18] sm:$0x1] %vm447, 0.0
        %450 = vst.msk [vmem:[#allocation2 + $0x30] sm:$0x1] %vm447, 0.0
        %451 = vst.msk [vmem:[#allocation2 + $0x48] sm:$0x1] %vm447, 0.0
        %452 = vst.msk [vmem:[#allocation2 + $0x60] sm:$0x1] %vm447, 0.0
        %453 = vst.msk [vmem:[#allocation2 + $0x78] sm:$0x1] %vm447, 0.0
        %454 = vst.msk [vmem:[#allocation2 + $0x90] sm:$0x1] %vm447, 0.0
        %455 = vst.msk [vmem:[#allocation2 + $0xa8] sm:$0x1] %vm447, 0.0
        %456 = vst.msk [vmem:[#allocation2 + $0xc0] sm:$0x1] %vm447, 0.0
        %457 = vst.msk [vmem:[#allocation2 + $0xd8] sm:$0x1] %vm447, 0.0
        %458 = vst.msk [vmem:[#allocation2 + $0xf0] sm:$0x1] %vm447, 0.0
        %459 = vst.msk [vmem:[#allocation2 + $0x108] sm:$0x1] %vm447, 0.0
        %460 = vst.msk [vmem:[#allocation2 + $0x120] sm:$0x1] %vm447, 0.0
        %461 = vst.msk [vmem:[#allocation2 + $0x138] sm:$0x1] %vm447, 0.0
        %462 = vst.msk [vmem:[#allocation2 + $0x150] sm:$0x1] %vm447, 0.0
        %463 = vst.msk [vmem:[#allocation2 + $0x168] sm:$0x1] %vm447, 0.0
        %464 = vst.msk [vmem:[#allocation2 + $0x180] sm:$0x1] %vm447, 0.0
        %465 = vst.msk [vmem:[#allocation2 + $0x198] sm:$0x1] %vm447, 0.0
        %466 = vst.msk [vmem:[#allocation2 + $0x11] sm:$0x1] %vm447, 0.0
        %467 = vst.msk [vmem:[#allocation2 + $0x29] sm:$0x1] %vm447, 0.0
        %468 = vst.msk [vmem:[#allocation2 + $0x41] sm:$0x1] %vm447, 0.0
        %469 = vst.msk [vmem:[#allocation2 + $0x59] sm:$0x1] %vm447, 0.0
        %470 = vst.msk [vmem:[#allocation2 + $0x71] sm:$0x1] %vm447, 0.0
        %471 = vst.msk [vmem:[#allocation2 + $0x89] sm:$0x1] %vm447, 0.0
        %472 = vst.msk [vmem:[#allocation2 + $0xa1] sm:$0x1] %vm447, 0.0
        %473 = vst.msk [vmem:[#allocation2 + $0xb9] sm:$0x1] %vm447, 0.0
        %474 = vst.msk [vmem:[#allocation2 + $0xd1] sm:$0x1] %vm447, 0.0
        %475 = vst.msk [vmem:[#allocation2 + $0xe9] sm:$0x1] %vm447, 0.0
        %476 = vst.msk [vmem:[#allocation2 + $0x101] sm:$0x1] %vm447, 0.0
        %477 = vst.msk [vmem:[#allocation2 + $0x119] sm:$0x1] %vm447, 0.0
        %478 = vst.msk [vmem:[#allocation2 + $0x131] sm:$0x1] %vm447, 0.0
        %479 = vst.msk [vmem:[#allocation2 + $0x149] sm:$0x1] %vm447, 0.0
        %480 = vst.msk [vmem:[#allocation2 + $0x161] sm:$0x1] %vm447, 0.0
        %481 = vst.msk [vmem:[#allocation2 + $0x179] sm:$0x1] %vm447, 0.0
        %482 = vst.msk [vmem:[#allocation2 + $0x191] sm:$0x1] %vm447, 0.0
        %483 = vst.msk [vmem:[#allocation2 + $0x1a9] sm:$0x1] %vm447, 0.0
        %s484 = scalar_lea.vmem [#allocation2], 24
        %485 = vst.msk [vmem:[%s484 + $0x1] sm:$0xff] %vm438, %v406
        %486 = vst.msk [vmem:[%s484 + $0x9] sm:$0xff] %vm438, %v407
        %487 = vst.msk [vmem:[%s484 + $0x19] sm:$0xff] %vm438, %v408
        %488 = vst.msk [vmem:[%s484 + $0x21] sm:$0xff] %vm438, %v409
        %489 = vst.msk [vmem:[%s484 + $0x31] sm:$0xff] %vm438, %v410
        %490 = vst.msk [vmem:[%s484 + $0x39] sm:$0xff] %vm438, %v411
        %491 = vst.msk [vmem:[%s484 + $0x49] sm:$0xff] %vm438, %v412
        %492 = vst.msk [vmem:[%s484 + $0x51] sm:$0xff] %vm438, %v413
        %493 = vst.msk [vmem:[%s484 + $0x61] sm:$0xff] %vm438, %v414
        %494 = vst.msk [vmem:[%s484 + $0x69] sm:$0xff] %vm438, %v415
        %495 = vst.msk [vmem:[%s484 + $0x79] sm:$0xff] %vm438, %v416
        %496 = vst.msk [vmem:[%s484 + $0x81] sm:$0xff] %vm438, %v417
        %497 = vst.msk [vmem:[%s484 + $0x91] sm:$0xff] %vm438, %v418
        %498 = vst.msk [vmem:[%s484 + $0x99] sm:$0xff] %vm438, %v419
        %499 = vst.msk [vmem:[%s484 + $0xa9] sm:$0xff] %vm438, %v420
        %500 = vst.msk [vmem:[%s484 + $0xb1] sm:$0xff] %vm438, %v421
        %501 = vst.msk [vmem:[%s484 + $0xc1] sm:$0xff] %vm438, %v422
        %502 = vst.msk [vmem:[%s484 + $0xc9] sm:$0xff] %vm438, %v423
        %503 = vst.msk [vmem:[%s484 + $0xd9] sm:$0xff] %vm438, %v424
        %504 = vst.msk [vmem:[%s484 + $0xe1] sm:$0xff] %vm438, %v425
        %505 = vst.msk [vmem:[%s484 + $0xf1] sm:$0xff] %vm438, %v426
        %506 = vst.msk [vmem:[%s484 + $0xf9] sm:$0xff] %vm438, %v427
        %507 = vst.msk [vmem:[%s484 + $0x109] sm:$0xff] %vm438, %v428
        %508 = vst.msk [vmem:[%s484 + $0x111] sm:$0xff] %vm438, %v429
        %509 = vst.msk [vmem:[%s484 + $0x121] sm:$0xff] %vm438, %v430
        %510 = vst.msk [vmem:[%s484 + $0x129] sm:$0xff] %vm438, %v431
        %511 = vst.msk [vmem:[%s484 + $0x139] sm:$0xff] %vm438, %v432
        %512 = vst.msk [vmem:[%s484 + $0x141] sm:$0xff] %vm438, %v433
        %513 = vst.msk [vmem:[%s484 + $0x151] sm:$0xff] %vm438, %v434
        %514 = vst.msk [vmem:[%s484 + $0x159] sm:$0xff] %vm438, %v435
        %515 = vst.msk [vmem:[%s484 + $0x169] sm:$0xff] %vm438, %v436
        %516 = vst.msk [vmem:[%s484 + $0x171] sm:$0xff] %vm438, %v437
        %v517 = vld [vmem:[#allocation2] sm:$0xff]
        %v518 = vld [vmem:[#allocation2 + $0x8] sm:$0xff]
        %v519 = vld [vmem:[#allocation2 + $0x18] sm:$0xff]
        %v520 = vld [vmem:[#allocation2 + $0x20] sm:$0xff]
        %v521 = vld [vmem:[#allocation2 + $0x30] sm:$0xff]
        %v522 = vld [vmem:[#allocation2 + $0x38] sm:$0xff]
        %v523 = vld [vmem:[#allocation2 + $0x48] sm:$0xff]
        %v524 = vld [vmem:[#allocation2 + $0x50] sm:$0xff]
        %v525 = vld [vmem:[#allocation2 + $0x60] sm:$0xff]
        %v526 = vld [vmem:[#allocation2 + $0x68] sm:$0xff]
        %v527 = vld [vmem:[#allocation2 + $0x78] sm:$0xff]
        %v528 = vld [vmem:[#allocation2 + $0x80] sm:$0xff]
        %v529 = vld [vmem:[#allocation2 + $0x90] sm:$0xff]
        %v530 = vld [vmem:[#allocation2 + $0x98] sm:$0xff]
        %v531 = vld [vmem:[#allocation2 + $0xa8] sm:$0xff]
        %v532 = vld [vmem:[#allocation2 + $0xb0] sm:$0xff]
        %v533 = vld [vmem:[#allocation2 + $0xc0] sm:$0xff]
        %v534 = vld [vmem:[#allocation2 + $0xc8] sm:$0xff]
        %v535 = vld [vmem:[#allocation2 + $0xd8] sm:$0xff]
        %v536 = vld [vmem:[#allocation2 + $0xe0] sm:$0xff]
        %v537 = vld [vmem:[#allocation2 + $0xf0] sm:$0xff]
        %v538 = vld [vmem:[#allocation2 + $0xf8] sm:$0xff]
        %v539 = vld [vmem:[#allocation2 + $0x108] sm:$0xff]
        %v540 = vld [vmem:[#allocation2 + $0x110] sm:$0xff]
        %v541 = vld [vmem:[#allocation2 + $0x120] sm:$0xff]
        %v542 = vld [vmem:[#allocation2 + $0x128] sm:$0xff]
        %v543 = vld [vmem:[#allocation2 + $0x138] sm:$0xff]
        %v544 = vld [vmem:[#allocation2 + $0x140] sm:$0xff]
        %v545 = vld [vmem:[#allocation2 + $0x150] sm:$0xff]
        %v546 = vld [vmem:[#allocation2 + $0x158] sm:$0xff]
        %v547 = vld [vmem:[#allocation2 + $0x168] sm:$0xff]
        %v548 = vld [vmem:[#allocation2 + $0x170] sm:$0xff]
        %v549 = vld [vmem:[#allocation2 + $0x1] sm:$0xff]
        %v550 = vld [vmem:[#allocation2 + $0x9] sm:$0xff]
        %v551 = vld [vmem:[#allocation2 + $0x19] sm:$0xff]
        %v552 = vld [vmem:[#allocation2 + $0x21] sm:$0xff]
        %v553 = vld [vmem:[#allocation2 + $0x31] sm:$0xff]
        %v554 = vld [vmem:[#allocation2 + $0x39] sm:$0xff]
        %v555 = vld [vmem:[#allocation2 + $0x49] sm:$0xff]
        %v556 = vld [vmem:[#allocation2 + $0x51] sm:$0xff]
        %v557 = vld [vmem:[#allocation2 + $0x61] sm:$0xff]
        %v558 = vld [vmem:[#allocation2 + $0x69] sm:$0xff]
        %v559 = vld [vmem:[#allocation2 + $0x79] sm:$0xff]
        %v560 = vld [vmem:[#allocation2 + $0x81] sm:$0xff]
        %v561 = vld [vmem:[#allocation2 + $0x91] sm:$0xff]
        %v562 = vld [vmem:[#allocation2 + $0x99] sm:$0xff]
        %v563 = vld [vmem:[#allocation2 + $0xa9] sm:$0xff]
        %v564 = vld [vmem:[#allocation2 + $0xb1] sm:$0xff]
        %v565 = vld [vmem:[#allocation2 + $0xc1] sm:$0xff]
        %v566 = vld [vmem:[#allocation2 + $0xc9] sm:$0xff]
        %v567 = vld [vmem:[#allocation2 + $0xd9] sm:$0xff]
        %v568 = vld [vmem:[#allocation2 + $0xe1] sm:$0xff]
        %v569 = vld [vmem:[#allocation2 + $0xf1] sm:$0xff]
        %v570 = vld [vmem:[#allocation2 + $0xf9] sm:$0xff]
        %v571 = vld [vmem:[#allocation2 + $0x109] sm:$0xff]
        %v572 = vld [vmem:[#allocation2 + $0x111] sm:$0xff]
        %v573 = vld [vmem:[#allocation2 + $0x121] sm:$0xff]
        %v574 = vld [vmem:[#allocation2 + $0x129] sm:$0xff]
        %v575 = vld [vmem:[#allocation2 + $0x139] sm:$0xff]
        %v576 = vld [vmem:[#allocation2 + $0x141] sm:$0xff]
        %v577 = vld [vmem:[#allocation2 + $0x151] sm:$0xff]
        %v578 = vld [vmem:[#allocation2 + $0x159] sm:$0xff]
        %v579 = vld [vmem:[#allocation2 + $0x169] sm:$0xff]
        %v580 = vld [vmem:[#allocation2 + $0x171] sm:$0xff]
        %v581 = vld [vmem:[#allocation2 + $0x2] sm:$0xff]
        %v582 = vld [vmem:[#allocation2 + $0xa] sm:$0xff]
        %v583 = vld [vmem:[#allocation2 + $0x1a] sm:$0xff]
        %v584 = vld [vmem:[#allocation2 + $0x22] sm:$0xff]
        %v585 = vld [vmem:[#allocation2 + $0x32] sm:$0xff]
        %v586 = vld [vmem:[#allocation2 + $0x3a] sm:$0xff]
        %v587 = vld [vmem:[#allocation2 + $0x4a] sm:$0xff]
        %v588 = vld [vmem:[#allocation2 + $0x52] sm:$0xff]
        %v589 = vld [vmem:[#allocation2 + $0x62] sm:$0xff]
        %v590 = vld [vmem:[#allocation2 + $0x6a] sm:$0xff]
        %v591 = vld [vmem:[#allocation2 + $0x7a] sm:$0xff]
        %v592 = vld [vmem:[#allocation2 + $0x82] sm:$0xff]
        %v593 = vld [vmem:[#allocation2 + $0x92] sm:$0xff]
        %v594 = vld [vmem:[#allocation2 + $0x9a] sm:$0xff]
        %v595 = vld [vmem:[#allocation2 + $0xaa] sm:$0xff]
        %v596 = vld [vmem:[#allocation2 + $0xb2] sm:$0xff]
        %v597 = vld [vmem:[#allocation2 + $0xc2] sm:$0xff]
        %v598 = vld [vmem:[#allocation2 + $0xca] sm:$0xff]
        %v599 = vld [vmem:[#allocation2 + $0xda] sm:$0xff]
        %v600 = vld [vmem:[#allocation2 + $0xe2] sm:$0xff]
        %v601 = vld [vmem:[#allocation2 + $0xf2] sm:$0xff]
        %v602 = vld [vmem:[#allocation2 + $0xfa] sm:$0xff]
        %v603 = vld [vmem:[#allocation2 + $0x10a] sm:$0xff]
        %v604 = vld [vmem:[#allocation2 + $0x112] sm:$0xff]
        %v605 = vld [vmem:[#allocation2 + $0x122] sm:$0xff]
        %v606 = vld [vmem:[#allocation2 + $0x12a] sm:$0xff]
        %v607 = vld [vmem:[#allocation2 + $0x13a] sm:$0xff]
        %v608 = vld [vmem:[#allocation2 + $0x142] sm:$0xff]
        %v609 = vld [vmem:[#allocation2 + $0x152] sm:$0xff]
        %v610 = vld [vmem:[#allocation2 + $0x15a] sm:$0xff]
        %v611 = vld [vmem:[#allocation2 + $0x16a] sm:$0xff]
        %v612 = vld [vmem:[#allocation2 + $0x172] sm:$0xff]
        %645 = vrot.lane.b32.xlu0 %v549, 32
        %v646 = vpop.permute.xlu0 %645
        %647 = vrot.lane.b32.xlu0 %v550, 32
        %v648 = vpop.permute.xlu0 %647
        %649 = vrot.lane.b32.xlu0 %v551, 32
        %v650 = vpop.permute.xlu0 %649
        %651 = vrot.lane.b32.xlu0 %v552, 32
        %v652 = vpop.permute.xlu0 %651
        %653 = vrot.lane.b32.xlu0 %v553, 32
        %v654 = vpop.permute.xlu0 %653
        %655 = vrot.lane.b32.xlu0 %v554, 32
        %v656 = vpop.permute.xlu0 %655
        %657 = vrot.lane.b32.xlu0 %v555, 32
        %v658 = vpop.permute.xlu0 %657
        %659 = vrot.lane.b32.xlu0 %v556, 32
        %v660 = vpop.permute.xlu0 %659
        %661 = vrot.lane.b32.xlu0 %v557, 32
        %v662 = vpop.permute.xlu0 %661
        %663 = vrot.lane.b32.xlu0 %v558, 32
        %v664 = vpop.permute.xlu0 %663
        %665 = vrot.lane.b32.xlu0 %v559, 32
        %v666 = vpop.permute.xlu0 %665
        %667 = vrot.lane.b32.xlu0 %v560, 32
        %v668 = vpop.permute.xlu0 %667
        %669 = vrot.lane.b32.xlu0 %v561, 32
        %v670 = vpop.permute.xlu0 %669
        %671 = vrot.lane.b32.xlu0 %v562, 32
        %v672 = vpop.permute.xlu0 %671
        %673 = vrot.lane.b32.xlu0 %v563, 32
        %v674 = vpop.permute.xlu0 %673
        %675 = vrot.lane.b32.xlu0 %v564, 32
        %v676 = vpop.permute.xlu0 %675
        %677 = vrot.lane.b32.xlu0 %v565, 32
        %v678 = vpop.permute.xlu0 %677
        %679 = vrot.lane.b32.xlu0 %v566, 32
        %v680 = vpop.permute.xlu0 %679
        %681 = vrot.lane.b32.xlu0 %v567, 32
        %v682 = vpop.permute.xlu0 %681
        %683 = vrot.lane.b32.xlu0 %v568, 32
        %v684 = vpop.permute.xlu0 %683
        %685 = vrot.lane.b32.xlu0 %v569, 32
        %v686 = vpop.permute.xlu0 %685
        %687 = vrot.lane.b32.xlu0 %v570, 32
        %v688 = vpop.permute.xlu0 %687
        %689 = vrot.lane.b32.xlu0 %v571, 32
        %v690 = vpop.permute.xlu0 %689
        %691 = vrot.lane.b32.xlu0 %v572, 32
        %v692 = vpop.permute.xlu0 %691
        %693 = vrot.lane.b32.xlu0 %v573, 32
        %v694 = vpop.permute.xlu0 %693
        %695 = vrot.lane.b32.xlu0 %v574, 32
        %v696 = vpop.permute.xlu0 %695
        %697 = vrot.lane.b32.xlu0 %v575, 32
        %v698 = vpop.permute.xlu0 %697
        %699 = vrot.lane.b32.xlu0 %v576, 32
        %v700 = vpop.permute.xlu0 %699
        %701 = vrot.lane.b32.xlu0 %v577, 32
        %v702 = vpop.permute.xlu0 %701
        %703 = vrot.lane.b32.xlu0 %v578, 32
        %v704 = vpop.permute.xlu0 %703
        %705 = vrot.lane.b32.xlu0 %v579, 32
        %v706 = vpop.permute.xlu0 %705
        %707 = vrot.lane.b32.xlu0 %v580, 32
        %v708 = vpop.permute.xlu0 %707
        %773 = vrot.lane.b32.xlu0 %v581, 64
        %v774 = vpop.permute.xlu0 %773
        %775 = vrot.lane.b32.xlu0 %v582, 64
        %v776 = vpop.permute.xlu0 %775
        %777 = vrot.lane.b32.xlu0 %v583, 64
        %v778 = vpop.permute.xlu0 %777
        %779 = vrot.lane.b32.xlu0 %v584, 64
        %v780 = vpop.permute.xlu0 %779
        %781 = vrot.lane.b32.xlu0 %v585, 64
        %v782 = vpop.permute.xlu0 %781
        %783 = vrot.lane.b32.xlu0 %v586, 64
        %v784 = vpop.permute.xlu0 %783
        %785 = vrot.lane.b32.xlu0 %v587, 64
        %v786 = vpop.permute.xlu0 %785
        %787 = vrot.lane.b32.xlu0 %v588, 64
        %v788 = vpop.permute.xlu0 %787
        %789 = vrot.lane.b32.xlu0 %v589, 64
        %v790 = vpop.permute.xlu0 %789
        %791 = vrot.lane.b32.xlu0 %v590, 64
        %v792 = vpop.permute.xlu0 %791
        %793 = vrot.lane.b32.xlu0 %v591, 64
        %v794 = vpop.permute.xlu0 %793
        %795 = vrot.lane.b32.xlu0 %v592, 64
        %v796 = vpop.permute.xlu0 %795
        %797 = vrot.lane.b32.xlu0 %v593, 64
        %v798 = vpop.permute.xlu0 %797
        %799 = vrot.lane.b32.xlu0 %v594, 64
        %v800 = vpop.permute.xlu0 %799
        %801 = vrot.lane.b32.xlu0 %v595, 64
        %v802 = vpop.permute.xlu0 %801
        %803 = vrot.lane.b32.xlu0 %v596, 64
        %v804 = vpop.permute.xlu0 %803
        %805 = vrot.lane.b32.xlu0 %v597, 64
        %v806 = vpop.permute.xlu0 %805
        %807 = vrot.lane.b32.xlu0 %v598, 64
        %v808 = vpop.permute.xlu0 %807
        %809 = vrot.lane.b32.xlu0 %v599, 64
        %v810 = vpop.permute.xlu0 %809
        %811 = vrot.lane.b32.xlu0 %v600, 64
        %v812 = vpop.permute.xlu0 %811
        %813 = vrot.lane.b32.xlu0 %v601, 64
        %v814 = vpop.permute.xlu0 %813
        %815 = vrot.lane.b32.xlu0 %v602, 64
        %v816 = vpop.permute.xlu0 %815
        %817 = vrot.lane.b32.xlu0 %v603, 64
        %v818 = vpop.permute.xlu0 %817
        %819 = vrot.lane.b32.xlu0 %v604, 64
        %v820 = vpop.permute.xlu0 %819
        %821 = vrot.lane.b32.xlu0 %v605, 64
        %v822 = vpop.permute.xlu0 %821
        %823 = vrot.lane.b32.xlu0 %v606, 64
        %v824 = vpop.permute.xlu0 %823
        %825 = vrot.lane.b32.xlu0 %v607, 64
        %v826 = vpop.permute.xlu0 %825
        %827 = vrot.lane.b32.xlu0 %v608, 64
        %v828 = vpop.permute.xlu0 %827
        %829 = vrot.lane.b32.xlu0 %v609, 64
        %v830 = vpop.permute.xlu0 %829
        %831 = vrot.lane.b32.xlu0 %v610, 64
        %v832 = vpop.permute.xlu0 %831
        %833 = vrot.lane.b32.xlu0 %v611, 64
        %v834 = vpop.permute.xlu0 %833
        %835 = vrot.lane.b32.xlu0 %v612, 64
        %v836 = vpop.permute.xlu0 %835
        %v869 = vsel %vm438, %v517, %v646
        %v870 = vsel %vm438, %v518, %v648
        %v871 = vsel %vm438, %v519, %v650
        %v872 = vsel %vm438, %v520, %v652
        %v873 = vsel %vm438, %v521, %v654
        %v874 = vsel %vm438, %v522, %v656
        %v875 = vsel %vm438, %v523, %v658
        %v876 = vsel %vm438, %v524, %v660
        %v877 = vsel %vm438, %v525, %v662
        %v878 = vsel %vm438, %v526, %v664
        %v879 = vsel %vm438, %v527, %v666
        %v880 = vsel %vm438, %v528, %v668
        %v881 = vsel %vm438, %v529, %v670
        %v882 = vsel %vm438, %v530, %v672
        %v883 = vsel %vm438, %v531, %v674
        %v884 = vsel %vm438, %v532, %v676
        %v885 = vsel %vm438, %v533, %v678
        %v886 = vsel %vm438, %v534, %v680
        %v887 = vsel %vm438, %v535, %v682
        %v888 = vsel %vm438, %v536, %v684
        %v889 = vsel %vm438, %v537, %v686
        %v890 = vsel %vm438, %v538, %v688
        %v891 = vsel %vm438, %v539, %v690
        %v892 = vsel %vm438, %v540, %v692
        %v893 = vsel %vm438, %v541, %v694
        %v894 = vsel %vm438, %v542, %v696
        %v895 = vsel %vm438, %v543, %v698
        %v896 = vsel %vm438, %v544, %v700
        %v897 = vsel %vm438, %v545, %v702
        %v898 = vsel %vm438, %v546, %v704
        %v899 = vsel %vm438, %v547, %v706
        %v900 = vsel %vm438, %v548, %v708
        %vm901 = vcmask 523264
        %v902 = vsel %vm901, %v869, %v774
        %v903 = vsel %vm901, %v870, %v776
        %v904 = vsel %vm901, %v871, %v778
        %v905 = vsel %vm901, %v872, %v780
        %v906 = vsel %vm901, %v873, %v782
        %v907 = vsel %vm901, %v874, %v784
        %v908 = vsel %vm901, %v875, %v786
        %v909 = vsel %vm901, %v876, %v788
        %v910 = vsel %vm901, %v877, %v790
        %v911 = vsel %vm901, %v878, %v792
        %v912 = vsel %vm901, %v879, %v794
        %v913 = vsel %vm901, %v880, %v796
        %v914 = vsel %vm901, %v881, %v798
        %v915 = vsel %vm901, %v882, %v800
        %v916 = vsel %vm901, %v883, %v802
        %v917 = vsel %vm901, %v884, %v804
        %v918 = vsel %vm901, %v885, %v806
        %v919 = vsel %vm901, %v886, %v808
        %v920 = vsel %vm901, %v887, %v810
        %v921 = vsel %vm901, %v888, %v812
        %v922 = vsel %vm901, %v889, %v814
        %v923 = vsel %vm901, %v890, %v816
        %v924 = vsel %vm901, %v891, %v818
        %v925 = vsel %vm901, %v892, %v820
        %v926 = vsel %vm901, %v893, %v822
        %v927 = vsel %vm901, %v894, %v824
        %v928 = vsel %vm901, %v895, %v826
        %v929 = vsel %vm901, %v896, %v828
        %v930 = vsel %vm901, %v897, %v830
        %v931 = vsel %vm901, %v898, %v832
        %v932 = vsel %vm901, %v899, %v834
        %v933 = vsel %vm901, %v900, %v836
        %v934 = vld [vmem:[#allocation7] sm:$0xff]
        %v935 = vld [vmem:[#allocation7 + $0x8] sm:$0xff]
        %v936 = vld [vmem:[#allocation7 + $0x10] sm:$0xff]
        %v937 = vld [vmem:[#allocation7 + $0x18] sm:$0xff]
        %v938 = vld [vmem:[#allocation7 + $0x20] sm:$0xff]
        %v939 = vld [vmem:[#allocation7 + $0x28] sm:$0xff]
        %v940 = vld [vmem:[#allocation7 + $0x30] sm:$0xff]
        %v941 = vld [vmem:[#allocation7 + $0x38] sm:$0xff]
        %v942 = vld [vmem:[#allocation7 + $0x40] sm:$0xff]
        %v943 = vld [vmem:[#allocation7 + $0x48] sm:$0xff]
        %v944 = vld [vmem:[#allocation7 + $0x50] sm:$0xff]
        %v945 = vld [vmem:[#allocation7 + $0x58] sm:$0xff]
        %v946 = vld [vmem:[%s484] sm:$0xff]
        %v947 = vld [vmem:[%s484 + $0x8] sm:$0xff]
        %v948 = vld [vmem:[%s484 + $0x18] sm:$0xff]
        %v949 = vld [vmem:[%s484 + $0x20] sm:$0xff]
        %v950 = vld [vmem:[%s484 + $0x30] sm:$0xff]
        %v951 = vld [vmem:[%s484 + $0x38] sm:$0xff]
        %v952 = vld [vmem:[%s484 + $0x48] sm:$0xff]
        %v953 = vld [vmem:[%s484 + $0x50] sm:$0xff]
        %v954 = vld [vmem:[%s484 + $0x60] sm:$0xff]
        %v955 = vld [vmem:[%s484 + $0x68] sm:$0xff]
        %v956 = vld [vmem:[%s484 + $0x78] sm:$0xff]
        %v957 = vld [vmem:[%s484 + $0x80] sm:$0xff]
        %v958 = vld [vmem:[%s484 + $0x90] sm:$0xff]
        %v959 = vld [vmem:[%s484 + $0x98] sm:$0xff]
        %v960 = vld [vmem:[%s484 + $0xa8] sm:$0xff]
        %v961 = vld [vmem:[%s484 + $0xb0] sm:$0xff]
        %v962 = vld [vmem:[%s484 + $0xc0] sm:$0xff]
        %v963 = vld [vmem:[%s484 + $0xc8] sm:$0xff]
        %v964 = vld [vmem:[%s484 + $0xd8] sm:$0xff]
        %v965 = vld [vmem:[%s484 + $0xe0] sm:$0xff]
        %v966 = vld [vmem:[%s484 + $0xf0] sm:$0xff]
        %v967 = vld [vmem:[%s484 + $0xf8] sm:$0xff]
        %v968 = vld [vmem:[%s484 + $0x108] sm:$0xff]
        %v969 = vld [vmem:[%s484 + $0x110] sm:$0xff]
        %v970 = vld [vmem:[%s484 + $0x120] sm:$0xff]
        %v971 = vld [vmem:[%s484 + $0x128] sm:$0xff]
        %v972 = vld [vmem:[%s484 + $0x138] sm:$0xff]
        %v973 = vld [vmem:[%s484 + $0x140] sm:$0xff]
        %v974 = vld [vmem:[%s484 + $0x150] sm:$0xff]
        %v975 = vld [vmem:[%s484 + $0x158] sm:$0xff]
        %v976 = vld [vmem:[%s484 + $0x168] sm:$0xff]
        %v977 = vld [vmem:[%s484 + $0x170] sm:$0xff]
        %v978 = vld [vmem:[%s484 + $0x1] sm:$0xff]
        %v979 = vld [vmem:[%s484 + $0x9] sm:$0xff]
        %v980 = vld [vmem:[%s484 + $0x19] sm:$0xff]
        %v981 = vld [vmem:[%s484 + $0x21] sm:$0xff]
        %v982 = vld [vmem:[%s484 + $0x31] sm:$0xff]
        %v983 = vld [vmem:[%s484 + $0x39] sm:$0xff]
        %v984 = vld [vmem:[%s484 + $0x49] sm:$0xff]
        %v985 = vld [vmem:[%s484 + $0x51] sm:$0xff]
        %v986 = vld [vmem:[%s484 + $0x61] sm:$0xff]
        %v987 = vld [vmem:[%s484 + $0x69] sm:$0xff]
        %v988 = vld [vmem:[%s484 + $0x79] sm:$0xff]
        %v989 = vld [vmem:[%s484 + $0x81] sm:$0xff]
        %v990 = vld [vmem:[%s484 + $0x91] sm:$0xff]
        %v991 = vld [vmem:[%s484 + $0x99] sm:$0xff]
        %v992 = vld [vmem:[%s484 + $0xa9] sm:$0xff]
        %v993 = vld [vmem:[%s484 + $0xb1] sm:$0xff]
        %v994 = vld [vmem:[%s484 + $0xc1] sm:$0xff]
        %v995 = vld [vmem:[%s484 + $0xc9] sm:$0xff]
        %v996 = vld [vmem:[%s484 + $0xd9] sm:$0xff]
        %v997 = vld [vmem:[%s484 + $0xe1] sm:$0xff]
        %v998 = vld [vmem:[%s484 + $0xf1] sm:$0xff]
        %v999 = vld [vmem:[%s484 + $0xf9] sm:$0xff]
        %v1000 = vld [vmem:[%s484 + $0x109] sm:$0xff]
        %v1001 = vld [vmem:[%s484 + $0x111] sm:$0xff]
        %v1002 = vld [vmem:[%s484 + $0x121] sm:$0xff]
        %v1003 = vld [vmem:[%s484 + $0x129] sm:$0xff]
        %v1004 = vld [vmem:[%s484 + $0x139] sm:$0xff]
        %v1005 = vld [vmem:[%s484 + $0x141] sm:$0xff]
        %v1006 = vld [vmem:[%s484 + $0x151] sm:$0xff]
        %v1007 = vld [vmem:[%s484 + $0x159] sm:$0xff]
        %v1008 = vld [vmem:[%s484 + $0x169] sm:$0xff]
        %v1009 = vld [vmem:[%s484 + $0x171] sm:$0xff]
        %v1010 = vld [vmem:[%s484 + $0x2] sm:$0xff]
        %v1011 = vld [vmem:[%s484 + $0xa] sm:$0xff]
        %v1012 = vld [vmem:[%s484 + $0x1a] sm:$0xff]
        %v1013 = vld [vmem:[%s484 + $0x22] sm:$0xff]
        %v1014 = vld [vmem:[%s484 + $0x32] sm:$0xff]
        %v1015 = vld [vmem:[%s484 + $0x3a] sm:$0xff]
        %v1016 = vld [vmem:[%s484 + $0x4a] sm:$0xff]
        %v1017 = vld [vmem:[%s484 + $0x52] sm:$0xff]
        %v1018 = vld [vmem:[%s484 + $0x62] sm:$0xff]
        %v1019 = vld [vmem:[%s484 + $0x6a] sm:$0xff]
        %v1020 = vld [vmem:[%s484 + $0x7a] sm:$0xff]
        %v1021 = vld [vmem:[%s484 + $0x82] sm:$0xff]
        %v1022 = vld [vmem:[%s484 + $0x92] sm:$0xff]
        %v1023 = vld [vmem:[%s484 + $0x9a] sm:$0xff]
        %v1024 = vld [vmem:[%s484 + $0xaa] sm:$0xff]
        %v1025 = vld [vmem:[%s484 + $0xb2] sm:$0xff]
        %v1026 = vld [vmem:[%s484 + $0xc2] sm:$0xff]
        %v1027 = vld [vmem:[%s484 + $0xca] sm:$0xff]
        %v1028 = vld [vmem:[%s484 + $0xda] sm:$0xff]
        %v1029 = vld [vmem:[%s484 + $0xe2] sm:$0xff]
        %v1030 = vld [vmem:[%s484 + $0xf2] sm:$0xff]
        %v1031 = vld [vmem:[%s484 + $0xfa] sm:$0xff]
        %v1032 = vld [vmem:[%s484 + $0x10a] sm:$0xff]
        %v1033 = vld [vmem:[%s484 + $0x112] sm:$0xff]
        %v1034 = vld [vmem:[%s484 + $0x122] sm:$0xff]
        %v1035 = vld [vmem:[%s484 + $0x12a] sm:$0xff]
        %v1036 = vld [vmem:[%s484 + $0x13a] sm:$0xff]
        %v1037 = vld [vmem:[%s484 + $0x142] sm:$0xff]
        %v1038 = vld [vmem:[%s484 + $0x152] sm:$0xff]
        %v1039 = vld [vmem:[%s484 + $0x15a] sm:$0xff]
        %v1040 = vld [vmem:[%s484 + $0x16a] sm:$0xff]
        %v1041 = vld [vmem:[%s484 + $0x172] sm:$0xff]
        %1074 = vrot.lane.b32.xlu0 %v978, 32
        %v1075 = vpop.permute.xlu0 %1074
        %1076 = vrot.lane.b32.xlu0 %v979, 32
        %v1077 = vpop.permute.xlu0 %1076
        %1078 = vrot.lane.b32.xlu0 %v980, 32
        %v1079 = vpop.permute.xlu0 %1078
        %1080 = vrot.lane.b32.xlu0 %v981, 32
        %v1081 = vpop.permute.xlu0 %1080
        %1082 = vrot.lane.b32.xlu0 %v982, 32
        %v1083 = vpop.permute.xlu0 %1082
        %1084 = vrot.lane.b32.xlu0 %v983, 32
        %v1085 = vpop.permute.xlu0 %1084
        %1086 = vrot.lane.b32.xlu0 %v984, 32
        %v1087 = vpop.permute.xlu0 %1086
        %1088 = vrot.lane.b32.xlu0 %v985, 32
        %v1089 = vpop.permute.xlu0 %1088
        %1090 = vrot.lane.b32.xlu0 %v986, 32
        %v1091 = vpop.permute.xlu0 %1090
        %1092 = vrot.lane.b32.xlu0 %v987, 32
        %v1093 = vpop.permute.xlu0 %1092
        %1094 = vrot.lane.b32.xlu0 %v988, 32
        %v1095 = vpop.permute.xlu0 %1094
        %1096 = vrot.lane.b32.xlu0 %v989, 32
        %v1097 = vpop.permute.xlu0 %1096
        %1098 = vrot.lane.b32.xlu0 %v990, 32
        %v1099 = vpop.permute.xlu0 %1098
        %1100 = vrot.lane.b32.xlu0 %v991, 32
        %v1101 = vpop.permute.xlu0 %1100
        %1102 = vrot.lane.b32.xlu0 %v992, 32
        %v1103 = vpop.permute.xlu0 %1102
        %1104 = vrot.lane.b32.xlu0 %v993, 32
        %v1105 = vpop.permute.xlu0 %1104
        %1106 = vrot.lane.b32.xlu0 %v994, 32
        %v1107 = vpop.permute.xlu0 %1106
        %1108 = vrot.lane.b32.xlu0 %v995, 32
        %v1109 = vpop.permute.xlu0 %1108
        %1110 = vrot.lane.b32.xlu0 %v996, 32
        %v1111 = vpop.permute.xlu0 %1110
        %1112 = vrot.lane.b32.xlu0 %v997, 32
        %v1113 = vpop.permute.xlu0 %1112
        %1114 = vrot.lane.b32.xlu0 %v998, 32
        %v1115 = vpop.permute.xlu0 %1114
        %1116 = vrot.lane.b32.xlu0 %v999, 32
        %v1117 = vpop.permute.xlu0 %1116
        %1118 = vrot.lane.b32.xlu0 %v1000, 32
        %v1119 = vpop.permute.xlu0 %1118
        %1120 = vrot.lane.b32.xlu0 %v1001, 32
        %v1121 = vpop.permute.xlu0 %1120
        %1122 = vrot.lane.b32.xlu0 %v1002, 32
        %v1123 = vpop.permute.xlu0 %1122
        %1124 = vrot.lane.b32.xlu0 %v1003, 32
        %v1125 = vpop.permute.xlu0 %1124
        %1126 = vrot.lane.b32.xlu0 %v1004, 32
        %v1127 = vpop.permute.xlu0 %1126
        %1128 = vrot.lane.b32.xlu0 %v1005, 32
        %v1129 = vpop.permute.xlu0 %1128
        %1130 = vrot.lane.b32.xlu0 %v1006, 32
        %v1131 = vpop.permute.xlu0 %1130
        %1132 = vrot.lane.b32.xlu0 %v1007, 32
        %v1133 = vpop.permute.xlu0 %1132
        %1134 = vrot.lane.b32.xlu0 %v1008, 32
        %v1135 = vpop.permute.xlu0 %1134
        %1136 = vrot.lane.b32.xlu0 %v1009, 32
        %v1137 = vpop.permute.xlu0 %1136
        %1202 = vrot.lane.b32.xlu0 %v1010, 64
        %v1203 = vpop.permute.xlu0 %1202
        %1204 = vrot.lane.b32.xlu0 %v1011, 64
        %v1205 = vpop.permute.xlu0 %1204
        %1206 = vrot.lane.b32.xlu0 %v1012, 64
        %v1207 = vpop.permute.xlu0 %1206
        %1208 = vrot.lane.b32.xlu0 %v1013, 64
        %v1209 = vpop.permute.xlu0 %1208
        %1210 = vrot.lane.b32.xlu0 %v1014, 64
        %v1211 = vpop.permute.xlu0 %1210
        %1212 = vrot.lane.b32.xlu0 %v1015, 64
        %v1213 = vpop.permute.xlu0 %1212
        %1214 = vrot.lane.b32.xlu0 %v1016, 64
        %v1215 = vpop.permute.xlu0 %1214
        %1216 = vrot.lane.b32.xlu0 %v1017, 64
        %v1217 = vpop.permute.xlu0 %1216
        %1218 = vrot.lane.b32.xlu0 %v1018, 64
        %v1219 = vpop.permute.xlu0 %1218
        %1220 = vrot.lane.b32.xlu0 %v1019, 64
        %v1221 = vpop.permute.xlu0 %1220
        %1222 = vrot.lane.b32.xlu0 %v1020, 64
        %v1223 = vpop.permute.xlu0 %1222
        %1224 = vrot.lane.b32.xlu0 %v1021, 64
        %v1225 = vpop.permute.xlu0 %1224
        %1226 = vrot.lane.b32.xlu0 %v1022, 64
        %v1227 = vpop.permute.xlu0 %1226
        %1228 = vrot.lane.b32.xlu0 %v1023, 64
        %v1229 = vpop.permute.xlu0 %1228
        %1230 = vrot.lane.b32.xlu0 %v1024, 64
        %v1231 = vpop.permute.xlu0 %1230
        %1232 = vrot.lane.b32.xlu0 %v1025, 64
        %v1233 = vpop.permute.xlu0 %1232
        %1234 = vrot.lane.b32.xlu0 %v1026, 64
        %v1235 = vpop.permute.xlu0 %1234
        %1236 = vrot.lane.b32.xlu0 %v1027, 64
        %v1237 = vpop.permute.xlu0 %1236
        %1238 = vrot.lane.b32.xlu0 %v1028, 64
        %v1239 = vpop.permute.xlu0 %1238
        %1240 = vrot.lane.b32.xlu0 %v1029, 64
        %v1241 = vpop.permute.xlu0 %1240
        %1242 = vrot.lane.b32.xlu0 %v1030, 64
        %v1243 = vpop.permute.xlu0 %1242
        %1244 = vrot.lane.b32.xlu0 %v1031, 64
        %v1245 = vpop.permute.xlu0 %1244
        %1246 = vrot.lane.b32.xlu0 %v1032, 64
        %v1247 = vpop.permute.xlu0 %1246
        %1248 = vrot.lane.b32.xlu0 %v1033, 64
        %v1249 = vpop.permute.xlu0 %1248
        %1250 = vrot.lane.b32.xlu0 %v1034, 64
        %v1251 = vpop.permute.xlu0 %1250
        %1252 = vrot.lane.b32.xlu0 %v1035, 64
        %v1253 = vpop.permute.xlu0 %1252
        %1254 = vrot.lane.b32.xlu0 %v1036, 64
        %v1255 = vpop.permute.xlu0 %1254
        %1256 = vrot.lane.b32.xlu0 %v1037, 64
        %v1257 = vpop.permute.xlu0 %1256
        %1258 = vrot.lane.b32.xlu0 %v1038, 64
        %v1259 = vpop.permute.xlu0 %1258
        %1260 = vrot.lane.b32.xlu0 %v1039, 64
        %v1261 = vpop.permute.xlu0 %1260
        %1262 = vrot.lane.b32.xlu0 %v1040, 64
        %v1263 = vpop.permute.xlu0 %1262
        %1264 = vrot.lane.b32.xlu0 %v1041, 64
        %v1265 = vpop.permute.xlu0 %1264
        %v1298 = vsel %vm438, %v946, %v1075
        %v1299 = vsel %vm438, %v947, %v1077
        %v1300 = vsel %vm438, %v948, %v1079
        %v1301 = vsel %vm438, %v949, %v1081
        %v1302 = vsel %vm438, %v950, %v1083
        %v1303 = vsel %vm438, %v951, %v1085
        %v1304 = vsel %vm438, %v952, %v1087
        %v1305 = vsel %vm438, %v953, %v1089
        %v1306 = vsel %vm438, %v954, %v1091
        %v1307 = vsel %vm438, %v955, %v1093
        %v1308 = vsel %vm438, %v956, %v1095
        %v1309 = vsel %vm438, %v957, %v1097
        %v1310 = vsel %vm438, %v958, %v1099
        %v1311 = vsel %vm438, %v959, %v1101
        %v1312 = vsel %vm438, %v960, %v1103
        %v1313 = vsel %vm438, %v961, %v1105
        %v1314 = vsel %vm438, %v962, %v1107
        %v1315 = vsel %vm438, %v963, %v1109
        %v1316 = vsel %vm438, %v964, %v1111
        %v1317 = vsel %vm438, %v965, %v1113
        %v1318 = vsel %vm438, %v966, %v1115
        %v1319 = vsel %vm438, %v967, %v1117
        %v1320 = vsel %vm438, %v968, %v1119
        %v1321 = vsel %vm438, %v969, %v1121
        %v1322 = vsel %vm438, %v970, %v1123
        %v1323 = vsel %vm438, %v971, %v1125
        %v1324 = vsel %vm438, %v972, %v1127
        %v1325 = vsel %vm438, %v973, %v1129
        %v1326 = vsel %vm438, %v974, %v1131
        %v1327 = vsel %vm438, %v975, %v1133
        %v1328 = vsel %vm438, %v976, %v1135
        %v1329 = vsel %vm438, %v977, %v1137
        %v1330 = vsel %vm901, %v1298, %v1203
        %v1331 = vsel %vm901, %v1299, %v1205
        %v1332 = vsel %vm901, %v1300, %v1207
        %v1333 = vsel %vm901, %v1301, %v1209
        %v1334 = vsel %vm901, %v1302, %v1211
        %v1335 = vsel %vm901, %v1303, %v1213
        %v1336 = vsel %vm901, %v1304, %v1215
        %v1337 = vsel %vm901, %v1305, %v1217
        %v1338 = vsel %vm901, %v1306, %v1219
        %v1339 = vsel %vm901, %v1307, %v1221
        %v1340 = vsel %vm901, %v1308, %v1223
        %v1341 = vsel %vm901, %v1309, %v1225
        %v1342 = vsel %vm901, %v1310, %v1227
        %v1343 = vsel %vm901, %v1311, %v1229
        %v1344 = vsel %vm901, %v1312, %v1231
        %v1345 = vsel %vm901, %v1313, %v1233
        %v1346 = vsel %vm901, %v1314, %v1235
        %v1347 = vsel %vm901, %v1315, %v1237
        %v1348 = vsel %vm901, %v1316, %v1239
        %v1349 = vsel %vm901, %v1317, %v1241
        %v1350 = vsel %vm901, %v1318, %v1243
        %v1351 = vsel %vm901, %v1319, %v1245
        %v1352 = vsel %vm901, %v1320, %v1247
        %v1353 = vsel %vm901, %v1321, %v1249
        %v1354 = vsel %vm901, %v1322, %v1251
        %v1355 = vsel %vm901, %v1323, %v1253
        %v1356 = vsel %vm901, %v1324, %v1255
        %v1357 = vsel %vm901, %v1325, %v1257
        %v1358 = vsel %vm901, %v1326, %v1259
        %v1359 = vsel %vm901, %v1327, %v1261
        %v1360 = vsel %vm901, %v1328, %v1263
        %v1361 = vsel %vm901, %v1329, %v1265
        %s1362 = scalar_lea.vmem [#allocation7], 96
        %v1363 = vld [vmem:[%s1362] sm:$0xff]
        %v1364 = vld [vmem:[%s1362 + $0x8] sm:$0xff]
        %v1365 = vld [vmem:[%s1362 + $0x10] sm:$0xff]
        %v1366 = vld [vmem:[%s1362 + $0x18] sm:$0xff]
        %v1367 = vld [vmem:[%s1362 + $0x20] sm:$0xff]
        %v1368 = vld [vmem:[%s1362 + $0x28] sm:$0xff]
        %v1369 = vld [vmem:[%s1362 + $0x30] sm:$0xff]
        %v1370 = vld [vmem:[%s1362 + $0x38] sm:$0xff]
        %v1371 = vld [vmem:[%s1362 + $0x40] sm:$0xff]
        %v1372 = vld [vmem:[%s1362 + $0x48] sm:$0xff]
        %v1373 = vld [vmem:[%s1362 + $0x50] sm:$0xff]
        %v1374 = vld [vmem:[%s1362 + $0x58] sm:$0xff]
        %vm1375 = vcmask 785408
        %v1377 = vsel %vm1375, %v1330, 0
        %v1380 = vsel %vm1375, %v1331, 0
        %v1383 = vsel %vm1375, %v1332, 0
        %v1386 = vsel %vm1375, %v1333, 0
        %v1389 = vsel %vm1375, %v1334, 0
        %v1392 = vsel %vm1375, %v1335, 0
        %v1395 = vsel %vm1375, %v1336, 0
        %v1398 = vsel %vm1375, %v1337, 0
        %v1401 = vsel %vm1375, %v1338, 0
        %v1404 = vsel %vm1375, %v1339, 0
        %v1407 = vsel %vm1375, %v1340, 0
        %v1410 = vsel %vm1375, %v1341, 0
        %v1413 = vsel %vm1375, %v1342, 0
        %v1416 = vsel %vm1375, %v1343, 0
        %v1419 = vsel %vm1375, %v1344, 0
        %v1422 = vsel %vm1375, %v1345, 0
        %v1425 = vsel %vm1375, %v1346, 0
        %v1428 = vsel %vm1375, %v1347, 0
        %v1431 = vsel %vm1375, %v1348, 0
        %v1434 = vsel %vm1375, %v1349, 0
        %v1437 = vsel %vm1375, %v1350, 0
        %v1440 = vsel %vm1375, %v1351, 0
        %v1443 = vsel %vm1375, %v1352, 0
        %v1446 = vsel %vm1375, %v1353, 0
        %v1449 = vsel %vm1375, %v1354, 0
        %v1452 = vsel %vm1375, %v1355, 0
        %v1455 = vsel %vm1375, %v1356, 0
        %v1458 = vsel %vm1375, %v1357, 0
        %v1461 = vsel %vm1375, %v1358, 0
        %v1464 = vsel %vm1375, %v1359, 0
        %v1467 = vsel %vm1375, %v1360, 0
        %v1470 = vsel %vm1375, %v1361, 0
        %1472 = vmatpush.msra.mxu0 0.0
        %1473 = vmatpush.msra.mxu0 0.0
        %1474 = vmatpush.msra.mxu0 0.0
        %1475 = vmatpush.msra.mxu0 0.0
        %1476 = vmatpush.msra.mxu0 %v1374
        %1477 = vmatpush.msra.mxu0 %v1373
        %1478 = vmatpush.msra.mxu0 %v1372
        %1479 = vmatpush.msra.mxu0 %v1371
        %1480 = vmatpush.msra.mxu0 %v1370
        %1481 = vmatpush.msra.mxu0 %v1369
        %1482 = vmatpush.msra.mxu0 %v1368
        %1483 = vmatpush.msra.mxu0 %v1367
        %1484 = vmatpush.msra.mxu0 %v1366
        %1485 = vmatpush.msra.mxu0 %v1365
        %1486 = vmatpush.msra.mxu0 %v1364
        %1487 = vmatpush.msra.mxu0 %v1363
        %1488 = vmatmul.f32.gmra.mxu0 %v1377
        %v1489 = vpop.f32.mrf.mxu0
        %v1490 = vadd.f32 0.0, %v1489
        %1491 = vmatmul.f32.gmra.mxu0 %v1380
        %v1492 = vpop.f32.mrf.mxu0
        %v1493 = vadd.f32 0.0, %v1492
        %1494 = vmatmul.f32.gmra.mxu0 %v1383
        %v1495 = vpop.f32.mrf.mxu0
        %v1496 = vadd.f32 0.0, %v1495
        %1497 = vmatmul.f32.gmra.mxu0 %v1386
        %v1498 = vpop.f32.mrf.mxu0
        %v1499 = vadd.f32 0.0, %v1498
        %1500 = vmatmul.f32.gmra.mxu0 %v1389
        %v1501 = vpop.f32.mrf.mxu0
        %v1502 = vadd.f32 0.0, %v1501
        %1503 = vmatmul.f32.gmra.mxu0 %v1392
        %v1504 = vpop.f32.mrf.mxu0
        %v1505 = vadd.f32 0.0, %v1504
        %1506 = vmatmul.f32.gmra.mxu0 %v1395
        %v1507 = vpop.f32.mrf.mxu0
        %v1508 = vadd.f32 0.0, %v1507
        %1509 = vmatmul.f32.gmra.mxu0 %v1398
        %v1510 = vpop.f32.mrf.mxu0
        %v1511 = vadd.f32 0.0, %v1510
        %1512 = vmatmul.f32.gmra.mxu0 %v1401
        %v1513 = vpop.f32.mrf.mxu0
        %v1514 = vadd.f32 0.0, %v1513
        %1515 = vmatmul.f32.gmra.mxu0 %v1404
        %v1516 = vpop.f32.mrf.mxu0
        %v1517 = vadd.f32 0.0, %v1516
        %1518 = vmatmul.f32.gmra.mxu0 %v1407
        %v1519 = vpop.f32.mrf.mxu0
        %v1520 = vadd.f32 0.0, %v1519
        %1521 = vmatmul.f32.gmra.mxu0 %v1410
        %v1522 = vpop.f32.mrf.mxu0
        %v1523 = vadd.f32 0.0, %v1522
        %1524 = vmatmul.f32.gmra.mxu0 %v1413
        %v1525 = vpop.f32.mrf.mxu0
        %v1526 = vadd.f32 0.0, %v1525
        %1527 = vmatmul.f32.gmra.mxu0 %v1416
        %v1528 = vpop.f32.mrf.mxu0
        %v1529 = vadd.f32 0.0, %v1528
        %1530 = vmatmul.f32.gmra.mxu0 %v1419
        %v1531 = vpop.f32.mrf.mxu0
        %v1532 = vadd.f32 0.0, %v1531
        %1533 = vmatmul.f32.gmra.mxu0 %v1422
        %v1534 = vpop.f32.mrf.mxu0
        %v1535 = vadd.f32 0.0, %v1534
        %1536 = vmatmul.f32.gmra.mxu0 %v1425
        %v1537 = vpop.f32.mrf.mxu0
        %v1538 = vadd.f32 0.0, %v1537
        %1539 = vmatmul.f32.gmra.mxu0 %v1428
        %v1540 = vpop.f32.mrf.mxu0
        %v1541 = vadd.f32 0.0, %v1540
        %1542 = vmatmul.f32.gmra.mxu0 %v1431
        %v1543 = vpop.f32.mrf.mxu0
        %v1544 = vadd.f32 0.0, %v1543
        %1545 = vmatmul.f32.gmra.mxu0 %v1434
        %v1546 = vpop.f32.mrf.mxu0
        %v1547 = vadd.f32 0.0, %v1546
        %1548 = vmatmul.f32.gmra.mxu0 %v1437
        %v1549 = vpop.f32.mrf.mxu0
        %v1550 = vadd.f32 0.0, %v1549
        %1551 = vmatmul.f32.gmra.mxu0 %v1440
        %v1552 = vpop.f32.mrf.mxu0
        %v1553 = vadd.f32 0.0, %v1552
        %1554 = vmatmul.f32.gmra.mxu0 %v1443
        %v1555 = vpop.f32.mrf.mxu0
        %v1556 = vadd.f32 0.0, %v1555
        %1557 = vmatmul.f32.gmra.mxu0 %v1446
        %v1558 = vpop.f32.mrf.mxu0
        %v1559 = vadd.f32 0.0, %v1558
        %1560 = vmatmul.f32.gmra.mxu0 %v1449
        %v1561 = vpop.f32.mrf.mxu0
        %v1562 = vadd.f32 0.0, %v1561
        %1563 = vmatmul.f32.gmra.mxu0 %v1452
        %v1564 = vpop.f32.mrf.mxu0
        %v1565 = vadd.f32 0.0, %v1564
        %1566 = vmatmul.f32.gmra.mxu0 %v1455
        %v1567 = vpop.f32.mrf.mxu0
        %v1568 = vadd.f32 0.0, %v1567
        %1569 = vmatmul.f32.gmra.mxu0 %v1458
        %v1570 = vpop.f32.mrf.mxu0
        %v1571 = vadd.f32 0.0, %v1570
        %1572 = vmatmul.f32.gmra.mxu0 %v1461
        %v1573 = vpop.f32.mrf.mxu0
        %v1574 = vadd.f32 0.0, %v1573
        %1575 = vmatmul.f32.gmra.mxu0 %v1464
        %v1576 = vpop.f32.mrf.mxu0
        %v1577 = vadd.f32 0.0, %v1576
        %1578 = vmatmul.f32.gmra.mxu0 %v1467
        %v1579 = vpop.f32.mrf.mxu0
        %v1580 = vadd.f32 0.0, %v1579
        %1581 = vmatmul.f32.gmra.mxu0 %v1470
        %v1582 = vpop.f32.mrf.mxu0
        %v1583 = vadd.f32 0.0, %v1582
        %1584 = vdwg.mxu0
        %v1586 = vsel %vm1375, %v902, 0
        %v1589 = vsel %vm1375, %v903, 0
        %v1592 = vsel %vm1375, %v904, 0
        %v1595 = vsel %vm1375, %v905, 0
        %v1598 = vsel %vm1375, %v906, 0
        %v1601 = vsel %vm1375, %v907, 0
        %v1604 = vsel %vm1375, %v908, 0
        %v1607 = vsel %vm1375, %v909, 0
        %v1610 = vsel %vm1375, %v910, 0
        %v1613 = vsel %vm1375, %v911, 0
        %v1616 = vsel %vm1375, %v912, 0
        %v1619 = vsel %vm1375, %v913, 0
        %v1622 = vsel %vm1375, %v914, 0
        %v1625 = vsel %vm1375, %v915, 0
        %v1628 = vsel %vm1375, %v916, 0
        %v1631 = vsel %vm1375, %v917, 0
        %v1634 = vsel %vm1375, %v918, 0
        %v1637 = vsel %vm1375, %v919, 0
        %v1640 = vsel %vm1375, %v920, 0
        %v1643 = vsel %vm1375, %v921, 0
        %v1646 = vsel %vm1375, %v922, 0
        %v1649 = vsel %vm1375, %v923, 0
        %v1652 = vsel %vm1375, %v924, 0
        %v1655 = vsel %vm1375, %v925, 0
        %v1658 = vsel %vm1375, %v926, 0
        %v1661 = vsel %vm1375, %v927, 0
        %v1664 = vsel %vm1375, %v928, 0
        %v1667 = vsel %vm1375, %v929, 0
        %v1670 = vsel %vm1375, %v930, 0
        %v1673 = vsel %vm1375, %v931, 0
        %v1676 = vsel %vm1375, %v932, 0
        %v1679 = vsel %vm1375, %v933, 0
        %1681 = vmatpush.msra.mxu0 0.0
        %1682 = vmatpush.msra.mxu0 0.0
        %1683 = vmatpush.msra.mxu0 0.0
        %1684 = vmatpush.msra.mxu0 0.0
        %1685 = vmatpush.msra.mxu0 %v945
        %1686 = vmatpush.msra.mxu0 %v944
        %1687 = vmatpush.msra.mxu0 %v943
        %1688 = vmatpush.msra.mxu0 %v942
        %1689 = vmatpush.msra.mxu0 %v941
        %1690 = vmatpush.msra.mxu0 %v940
        %1691 = vmatpush.msra.mxu0 %v939
        %1692 = vmatpush.msra.mxu0 %v938
        %1693 = vmatpush.msra.mxu0 %v937
        %1694 = vmatpush.msra.mxu0 %v936
        %1695 = vmatpush.msra.mxu0 %v935
        %1696 = vmatpush.msra.mxu0 %v934
        %1697 = vmatmul.f32.gmra.mxu0 %v1586
        %v1698 = vpop.f32.mrf.mxu0
        %v1699 = vadd.f32 %v1490, %v1698
        %1700 = vmatmul.f32.gmra.mxu0 %v1589
        %v1701 = vpop.f32.mrf.mxu0
        %v1702 = vadd.f32 %v1493, %v1701
        %1703 = vmatmul.f32.gmra.mxu0 %v1592
        %v1704 = vpop.f32.mrf.mxu0
        %v1705 = vadd.f32 %v1496, %v1704
        %1706 = vmatmul.f32.gmra.mxu0 %v1595
        %v1707 = vpop.f32.mrf.mxu0
        %v1708 = vadd.f32 %v1499, %v1707
        %1709 = vmatmul.f32.gmra.mxu0 %v1598
        %v1710 = vpop.f32.mrf.mxu0
        %v1711 = vadd.f32 %v1502, %v1710
        %1712 = vmatmul.f32.gmra.mxu0 %v1601
        %v1713 = vpop.f32.mrf.mxu0
        %v1714 = vadd.f32 %v1505, %v1713
        %1715 = vmatmul.f32.gmra.mxu0 %v1604
        %v1716 = vpop.f32.mrf.mxu0
        %v1717 = vadd.f32 %v1508, %v1716
        %1718 = vmatmul.f32.gmra.mxu0 %v1607
        %v1719 = vpop.f32.mrf.mxu0
        %v1720 = vadd.f32 %v1511, %v1719
        %1721 = vmatmul.f32.gmra.mxu0 %v1610
        %v1722 = vpop.f32.mrf.mxu0
        %v1723 = vadd.f32 %v1514, %v1722
        %1724 = vmatmul.f32.gmra.mxu0 %v1613
        %v1725 = vpop.f32.mrf.mxu0
        %v1726 = vadd.f32 %v1517, %v1725
        %1727 = vmatmul.f32.gmra.mxu0 %v1616
        %v1728 = vpop.f32.mrf.mxu0
        %v1729 = vadd.f32 %v1520, %v1728
        %1730 = vmatmul.f32.gmra.mxu0 %v1619
        %v1731 = vpop.f32.mrf.mxu0
        %v1732 = vadd.f32 %v1523, %v1731
        %1733 = vmatmul.f32.gmra.mxu0 %v1622
        %v1734 = vpop.f32.mrf.mxu0
        %v1735 = vadd.f32 %v1526, %v1734
        %1736 = vmatmul.f32.gmra.mxu0 %v1625
        %v1737 = vpop.f32.mrf.mxu0
        %v1738 = vadd.f32 %v1529, %v1737
        %1739 = vmatmul.f32.gmra.mxu0 %v1628
        %v1740 = vpop.f32.mrf.mxu0
        %v1741 = vadd.f32 %v1532, %v1740
        %1742 = vmatmul.f32.gmra.mxu0 %v1631
        %v1743 = vpop.f32.mrf.mxu0
        %v1744 = vadd.f32 %v1535, %v1743
        %1745 = vmatmul.f32.gmra.mxu0 %v1634
        %v1746 = vpop.f32.mrf.mxu0
        %v1747 = vadd.f32 %v1538, %v1746
        %1748 = vmatmul.f32.gmra.mxu0 %v1637
        %v1749 = vpop.f32.mrf.mxu0
        %v1750 = vadd.f32 %v1541, %v1749
        %1751 = vmatmul.f32.gmra.mxu0 %v1640
        %v1752 = vpop.f32.mrf.mxu0
        %v1753 = vadd.f32 %v1544, %v1752
        %1754 = vmatmul.f32.gmra.mxu0 %v1643
        %v1755 = vpop.f32.mrf.mxu0
        %v1756 = vadd.f32 %v1547, %v1755
        %1757 = vmatmul.f32.gmra.mxu0 %v1646
        %v1758 = vpop.f32.mrf.mxu0
        %v1759 = vadd.f32 %v1550, %v1758
        %1760 = vmatmul.f32.gmra.mxu0 %v1649
        %v1761 = vpop.f32.mrf.mxu0
        %v1762 = vadd.f32 %v1553, %v1761
        %1763 = vmatmul.f32.gmra.mxu0 %v1652
        %v1764 = vpop.f32.mrf.mxu0
        %v1765 = vadd.f32 %v1556, %v1764
        %1766 = vmatmul.f32.gmra.mxu0 %v1655
        %v1767 = vpop.f32.mrf.mxu0
        %v1768 = vadd.f32 %v1559, %v1767
        %1769 = vmatmul.f32.gmra.mxu0 %v1658
        %v1770 = vpop.f32.mrf.mxu0
        %v1771 = vadd.f32 %v1562, %v1770
        %1772 = vmatmul.f32.gmra.mxu0 %v1661
        %v1773 = vpop.f32.mrf.mxu0
        %v1774 = vadd.f32 %v1565, %v1773
        %1775 = vmatmul.f32.gmra.mxu0 %v1664
        %v1776 = vpop.f32.mrf.mxu0
        %v1777 = vadd.f32 %v1568, %v1776
        %1778 = vmatmul.f32.gmra.mxu0 %v1667
        %v1779 = vpop.f32.mrf.mxu0
        %v1780 = vadd.f32 %v1571, %v1779
        %1781 = vmatmul.f32.gmra.mxu0 %v1670
        %v1782 = vpop.f32.mrf.mxu0
        %v1783 = vadd.f32 %v1574, %v1782
        %1784 = vmatmul.f32.gmra.mxu0 %v1673
        %v1785 = vpop.f32.mrf.mxu0
        %v1786 = vadd.f32 %v1577, %v1785
        %1787 = vmatmul.f32.gmra.mxu0 %v1676
        %v1788 = vpop.f32.mrf.mxu0
        %v1789 = vadd.f32 %v1580, %v1788
        %1790 = vmatmul.f32.gmra.mxu0 %v1679
        %v1791 = vpop.f32.mrf.mxu0
        %v1792 = vadd.f32 %v1583, %v1791
        %1793 = vdwg.mxu0
        %s1794 = scalar_lea.vmem [#allocation2], 48
        %v1795 = vld [vmem:[%s1794] sm:$0xff]
        %v1796 = vld [vmem:[%s1794 + $0x8] sm:$0xff]
        %v1797 = vld [vmem:[%s1794 + $0x18] sm:$0xff]
        %v1798 = vld [vmem:[%s1794 + $0x20] sm:$0xff]
        %v1799 = vld [vmem:[%s1794 + $0x30] sm:$0xff]
        %v1800 = vld [vmem:[%s1794 + $0x38] sm:$0xff]
        %v1801 = vld [vmem:[%s1794 + $0x48] sm:$0xff]
        %v1802 = vld [vmem:[%s1794 + $0x50] sm:$0xff]
        %v1803 = vld [vmem:[%s1794 + $0x60] sm:$0xff]
        %v1804 = vld [vmem:[%s1794 + $0x68] sm:$0xff]
        %v1805 = vld [vmem:[%s1794 + $0x78] sm:$0xff]
        %v1806 = vld [vmem:[%s1794 + $0x80] sm:$0xff]
        %v1807 = vld [vmem:[%s1794 + $0x90] sm:$0xff]
        %v1808 = vld [vmem:[%s1794 + $0x98] sm:$0xff]
        %v1809 = vld [vmem:[%s1794 + $0xa8] sm:$0xff]
        %v1810 = vld [vmem:[%s1794 + $0xb0] sm:$0xff]
        %v1811 = vld [vmem:[%s1794 + $0xc0] sm:$0xff]
        %v1812 = vld [vmem:[%s1794 + $0xc8] sm:$0xff]
        %v1813 = vld [vmem:[%s1794 + $0xd8] sm:$0xff]
        %v1814 = vld [vmem:[%s1794 + $0xe0] sm:$0xff]
        %v1815 = vld [vmem:[%s1794 + $0xf0] sm:$0xff]
        %v1816 = vld [vmem:[%s1794 + $0xf8] sm:$0xff]
        %v1817 = vld [vmem:[%s1794 + $0x108] sm:$0xff]
        %v1818 = vld [vmem:[%s1794 + $0x110] sm:$0xff]
        %v1819 = vld [vmem:[%s1794 + $0x120] sm:$0xff]
        %v1820 = vld [vmem:[%s1794 + $0x128] sm:$0xff]
        %v1821 = vld [vmem:[%s1794 + $0x138] sm:$0xff]
        %v1822 = vld [vmem:[%s1794 + $0x140] sm:$0xff]
        %v1823 = vld [vmem:[%s1794 + $0x150] sm:$0xff]
        %v1824 = vld [vmem:[%s1794 + $0x158] sm:$0xff]
        %v1825 = vld [vmem:[%s1794 + $0x168] sm:$0xff]
        %v1826 = vld [vmem:[%s1794 + $0x170] sm:$0xff]
        %v1827 = vld [vmem:[%s1794 + $0x1] sm:$0xff]
        %v1828 = vld [vmem:[%s1794 + $0x9] sm:$0xff]
        %v1829 = vld [vmem:[%s1794 + $0x19] sm:$0xff]
        %v1830 = vld [vmem:[%s1794 + $0x21] sm:$0xff]
        %v1831 = vld [vmem:[%s1794 + $0x31] sm:$0xff]
        %v1832 = vld [vmem:[%s1794 + $0x39] sm:$0xff]
        %v1833 = vld [vmem:[%s1794 + $0x49] sm:$0xff]
        %v1834 = vld [vmem:[%s1794 + $0x51] sm:$0xff]
        %v1835 = vld [vmem:[%s1794 + $0x61] sm:$0xff]
        %v1836 = vld [vmem:[%s1794 + $0x69] sm:$0xff]
        %v1837 = vld [vmem:[%s1794 + $0x79] sm:$0xff]
        %v1838 = vld [vmem:[%s1794 + $0x81] sm:$0xff]
        %v1839 = vld [vmem:[%s1794 + $0x91] sm:$0xff]
        %v1840 = vld [vmem:[%s1794 + $0x99] sm:$0xff]
        %v1841 = vld [vmem:[%s1794 + $0xa9] sm:$0xff]
        %v1842 = vld [vmem:[%s1794 + $0xb1] sm:$0xff]
        %v1843 = vld [vmem:[%s1794 + $0xc1] sm:$0xff]
        %v1844 = vld [vmem:[%s1794 + $0xc9] sm:$0xff]
        %v1845 = vld [vmem:[%s1794 + $0xd9] sm:$0xff]
        %v1846 = vld [vmem:[%s1794 + $0xe1] sm:$0xff]
        %v1847 = vld [vmem:[%s1794 + $0xf1] sm:$0xff]
        %v1848 = vld [vmem:[%s1794 + $0xf9] sm:$0xff]
        %v1849 = vld [vmem:[%s1794 + $0x109] sm:$0xff]
        %v1850 = vld [vmem:[%s1794 + $0x111] sm:$0xff]
        %v1851 = vld [vmem:[%s1794 + $0x121] sm:$0xff]
        %v1852 = vld [vmem:[%s1794 + $0x129] sm:$0xff]
        %v1853 = vld [vmem:[%s1794 + $0x139] sm:$0xff]
        %v1854 = vld [vmem:[%s1794 + $0x141] sm:$0xff]
        %v1855 = vld [vmem:[%s1794 + $0x151] sm:$0xff]
        %v1856 = vld [vmem:[%s1794 + $0x159] sm:$0xff]
        %v1857 = vld [vmem:[%s1794 + $0x169] sm:$0xff]
        %v1858 = vld [vmem:[%s1794 + $0x171] sm:$0xff]
        %v1859 = vld [vmem:[%s1794 + $0x2] sm:$0xff]
        %v1860 = vld [vmem:[%s1794 + $0xa] sm:$0xff]
        %v1861 = vld [vmem:[%s1794 + $0x1a] sm:$0xff]
        %v1862 = vld [vmem:[%s1794 + $0x22] sm:$0xff]
        %v1863 = vld [vmem:[%s1794 + $0x32] sm:$0xff]
        %v1864 = vld [vmem:[%s1794 + $0x3a] sm:$0xff]
        %v1865 = vld [vmem:[%s1794 + $0x4a] sm:$0xff]
        %v1866 = vld [vmem:[%s1794 + $0x52] sm:$0xff]
        %v1867 = vld [vmem:[%s1794 + $0x62] sm:$0xff]
        %v1868 = vld [vmem:[%s1794 + $0x6a] sm:$0xff]
        %v1869 = vld [vmem:[%s1794 + $0x7a] sm:$0xff]
        %v1870 = vld [vmem:[%s1794 + $0x82] sm:$0xff]
        %v1871 = vld [vmem:[%s1794 + $0x92] sm:$0xff]
        %v1872 = vld [vmem:[%s1794 + $0x9a] sm:$0xff]
        %v1873 = vld [vmem:[%s1794 + $0xaa] sm:$0xff]
        %v1874 = vld [vmem:[%s1794 + $0xb2] sm:$0xff]
        %v1875 = vld [vmem:[%s1794 + $0xc2] sm:$0xff]
        %v1876 = vld [vmem:[%s1794 + $0xca] sm:$0xff]
        %v1877 = vld [vmem:[%s1794 + $0xda] sm:$0xff]
        %v1878 = vld [vmem:[%s1794 + $0xe2] sm:$0xff]
        %v1879 = vld [vmem:[%s1794 + $0xf2] sm:$0xff]
        %v1880 = vld [vmem:[%s1794 + $0xfa] sm:$0xff]
        %v1881 = vld [vmem:[%s1794 + $0x10a] sm:$0xff]
        %v1882 = vld [vmem:[%s1794 + $0x112] sm:$0xff]
        %v1883 = vld [vmem:[%s1794 + $0x122] sm:$0xff]
        %v1884 = vld [vmem:[%s1794 + $0x12a] sm:$0xff]
        %v1885 = vld [vmem:[%s1794 + $0x13a] sm:$0xff]
        %v1886 = vld [vmem:[%s1794 + $0x142] sm:$0xff]
        %v1887 = vld [vmem:[%s1794 + $0x152] sm:$0xff]
        %v1888 = vld [vmem:[%s1794 + $0x15a] sm:$0xff]
        %v1889 = vld [vmem:[%s1794 + $0x16a] sm:$0xff]
        %v1890 = vld [vmem:[%s1794 + $0x172] sm:$0xff]
        %1923 = vrot.lane.b32.xlu0 %v1827, 32
        %v1924 = vpop.permute.xlu0 %1923
        %1925 = vrot.lane.b32.xlu0 %v1828, 32
        %v1926 = vpop.permute.xlu0 %1925
        %1927 = vrot.lane.b32.xlu0 %v1829, 32
        %v1928 = vpop.permute.xlu0 %1927
        %1929 = vrot.lane.b32.xlu0 %v1830, 32
        %v1930 = vpop.permute.xlu0 %1929
        %1931 = vrot.lane.b32.xlu0 %v1831, 32
        %v1932 = vpop.permute.xlu0 %1931
        %1933 = vrot.lane.b32.xlu0 %v1832, 32
        %v1934 = vpop.permute.xlu0 %1933
        %1935 = vrot.lane.b32.xlu0 %v1833, 32
        %v1936 = vpop.permute.xlu0 %1935
        %1937 = vrot.lane.b32.xlu0 %v1834, 32
        %v1938 = vpop.permute.xlu0 %1937
        %1939 = vrot.lane.b32.xlu0 %v1835, 32
        %v1940 = vpop.permute.xlu0 %1939
        %1941 = vrot.lane.b32.xlu0 %v1836, 32
        %v1942 = vpop.permute.xlu0 %1941
        %1943 = vrot.lane.b32.xlu0 %v1837, 32
        %v1944 = vpop.permute.xlu0 %1943
        %1945 = vrot.lane.b32.xlu0 %v1838, 32
        %v1946 = vpop.permute.xlu0 %1945
        %1947 = vrot.lane.b32.xlu0 %v1839, 32
        %v1948 = vpop.permute.xlu0 %1947
        %1949 = vrot.lane.b32.xlu0 %v1840, 32
        %v1950 = vpop.permute.xlu0 %1949
        %1951 = vrot.lane.b32.xlu0 %v1841, 32
        %v1952 = vpop.permute.xlu0 %1951
        %1953 = vrot.lane.b32.xlu0 %v1842, 32
        %v1954 = vpop.permute.xlu0 %1953
        %1955 = vrot.lane.b32.xlu0 %v1843, 32
        %v1956 = vpop.permute.xlu0 %1955
        %1957 = vrot.lane.b32.xlu0 %v1844, 32
        %v1958 = vpop.permute.xlu0 %1957
        %1959 = vrot.lane.b32.xlu0 %v1845, 32
        %v1960 = vpop.permute.xlu0 %1959
        %1961 = vrot.lane.b32.xlu0 %v1846, 32
        %v1962 = vpop.permute.xlu0 %1961
        %1963 = vrot.lane.b32.xlu0 %v1847, 32
        %v1964 = vpop.permute.xlu0 %1963
        %1965 = vrot.lane.b32.xlu0 %v1848, 32
        %v1966 = vpop.permute.xlu0 %1965
        %1967 = vrot.lane.b32.xlu0 %v1849, 32
        %v1968 = vpop.permute.xlu0 %1967
        %1969 = vrot.lane.b32.xlu0 %v1850, 32
        %v1970 = vpop.permute.xlu0 %1969
        %1971 = vrot.lane.b32.xlu0 %v1851, 32
        %v1972 = vpop.permute.xlu0 %1971
        %1973 = vrot.lane.b32.xlu0 %v1852, 32
        %v1974 = vpop.permute.xlu0 %1973
        %1975 = vrot.lane.b32.xlu0 %v1853, 32
        %v1976 = vpop.permute.xlu0 %1975
        %1977 = vrot.lane.b32.xlu0 %v1854, 32
        %v1978 = vpop.permute.xlu0 %1977
        %1979 = vrot.lane.b32.xlu0 %v1855, 32
        %v1980 = vpop.permute.xlu0 %1979
        %1981 = vrot.lane.b32.xlu0 %v1856, 32
        %v1982 = vpop.permute.xlu0 %1981
        %1983 = vrot.lane.b32.xlu0 %v1857, 32
        %v1984 = vpop.permute.xlu0 %1983
        %1985 = vrot.lane.b32.xlu0 %v1858, 32
        %v1986 = vpop.permute.xlu0 %1985
        %2051 = vrot.lane.b32.xlu0 %v1859, 64
        %v2052 = vpop.permute.xlu0 %2051
        %2053 = vrot.lane.b32.xlu0 %v1860, 64
        %v2054 = vpop.permute.xlu0 %2053
        %2055 = vrot.lane.b32.xlu0 %v1861, 64
        %v2056 = vpop.permute.xlu0 %2055
        %2057 = vrot.lane.b32.xlu0 %v1862, 64
        %v2058 = vpop.permute.xlu0 %2057
        %2059 = vrot.lane.b32.xlu0 %v1863, 64
        %v2060 = vpop.permute.xlu0 %2059
        %2061 = vrot.lane.b32.xlu0 %v1864, 64
        %v2062 = vpop.permute.xlu0 %2061
        %2063 = vrot.lane.b32.xlu0 %v1865, 64
        %v2064 = vpop.permute.xlu0 %2063
        %2065 = vrot.lane.b32.xlu0 %v1866, 64
        %v2066 = vpop.permute.xlu0 %2065
        %2067 = vrot.lane.b32.xlu0 %v1867, 64
        %v2068 = vpop.permute.xlu0 %2067
        %2069 = vrot.lane.b32.xlu0 %v1868, 64
        %v2070 = vpop.permute.xlu0 %2069
        %2071 = vrot.lane.b32.xlu0 %v1869, 64
        %v2072 = vpop.permute.xlu0 %2071
        %2073 = vrot.lane.b32.xlu0 %v1870, 64
        %v2074 = vpop.permute.xlu0 %2073
        %2075 = vrot.lane.b32.xlu0 %v1871, 64
        %v2076 = vpop.permute.xlu0 %2075
        %2077 = vrot.lane.b32.xlu0 %v1872, 64
        %v2078 = vpop.permute.xlu0 %2077
        %2079 = vrot.lane.b32.xlu0 %v1873, 64
        %v2080 = vpop.permute.xlu0 %2079
        %2081 = vrot.lane.b32.xlu0 %v1874, 64
        %v2082 = vpop.permute.xlu0 %2081
        %2083 = vrot.lane.b32.xlu0 %v1875, 64
        %v2084 = vpop.permute.xlu0 %2083
        %2085 = vrot.lane.b32.xlu0 %v1876, 64
        %v2086 = vpop.permute.xlu0 %2085
        %2087 = vrot.lane.b32.xlu0 %v1877, 64
        %v2088 = vpop.permute.xlu0 %2087
        %2089 = vrot.lane.b32.xlu0 %v1878, 64
        %v2090 = vpop.permute.xlu0 %2089
        %2091 = vrot.lane.b32.xlu0 %v1879, 64
        %v2092 = vpop.permute.xlu0 %2091
        %2093 = vrot.lane.b32.xlu0 %v1880, 64
        %v2094 = vpop.permute.xlu0 %2093
        %2095 = vrot.lane.b32.xlu0 %v1881, 64
        %v2096 = vpop.permute.xlu0 %2095
        %2097 = vrot.lane.b32.xlu0 %v1882, 64
        %v2098 = vpop.permute.xlu0 %2097
        %2099 = vrot.lane.b32.xlu0 %v1883, 64
        %v2100 = vpop.permute.xlu0 %2099
        %2101 = vrot.lane.b32.xlu0 %v1884, 64
        %v2102 = vpop.permute.xlu0 %2101
        %2103 = vrot.lane.b32.xlu0 %v1885, 64
        %v2104 = vpop.permute.xlu0 %2103
        %2105 = vrot.lane.b32.xlu0 %v1886, 64
        %v2106 = vpop.permute.xlu0 %2105
        %2107 = vrot.lane.b32.xlu0 %v1887, 64
        %v2108 = vpop.permute.xlu0 %2107
        %2109 = vrot.lane.b32.xlu0 %v1888, 64
        %v2110 = vpop.permute.xlu0 %2109
        %2111 = vrot.lane.b32.xlu0 %v1889, 64
        %v2112 = vpop.permute.xlu0 %2111
        %2113 = vrot.lane.b32.xlu0 %v1890, 64
        %v2114 = vpop.permute.xlu0 %2113
        %v2147 = vsel %vm438, %v1795, %v1924
        %v2148 = vsel %vm438, %v1796, %v1926
        %v2149 = vsel %vm438, %v1797, %v1928
        %v2150 = vsel %vm438, %v1798, %v1930
        %v2151 = vsel %vm438, %v1799, %v1932
        %v2152 = vsel %vm438, %v1800, %v1934
        %v2153 = vsel %vm438, %v1801, %v1936
        %v2154 = vsel %vm438, %v1802, %v1938
        %v2155 = vsel %vm438, %v1803, %v1940
        %v2156 = vsel %vm438, %v1804, %v1942
        %v2157 = vsel %vm438, %v1805, %v1944
        %v2158 = vsel %vm438, %v1806, %v1946
        %v2159 = vsel %vm438, %v1807, %v1948
        %v2160 = vsel %vm438, %v1808, %v1950
        %v2161 = vsel %vm438, %v1809, %v1952
        %v2162 = vsel %vm438, %v1810, %v1954
        %v2163 = vsel %vm438, %v1811, %v1956
        %v2164 = vsel %vm438, %v1812, %v1958
        %v2165 = vsel %vm438, %v1813, %v1960
        %v2166 = vsel %vm438, %v1814, %v1962
        %v2167 = vsel %vm438, %v1815, %v1964
        %v2168 = vsel %vm438, %v1816, %v1966
        %v2169 = vsel %vm438, %v1817, %v1968
        %v2170 = vsel %vm438, %v1818, %v1970
        %v2171 = vsel %vm438, %v1819, %v1972
        %v2172 = vsel %vm438, %v1820, %v1974
        %v2173 = vsel %vm438, %v1821, %v1976
        %v2174 = vsel %vm438, %v1822, %v1978
        %v2175 = vsel %vm438, %v1823, %v1980
        %v2176 = vsel %vm438, %v1824, %v1982
        %v2177 = vsel %vm438, %v1825, %v1984
        %v2178 = vsel %vm438, %v1826, %v1986
        %v2179 = vsel %vm901, %v2147, %v2052
        %v2180 = vsel %vm901, %v2148, %v2054
        %v2181 = vsel %vm901, %v2149, %v2056
        %v2182 = vsel %vm901, %v2150, %v2058
        %v2183 = vsel %vm901, %v2151, %v2060
        %v2184 = vsel %vm901, %v2152, %v2062
        %v2185 = vsel %vm901, %v2153, %v2064
        %v2186 = vsel %vm901, %v2154, %v2066
        %v2187 = vsel %vm901, %v2155, %v2068
        %v2188 = vsel %vm901, %v2156, %v2070
        %v2189 = vsel %vm901, %v2157, %v2072
        %v2190 = vsel %vm901, %v2158, %v2074
        %v2191 = vsel %vm901, %v2159, %v2076
        %v2192 = vsel %vm901, %v2160, %v2078
        %v2193 = vsel %vm901, %v2161, %v2080
        %v2194 = vsel %vm901, %v2162, %v2082
        %v2195 = vsel %vm901, %v2163, %v2084
        %v2196 = vsel %vm901, %v2164, %v2086
        %v2197 = vsel %vm901, %v2165, %v2088
        %v2198 = vsel %vm901, %v2166, %v2090
        %v2199 = vsel %vm901, %v2167, %v2092
        %v2200 = vsel %vm901, %v2168, %v2094
        %v2201 = vsel %vm901, %v2169, %v2096
        %v2202 = vsel %vm901, %v2170, %v2098
        %v2203 = vsel %vm901, %v2171, %v2100
        %v2204 = vsel %vm901, %v2172, %v2102
        %v2205 = vsel %vm901, %v2173, %v2104
        %v2206 = vsel %vm901, %v2174, %v2106
        %v2207 = vsel %vm901, %v2175, %v2108
        %v2208 = vsel %vm901, %v2176, %v2110
        %v2209 = vsel %vm901, %v2177, %v2112
        %v2210 = vsel %vm901, %v2178, %v2114
        %s2211 = scalar_lea.vmem [#allocation7], 192
        %v2212 = vld [vmem:[%s2211] sm:$0xff]
        %v2213 = vld [vmem:[%s2211 + $0x8] sm:$0xff]
        %v2214 = vld [vmem:[%s2211 + $0x10] sm:$0xff]
        %v2215 = vld [vmem:[%s2211 + $0x18] sm:$0xff]
        %v2216 = vld [vmem:[%s2211 + $0x20] sm:$0xff]
        %v2217 = vld [vmem:[%s2211 + $0x28] sm:$0xff]
        %v2218 = vld [vmem:[%s2211 + $0x30] sm:$0xff]
        %v2219 = vld [vmem:[%s2211 + $0x38] sm:$0xff]
        %v2220 = vld [vmem:[%s2211 + $0x40] sm:$0xff]
        %v2221 = vld [vmem:[%s2211 + $0x48] sm:$0xff]
        %v2222 = vld [vmem:[%s2211 + $0x50] sm:$0xff]
        %v2223 = vld [vmem:[%s2211 + $0x58] sm:$0xff]
        %v2225 = vsel %vm1375, %v2179, 0
        %v2228 = vsel %vm1375, %v2180, 0
        %v2231 = vsel %vm1375, %v2181, 0
        %v2234 = vsel %vm1375, %v2182, 0
        %v2237 = vsel %vm1375, %v2183, 0
        %v2240 = vsel %vm1375, %v2184, 0
        %v2243 = vsel %vm1375, %v2185, 0
        %v2246 = vsel %vm1375, %v2186, 0
        %v2249 = vsel %vm1375, %v2187, 0
        %v2252 = vsel %vm1375, %v2188, 0
        %v2255 = vsel %vm1375, %v2189, 0
        %v2258 = vsel %vm1375, %v2190, 0
        %v2261 = vsel %vm1375, %v2191, 0
        %v2264 = vsel %vm1375, %v2192, 0
        %v2267 = vsel %vm1375, %v2193, 0
        %v2270 = vsel %vm1375, %v2194, 0
        %v2273 = vsel %vm1375, %v2195, 0
        %v2276 = vsel %vm1375, %v2196, 0
        %v2279 = vsel %vm1375, %v2197, 0
        %v2282 = vsel %vm1375, %v2198, 0
        %v2285 = vsel %vm1375, %v2199, 0
        %v2288 = vsel %vm1375, %v2200, 0
        %v2291 = vsel %vm1375, %v2201, 0
        %v2294 = vsel %vm1375, %v2202, 0
        %v2297 = vsel %vm1375, %v2203, 0
        %v2300 = vsel %vm1375, %v2204, 0
        %v2303 = vsel %vm1375, %v2205, 0
        %v2306 = vsel %vm1375, %v2206, 0
        %v2309 = vsel %vm1375, %v2207, 0
        %v2312 = vsel %vm1375, %v2208, 0
        %v2315 = vsel %vm1375, %v2209, 0
        %v2318 = vsel %vm1375, %v2210, 0
        %2320 = vmatpush.msra.mxu0 0.0
        %2321 = vmatpush.msra.mxu0 0.0
        %2322 = vmatpush.msra.mxu0 0.0
        %2323 = vmatpush.msra.mxu0 0.0
        %2324 = vmatpush.msra.mxu0 %v2223
        %2325 = vmatpush.msra.mxu0 %v2222
        %2326 = vmatpush.msra.mxu0 %v2221
        %2327 = vmatpush.msra.mxu0 %v2220
        %2328 = vmatpush.msra.mxu0 %v2219
        %2329 = vmatpush.msra.mxu0 %v2218
        %2330 = vmatpush.msra.mxu0 %v2217
        %2331 = vmatpush.msra.mxu0 %v2216
        %2332 = vmatpush.msra.mxu0 %v2215
        %2333 = vmatpush.msra.mxu0 %v2214
        %2334 = vmatpush.msra.mxu0 %v2213
        %2335 = vmatpush.msra.mxu0 %v2212
        %2336 = vmatmul.f32.gmra.mxu0 %v2225
        %v2337 = vpop.f32.mrf.mxu0
        %v2338 = vadd.f32 0.0, %v2337
        %2339 = vmatmul.f32.gmra.mxu0 %v2228
        %v2340 = vpop.f32.mrf.mxu0
        %v2341 = vadd.f32 0.0, %v2340
        %2342 = vmatmul.f32.gmra.mxu0 %v2231
        %v2343 = vpop.f32.mrf.mxu0
        %v2344 = vadd.f32 0.0, %v2343
        %2345 = vmatmul.f32.gmra.mxu0 %v2234
        %v2346 = vpop.f32.mrf.mxu0
        %v2347 = vadd.f32 0.0, %v2346
        %2348 = vmatmul.f32.gmra.mxu0 %v2237
        %v2349 = vpop.f32.mrf.mxu0
        %v2350 = vadd.f32 0.0, %v2349
        %2351 = vmatmul.f32.gmra.mxu0 %v2240
        %v2352 = vpop.f32.mrf.mxu0
        %v2353 = vadd.f32 0.0, %v2352
        %2354 = vmatmul.f32.gmra.mxu0 %v2243
        %v2355 = vpop.f32.mrf.mxu0
        %v2356 = vadd.f32 0.0, %v2355
        %2357 = vmatmul.f32.gmra.mxu0 %v2246
        %v2358 = vpop.f32.mrf.mxu0
        %v2359 = vadd.f32 0.0, %v2358
        %2360 = vmatmul.f32.gmra.mxu0 %v2249
        %v2361 = vpop.f32.mrf.mxu0
        %v2362 = vadd.f32 0.0, %v2361
        %2363 = vmatmul.f32.gmra.mxu0 %v2252
        %v2364 = vpop.f32.mrf.mxu0
        %v2365 = vadd.f32 0.0, %v2364
        %2366 = vmatmul.f32.gmra.mxu0 %v2255
        %v2367 = vpop.f32.mrf.mxu0
        %v2368 = vadd.f32 0.0, %v2367
        %2369 = vmatmul.f32.gmra.mxu0 %v2258
        %v2370 = vpop.f32.mrf.mxu0
        %v2371 = vadd.f32 0.0, %v2370
        %2372 = vmatmul.f32.gmra.mxu0 %v2261
        %v2373 = vpop.f32.mrf.mxu0
        %v2374 = vadd.f32 0.0, %v2373
        %2375 = vmatmul.f32.gmra.mxu0 %v2264
        %v2376 = vpop.f32.mrf.mxu0
        %v2377 = vadd.f32 0.0, %v2376
        %2378 = vmatmul.f32.gmra.mxu0 %v2267
        %v2379 = vpop.f32.mrf.mxu0
        %v2380 = vadd.f32 0.0, %v2379
        %2381 = vmatmul.f32.gmra.mxu0 %v2270
        %v2382 = vpop.f32.mrf.mxu0
        %v2383 = vadd.f32 0.0, %v2382
        %2384 = vmatmul.f32.gmra.mxu0 %v2273
        %v2385 = vpop.f32.mrf.mxu0
        %v2386 = vadd.f32 0.0, %v2385
        %2387 = vmatmul.f32.gmra.mxu0 %v2276
        %v2388 = vpop.f32.mrf.mxu0
        %v2389 = vadd.f32 0.0, %v2388
        %2390 = vmatmul.f32.gmra.mxu0 %v2279
        %v2391 = vpop.f32.mrf.mxu0
        %v2392 = vadd.f32 0.0, %v2391
        %2393 = vmatmul.f32.gmra.mxu0 %v2282
        %v2394 = vpop.f32.mrf.mxu0
        %v2395 = vadd.f32 0.0, %v2394
        %2396 = vmatmul.f32.gmra.mxu0 %v2285
        %v2397 = vpop.f32.mrf.mxu0
        %v2398 = vadd.f32 0.0, %v2397
        %2399 = vmatmul.f32.gmra.mxu0 %v2288
        %v2400 = vpop.f32.mrf.mxu0
        %v2401 = vadd.f32 0.0, %v2400
        %2402 = vmatmul.f32.gmra.mxu0 %v2291
        %v2403 = vpop.f32.mrf.mxu0
        %v2404 = vadd.f32 0.0, %v2403
        %2405 = vmatmul.f32.gmra.mxu0 %v2294
        %v2406 = vpop.f32.mrf.mxu0
        %v2407 = vadd.f32 0.0, %v2406
        %2408 = vmatmul.f32.gmra.mxu0 %v2297
        %v2409 = vpop.f32.mrf.mxu0
        %v2410 = vadd.f32 0.0, %v2409
        %2411 = vmatmul.f32.gmra.mxu0 %v2300
        %v2412 = vpop.f32.mrf.mxu0
        %v2413 = vadd.f32 0.0, %v2412
        %2414 = vmatmul.f32.gmra.mxu0 %v2303
        %v2415 = vpop.f32.mrf.mxu0
        %v2416 = vadd.f32 0.0, %v2415
        %2417 = vmatmul.f32.gmra.mxu0 %v2306
        %v2418 = vpop.f32.mrf.mxu0
        %v2419 = vadd.f32 0.0, %v2418
        %2420 = vmatmul.f32.gmra.mxu0 %v2309
        %v2421 = vpop.f32.mrf.mxu0
        %v2422 = vadd.f32 0.0, %v2421
        %2423 = vmatmul.f32.gmra.mxu0 %v2312
        %v2424 = vpop.f32.mrf.mxu0
        %v2425 = vadd.f32 0.0, %v2424
        %2426 = vmatmul.f32.gmra.mxu0 %v2315
        %v2427 = vpop.f32.mrf.mxu0
        %v2428 = vadd.f32 0.0, %v2427
        %2429 = vmatmul.f32.gmra.mxu0 %v2318
        %v2430 = vpop.f32.mrf.mxu0
        %v2431 = vadd.f32 0.0, %v2430
        %2432 = vdwg.mxu0
        %v2433 = vadd.f32 %v1699, %v2338
        %v2434 = vadd.f32 %v1702, %v2341
        %v2435 = vadd.f32 %v1705, %v2344
        %v2436 = vadd.f32 %v1708, %v2347
        %v2437 = vadd.f32 %v1711, %v2350
        %v2438 = vadd.f32 %v1714, %v2353
        %v2439 = vadd.f32 %v1717, %v2356
        %v2440 = vadd.f32 %v1720, %v2359
        %v2441 = vadd.f32 %v1723, %v2362
        %v2442 = vadd.f32 %v1726, %v2365
        %v2443 = vadd.f32 %v1729, %v2368
        %v2444 = vadd.f32 %v1732, %v2371
        %v2445 = vadd.f32 %v1735, %v2374
        %v2446 = vadd.f32 %v1738, %v2377
        %v2447 = vadd.f32 %v1741, %v2380
        %v2448 = vadd.f32 %v1744, %v2383
        %v2449 = vadd.f32 %v1747, %v2386
        %v2450 = vadd.f32 %v1750, %v2389
        %v2451 = vadd.f32 %v1753, %v2392
        %v2452 = vadd.f32 %v1756, %v2395
        %v2453 = vadd.f32 %v1759, %v2398
        %v2454 = vadd.f32 %v1762, %v2401
        %v2455 = vadd.f32 %v1765, %v2404
        %v2456 = vadd.f32 %v1768, %v2407
        %v2457 = vadd.f32 %v1771, %v2410
        %v2458 = vadd.f32 %v1774, %v2413
        %v2459 = vadd.f32 %v1777, %v2416
        %v2460 = vadd.f32 %v1780, %v2419
        %v2461 = vadd.f32 %v1783, %v2422
        %v2462 = vadd.f32 %v1786, %v2425
        %v2463 = vadd.f32 %v1789, %v2428
        %v2464 = vadd.f32 %v1792, %v2431
        %v2465 = vld [vmem:[%s396] sm:$0x1]
        %v2467 = vperm.slane %v2465, 0
        %v2469 = vmul.f32 %v2433, %v2467
        %v2470 = vmul.f32 %v2434, %v2467
        %v2471 = vmul.f32 %v2435, %v2467
        %v2472 = vmul.f32 %v2436, %v2467
        %v2473 = vmul.f32 %v2437, %v2467
        %v2474 = vmul.f32 %v2438, %v2467
        %v2475 = vmul.f32 %v2439, %v2467
        %v2476 = vmul.f32 %v2440, %v2467
        %v2477 = vmul.f32 %v2441, %v2467
        %v2478 = vmul.f32 %v2442, %v2467
        %v2479 = vmul.f32 %v2443, %v2467
        %v2480 = vmul.f32 %v2444, %v2467
        %v2481 = vmul.f32 %v2445, %v2467
        %v2482 = vmul.f32 %v2446, %v2467
        %v2483 = vmul.f32 %v2447, %v2467
        %v2484 = vmul.f32 %v2448, %v2467
        %v2485 = vmul.f32 %v2449, %v2467
        %v2486 = vmul.f32 %v2450, %v2467
        %v2487 = vmul.f32 %v2451, %v2467
        %v2488 = vmul.f32 %v2452, %v2467
        %v2489 = vmul.f32 %v2453, %v2467
        %v2490 = vmul.f32 %v2454, %v2467
        %v2491 = vmul.f32 %v2455, %v2467
        %v2492 = vmul.f32 %v2456, %v2467
        %v2493 = vmul.f32 %v2457, %v2467
        %v2494 = vmul.f32 %v2458, %v2467
        %v2495 = vmul.f32 %v2459, %v2467
        %v2496 = vmul.f32 %v2460, %v2467
        %v2497 = vmul.f32 %v2461, %v2467
        %v2498 = vmul.f32 %v2462, %v2467
        %v2499 = vmul.f32 %v2463, %v2467
        %v2500 = vmul.f32 %v2464, %v2467
        %v2501 = vld [vmem:[%s399] sm:$0x1]
        %v2503 = vperm.slane %v2501, 0
        %v2505 = vadd.f32 %v2469, %v2503
        %v2506 = vadd.f32 %v2470, %v2503
        %v2507 = vadd.f32 %v2471, %v2503
        %v2508 = vadd.f32 %v2472, %v2503
        %v2509 = vadd.f32 %v2473, %v2503
        %v2510 = vadd.f32 %v2474, %v2503
        %v2511 = vadd.f32 %v2475, %v2503
        %v2512 = vadd.f32 %v2476, %v2503
        %v2513 = vadd.f32 %v2477, %v2503
        %v2514 = vadd.f32 %v2478, %v2503
        %v2515 = vadd.f32 %v2479, %v2503
        %v2516 = vadd.f32 %v2480, %v2503
        %v2517 = vadd.f32 %v2481, %v2503
        %v2518 = vadd.f32 %v2482, %v2503
        %v2519 = vadd.f32 %v2483, %v2503
        %v2520 = vadd.f32 %v2484, %v2503
        %v2521 = vadd.f32 %v2485, %v2503
        %v2522 = vadd.f32 %v2486, %v2503
        %v2523 = vadd.f32 %v2487, %v2503
        %v2524 = vadd.f32 %v2488, %v2503
        %v2525 = vadd.f32 %v2489, %v2503
        %v2526 = vadd.f32 %v2490, %v2503
        %v2527 = vadd.f32 %v2491, %v2503
        %v2528 = vadd.f32 %v2492, %v2503
        %v2529 = vadd.f32 %v2493, %v2503
        %v2530 = vadd.f32 %v2494, %v2503
        %v2531 = vadd.f32 %v2495, %v2503
        %v2532 = vadd.f32 %v2496, %v2503
        %v2533 = vadd.f32 %v2497, %v2503
        %v2534 = vadd.f32 %v2498, %v2503
        %v2535 = vadd.f32 %v2499, %v2503
        %v2536 = vadd.f32 %v2500, %v2503
        %v2537 = vmax.f32 %v2505, 0.0
        %v2538 = vmax.f32 %v2506, 0.0
        %v2539 = vmax.f32 %v2507, 0.0
        %v2540 = vmax.f32 %v2508, 0.0
        %v2541 = vmax.f32 %v2509, 0.0
        %v2542 = vmax.f32 %v2510, 0.0
        %v2543 = vmax.f32 %v2511, 0.0
        %v2544 = vmax.f32 %v2512, 0.0
        %v2545 = vmax.f32 %v2513, 0.0
        %v2546 = vmax.f32 %v2514, 0.0
        %v2547 = vmax.f32 %v2515, 0.0
        %v2548 = vmax.f32 %v2516, 0.0
        %v2549 = vmax.f32 %v2517, 0.0
        %v2550 = vmax.f32 %v2518, 0.0
        %v2551 = vmax.f32 %v2519, 0.0
        %v2552 = vmax.f32 %v2520, 0.0
        %v2553 = vmax.f32 %v2521, 0.0
        %v2554 = vmax.f32 %v2522, 0.0
        %v2555 = vmax.f32 %v2523, 0.0
        %v2556 = vmax.f32 %v2524, 0.0
        %v2557 = vmax.f32 %v2525, 0.0
        %v2558 = vmax.f32 %v2526, 0.0
        %v2559 = vmax.f32 %v2527, 0.0
        %v2560 = vmax.f32 %v2528, 0.0
        %v2561 = vmax.f32 %v2529, 0.0
        %v2562 = vmax.f32 %v2530, 0.0
        %v2563 = vmax.f32 %v2531, 0.0
        %v2564 = vmax.f32 %v2532, 0.0
        %v2565 = vmax.f32 %v2533, 0.0
        %v2566 = vmax.f32 %v2534, 0.0
        %v2567 = vmax.f32 %v2535, 0.0
        %v2568 = vmax.f32 %v2536, 0.0
        %2569 = vst.msk [vmem:[#allocation3] sm:$0xff] %vm438, 0.0
        %2570 = vst.msk [vmem:[#allocation3 + $0x8] sm:$0xff] %vm438, 0.0
        %2571 = vst.msk [vmem:[#allocation3 + $0x10] sm:$0x3] %vm441, 0.0
        %s2572 = scalar_lea.vmem [#allocation3], 408
        %2573 = vst.msk [vmem:[%s2572] sm:$0xff] %vm438, 0.0
        %2574 = vst.msk [vmem:[%s2572 + $0x8] sm:$0xff] %vm438, 0.0
        %2575 = vst.msk [vmem:[%s2572 + $0x10] sm:$0x3] %vm441, 0.0
        %2576 = vst.msk [vmem:[#allocation3] sm:$0x1] %vm447, 0.0
        %2577 = vst.msk [vmem:[#allocation3 + $0x18] sm:$0x1] %vm447, 0.0
        %2578 = vst.msk [vmem:[#allocation3 + $0x30] sm:$0x1] %vm447, 0.0
        %2579 = vst.msk [vmem:[#allocation3 + $0x48] sm:$0x1] %vm447, 0.0
        %2580 = vst.msk [vmem:[#allocation3 + $0x60] sm:$0x1] %vm447, 0.0
        %2581 = vst.msk [vmem:[#allocation3 + $0x78] sm:$0x1] %vm447, 0.0
        %2582 = vst.msk [vmem:[#allocation3 + $0x90] sm:$0x1] %vm447, 0.0
        %2583 = vst.msk [vmem:[#allocation3 + $0xa8] sm:$0x1] %vm447, 0.0
        %2584 = vst.msk [vmem:[#allocation3 + $0xc0] sm:$0x1] %vm447, 0.0
        %2585 = vst.msk [vmem:[#allocation3 + $0xd8] sm:$0x1] %vm447, 0.0
        %2586 = vst.msk [vmem:[#allocation3 + $0xf0] sm:$0x1] %vm447, 0.0
        %2587 = vst.msk [vmem:[#allocation3 + $0x108] sm:$0x1] %vm447, 0.0
        %2588 = vst.msk [vmem:[#allocation3 + $0x120] sm:$0x1] %vm447, 0.0
        %2589 = vst.msk [vmem:[#allocation3 + $0x138] sm:$0x1] %vm447, 0.0
        %2590 = vst.msk [vmem:[#allocation3 + $0x150] sm:$0x1] %vm447, 0.0
        %2591 = vst.msk [vmem:[#allocation3 + $0x168] sm:$0x1] %vm447, 0.0
        %2592 = vst.msk [vmem:[#allocation3 + $0x180] sm:$0x1] %vm447, 0.0
        %2593 = vst.msk [vmem:[#allocation3 + $0x198] sm:$0x1] %vm447, 0.0
        %2594 = vst.msk [vmem:[#allocation3 + $0x11] sm:$0x1] %vm447, 0.0
        %2595 = vst.msk [vmem:[#allocation3 + $0x29] sm:$0x1] %vm447, 0.0
        %2596 = vst.msk [vmem:[#allocation3 + $0x41] sm:$0x1] %vm447, 0.0
        %2597 = vst.msk [vmem:[#allocation3 + $0x59] sm:$0x1] %vm447, 0.0
        %2598 = vst.msk [vmem:[#allocation3 + $0x71] sm:$0x1] %vm447, 0.0
        %2599 = vst.msk [vmem:[#allocation3 + $0x89] sm:$0x1] %vm447, 0.0
        %2600 = vst.msk [vmem:[#allocation3 + $0xa1] sm:$0x1] %vm447, 0.0
        %2601 = vst.msk [vmem:[#allocation3 + $0xb9] sm:$0x1] %vm447, 0.0
        %2602 = vst.msk [vmem:[#allocation3 + $0xd1] sm:$0x1] %vm447, 0.0
        %2603 = vst.msk [vmem:[#allocation3 + $0xe9] sm:$0x1] %vm447, 0.0
        %2604 = vst.msk [vmem:[#allocation3 + $0x101] sm:$0x1] %vm447, 0.0
        %2605 = vst.msk [vmem:[#allocation3 + $0x119] sm:$0x1] %vm447, 0.0
        %2606 = vst.msk [vmem:[#allocation3 + $0x131] sm:$0x1] %vm447, 0.0
        %2607 = vst.msk [vmem:[#allocation3 + $0x149] sm:$0x1] %vm447, 0.0
        %2608 = vst.msk [vmem:[#allocation3 + $0x161] sm:$0x1] %vm447, 0.0
        %2609 = vst.msk [vmem:[#allocation3 + $0x179] sm:$0x1] %vm447, 0.0
        %2610 = vst.msk [vmem:[#allocation3 + $0x191] sm:$0x1] %vm447, 0.0
        %2611 = vst.msk [vmem:[#allocation3 + $0x1a9] sm:$0x1] %vm447, 0.0
        %s2612 = scalar_lea.vmem [#allocation3], 24
        %2613 = vst.msk [vmem:[%s2612 + $0x1] sm:$0xff] %vm438, %v2537
        %2614 = vst.msk [vmem:[%s2612 + $0x9] sm:$0xff] %vm438, %v2538
        %2615 = vst.msk [vmem:[%s2612 + $0x19] sm:$0xff] %vm438, %v2539
        %2616 = vst.msk [vmem:[%s2612 + $0x21] sm:$0xff] %vm438, %v2540
        %2617 = vst.msk [vmem:[%s2612 + $0x31] sm:$0xff] %vm438, %v2541
        %2618 = vst.msk [vmem:[%s2612 + $0x39] sm:$0xff] %vm438, %v2542
        %2619 = vst.msk [vmem:[%s2612 + $0x49] sm:$0xff] %vm438, %v2543
        %2620 = vst.msk [vmem:[%s2612 + $0x51] sm:$0xff] %vm438, %v2544
        %2621 = vst.msk [vmem:[%s2612 + $0x61] sm:$0xff] %vm438, %v2545
        %2622 = vst.msk [vmem:[%s2612 + $0x69] sm:$0xff] %vm438, %v2546
        %2623 = vst.msk [vmem:[%s2612 + $0x79] sm:$0xff] %vm438, %v2547
        %2624 = vst.msk [vmem:[%s2612 + $0x81] sm:$0xff] %vm438, %v2548
        %2625 = vst.msk [vmem:[%s2612 + $0x91] sm:$0xff] %vm438, %v2549
        %2626 = vst.msk [vmem:[%s2612 + $0x99] sm:$0xff] %vm438, %v2550
        %2627 = vst.msk [vmem:[%s2612 + $0xa9] sm:$0xff] %vm438, %v2551
        %2628 = vst.msk [vmem:[%s2612 + $0xb1] sm:$0xff] %vm438, %v2552
        %2629 = vst.msk [vmem:[%s2612 + $0xc1] sm:$0xff] %vm438, %v2553
        %2630 = vst.msk [vmem:[%s2612 + $0xc9] sm:$0xff] %vm438, %v2554
        %2631 = vst.msk [vmem:[%s2612 + $0xd9] sm:$0xff] %vm438, %v2555
        %2632 = vst.msk [vmem:[%s2612 + $0xe1] sm:$0xff] %vm438, %v2556
        %2633 = vst.msk [vmem:[%s2612 + $0xf1] sm:$0xff] %vm438, %v2557
        %2634 = vst.msk [vmem:[%s2612 + $0xf9] sm:$0xff] %vm438, %v2558
        %2635 = vst.msk [vmem:[%s2612 + $0x109] sm:$0xff] %vm438, %v2559
        %2636 = vst.msk [vmem:[%s2612 + $0x111] sm:$0xff] %vm438, %v2560
        %2637 = vst.msk [vmem:[%s2612 + $0x121] sm:$0xff] %vm438, %v2561
        %2638 = vst.msk [vmem:[%s2612 + $0x129] sm:$0xff] %vm438, %v2562
        %2639 = vst.msk [vmem:[%s2612 + $0x139] sm:$0xff] %vm438, %v2563
        %2640 = vst.msk [vmem:[%s2612 + $0x141] sm:$0xff] %vm438, %v2564
        %2641 = vst.msk [vmem:[%s2612 + $0x151] sm:$0xff] %vm438, %v2565
        %2642 = vst.msk [vmem:[%s2612 + $0x159] sm:$0xff] %vm438, %v2566
        %2643 = vst.msk [vmem:[%s2612 + $0x169] sm:$0xff] %vm438, %v2567
        %2644 = vst.msk [vmem:[%s2612 + $0x171] sm:$0xff] %vm438, %v2568
        %v2645 = vld [vmem:[#allocation3] sm:$0xff]
        %v2646 = vld [vmem:[#allocation3 + $0x8] sm:$0xff]
        %v2647 = vld [vmem:[#allocation3 + $0x18] sm:$0xff]
        %v2648 = vld [vmem:[#allocation3 + $0x20] sm:$0xff]
        %v2649 = vld [vmem:[#allocation3 + $0x30] sm:$0xff]
        %v2650 = vld [vmem:[#allocation3 + $0x38] sm:$0xff]
        %v2651 = vld [vmem:[#allocation3 + $0x48] sm:$0xff]
        %v2652 = vld [vmem:[#allocation3 + $0x50] sm:$0xff]
        %v2653 = vld [vmem:[#allocation3 + $0x60] sm:$0xff]
        %v2654 = vld [vmem:[#allocation3 + $0x68] sm:$0xff]
        %v2655 = vld [vmem:[#allocation3 + $0x78] sm:$0xff]
        %v2656 = vld [vmem:[#allocation3 + $0x80] sm:$0xff]
        %v2657 = vld [vmem:[#allocation3 + $0x90] sm:$0xff]
        %v2658 = vld [vmem:[#allocation3 + $0x98] sm:$0xff]
        %v2659 = vld [vmem:[#allocation3 + $0xa8] sm:$0xff]
        %v2660 = vld [vmem:[#allocation3 + $0xb0] sm:$0xff]
        %v2661 = vld [vmem:[#allocation3 + $0xc0] sm:$0xff]
        %v2662 = vld [vmem:[#allocation3 + $0xc8] sm:$0xff]
        %v2663 = vld [vmem:[#allocation3 + $0xd8] sm:$0xff]
        %v2664 = vld [vmem:[#allocation3 + $0xe0] sm:$0xff]
        %v2665 = vld [vmem:[#allocation3 + $0xf0] sm:$0xff]
        %v2666 = vld [vmem:[#allocation3 + $0xf8] sm:$0xff]
        %v2667 = vld [vmem:[#allocation3 + $0x108] sm:$0xff]
        %v2668 = vld [vmem:[#allocation3 + $0x110] sm:$0xff]
        %v2669 = vld [vmem:[#allocation3 + $0x120] sm:$0xff]
        %v2670 = vld [vmem:[#allocation3 + $0x128] sm:$0xff]
        %v2671 = vld [vmem:[#allocation3 + $0x138] sm:$0xff]
        %v2672 = vld [vmem:[#allocation3 + $0x140] sm:$0xff]
        %v2673 = vld [vmem:[#allocation3 + $0x150] sm:$0xff]
        %v2674 = vld [vmem:[#allocation3 + $0x158] sm:$0xff]
        %v2675 = vld [vmem:[#allocation3 + $0x168] sm:$0xff]
        %v2676 = vld [vmem:[#allocation3 + $0x170] sm:$0xff]
        %v2677 = vld [vmem:[#allocation3 + $0x1] sm:$0xff]
        %v2678 = vld [vmem:[#allocation3 + $0x9] sm:$0xff]
        %v2679 = vld [vmem:[#allocation3 + $0x19] sm:$0xff]
        %v2680 = vld [vmem:[#allocation3 + $0x21] sm:$0xff]
        %v2681 = vld [vmem:[#allocation3 + $0x31] sm:$0xff]
        %v2682 = vld [vmem:[#allocation3 + $0x39] sm:$0xff]
        %v2683 = vld [vmem:[#allocation3 + $0x49] sm:$0xff]
        %v2684 = vld [vmem:[#allocation3 + $0x51] sm:$0xff]
        %v2685 = vld [vmem:[#allocation3 + $0x61] sm:$0xff]
        %v2686 = vld [vmem:[#allocation3 + $0x69] sm:$0xff]
        %v2687 = vld [vmem:[#allocation3 + $0x79] sm:$0xff]
        %v2688 = vld [vmem:[#allocation3 + $0x81] sm:$0xff]
        %v2689 = vld [vmem:[#allocation3 + $0x91] sm:$0xff]
        %v2690 = vld [vmem:[#allocation3 + $0x99] sm:$0xff]
        %v2691 = vld [vmem:[#allocation3 + $0xa9] sm:$0xff]
        %v2692 = vld [vmem:[#allocation3 + $0xb1] sm:$0xff]
        %v2693 = vld [vmem:[#allocation3 + $0xc1] sm:$0xff]
        %v2694 = vld [vmem:[#allocation3 + $0xc9] sm:$0xff]
        %v2695 = vld [vmem:[#allocation3 + $0xd9] sm:$0xff]
        %v2696 = vld [vmem:[#allocation3 + $0xe1] sm:$0xff]
        %v2697 = vld [vmem:[#allocation3 + $0xf1] sm:$0xff]
        %v2698 = vld [vmem:[#allocation3 + $0xf9] sm:$0xff]
        %v2699 = vld [vmem:[#allocation3 + $0x109] sm:$0xff]
        %v2700 = vld [vmem:[#allocation3 + $0x111] sm:$0xff]
        %v2701 = vld [vmem:[#allocation3 + $0x121] sm:$0xff]
        %v2702 = vld [vmem:[#allocation3 + $0x129] sm:$0xff]
        %v2703 = vld [vmem:[#allocation3 + $0x139] sm:$0xff]
        %v2704 = vld [vmem:[#allocation3 + $0x141] sm:$0xff]
        %v2705 = vld [vmem:[#allocation3 + $0x151] sm:$0xff]
        %v2706 = vld [vmem:[#allocation3 + $0x159] sm:$0xff]
        %v2707 = vld [vmem:[#allocation3 + $0x169] sm:$0xff]
        %v2708 = vld [vmem:[#allocation3 + $0x171] sm:$0xff]
        %v2709 = vld [vmem:[#allocation3 + $0x2] sm:$0xff]
        %v2710 = vld [vmem:[#allocation3 + $0xa] sm:$0xff]
        %v2711 = vld [vmem:[#allocation3 + $0x1a] sm:$0xff]
        %v2712 = vld [vmem:[#allocation3 + $0x22] sm:$0xff]
        %v2713 = vld [vmem:[#allocation3 + $0x32] sm:$0xff]
        %v2714 = vld [vmem:[#allocation3 + $0x3a] sm:$0xff]
        %v2715 = vld [vmem:[#allocation3 + $0x4a] sm:$0xff]
        %v2716 = vld [vmem:[#allocation3 + $0x52] sm:$0xff]
        %v2717 = vld [vmem:[#allocation3 + $0x62] sm:$0xff]
        %v2718 = vld [vmem:[#allocation3 + $0x6a] sm:$0xff]
        %v2719 = vld [vmem:[#allocation3 + $0x7a] sm:$0xff]
        %v2720 = vld [vmem:[#allocation3 + $0x82] sm:$0xff]
        %v2721 = vld [vmem:[#allocation3 + $0x92] sm:$0xff]
        %v2722 = vld [vmem:[#allocation3 + $0x9a] sm:$0xff]
        %v2723 = vld [vmem:[#allocation3 + $0xaa] sm:$0xff]
        %v2724 = vld [vmem:[#allocation3 + $0xb2] sm:$0xff]
        %v2725 = vld [vmem:[#allocation3 + $0xc2] sm:$0xff]
        %v2726 = vld [vmem:[#allocation3 + $0xca] sm:$0xff]
        %v2727 = vld [vmem:[#allocation3 + $0xda] sm:$0xff]
        %v2728 = vld [vmem:[#allocation3 + $0xe2] sm:$0xff]
        %v2729 = vld [vmem:[#allocation3 + $0xf2] sm:$0xff]
        %v2730 = vld [vmem:[#allocation3 + $0xfa] sm:$0xff]
        %v2731 = vld [vmem:[#allocation3 + $0x10a] sm:$0xff]
        %v2732 = vld [vmem:[#allocation3 + $0x112] sm:$0xff]
        %v2733 = vld [vmem:[#allocation3 + $0x122] sm:$0xff]
        %v2734 = vld [vmem:[#allocation3 + $0x12a] sm:$0xff]
        %v2735 = vld [vmem:[#allocation3 + $0x13a] sm:$0xff]
        %v2736 = vld [vmem:[#allocation3 + $0x142] sm:$0xff]
        %v2737 = vld [vmem:[#allocation3 + $0x152] sm:$0xff]
        %v2738 = vld [vmem:[#allocation3 + $0x15a] sm:$0xff]
        %v2739 = vld [vmem:[#allocation3 + $0x16a] sm:$0xff]
        %v2740 = vld [vmem:[#allocation3 + $0x172] sm:$0xff]
        %2773 = vrot.lane.b32.xlu0 %v2677, 32
        %v2774 = vpop.permute.xlu0 %2773
        %2775 = vrot.lane.b32.xlu0 %v2678, 32
        %v2776 = vpop.permute.xlu0 %2775
        %2777 = vrot.lane.b32.xlu0 %v2679, 32
        %v2778 = vpop.permute.xlu0 %2777
        %2779 = vrot.lane.b32.xlu0 %v2680, 32
        %v2780 = vpop.permute.xlu0 %2779
        %2781 = vrot.lane.b32.xlu0 %v2681, 32
        %v2782 = vpop.permute.xlu0 %2781
        %2783 = vrot.lane.b32.xlu0 %v2682, 32
        %v2784 = vpop.permute.xlu0 %2783
        %2785 = vrot.lane.b32.xlu0 %v2683, 32
        %v2786 = vpop.permute.xlu0 %2785
        %2787 = vrot.lane.b32.xlu0 %v2684, 32
        %v2788 = vpop.permute.xlu0 %2787
        %2789 = vrot.lane.b32.xlu0 %v2685, 32
        %v2790 = vpop.permute.xlu0 %2789
        %2791 = vrot.lane.b32.xlu0 %v2686, 32
        %v2792 = vpop.permute.xlu0 %2791
        %2793 = vrot.lane.b32.xlu0 %v2687, 32
        %v2794 = vpop.permute.xlu0 %2793
        %2795 = vrot.lane.b32.xlu0 %v2688, 32
        %v2796 = vpop.permute.xlu0 %2795
        %2797 = vrot.lane.b32.xlu0 %v2689, 32
        %v2798 = vpop.permute.xlu0 %2797
        %2799 = vrot.lane.b32.xlu0 %v2690, 32
        %v2800 = vpop.permute.xlu0 %2799
        %2801 = vrot.lane.b32.xlu0 %v2691, 32
        %v2802 = vpop.permute.xlu0 %2801
        %2803 = vrot.lane.b32.xlu0 %v2692, 32
        %v2804 = vpop.permute.xlu0 %2803
        %2805 = vrot.lane.b32.xlu0 %v2693, 32
        %v2806 = vpop.permute.xlu0 %2805
        %2807 = vrot.lane.b32.xlu0 %v2694, 32
        %v2808 = vpop.permute.xlu0 %2807
        %2809 = vrot.lane.b32.xlu0 %v2695, 32
        %v2810 = vpop.permute.xlu0 %2809
        %2811 = vrot.lane.b32.xlu0 %v2696, 32
        %v2812 = vpop.permute.xlu0 %2811
        %2813 = vrot.lane.b32.xlu0 %v2697, 32
        %v2814 = vpop.permute.xlu0 %2813
        %2815 = vrot.lane.b32.xlu0 %v2698, 32
        %v2816 = vpop.permute.xlu0 %2815
        %2817 = vrot.lane.b32.xlu0 %v2699, 32
        %v2818 = vpop.permute.xlu0 %2817
        %2819 = vrot.lane.b32.xlu0 %v2700, 32
        %v2820 = vpop.permute.xlu0 %2819
        %2821 = vrot.lane.b32.xlu0 %v2701, 32
        %v2822 = vpop.permute.xlu0 %2821
        %2823 = vrot.lane.b32.xlu0 %v2702, 32
        %v2824 = vpop.permute.xlu0 %2823
        %2825 = vrot.lane.b32.xlu0 %v2703, 32
        %v2826 = vpop.permute.xlu0 %2825
        %2827 = vrot.lane.b32.xlu0 %v2704, 32
        %v2828 = vpop.permute.xlu0 %2827
        %2829 = vrot.lane.b32.xlu0 %v2705, 32
        %v2830 = vpop.permute.xlu0 %2829
        %2831 = vrot.lane.b32.xlu0 %v2706, 32
        %v2832 = vpop.permute.xlu0 %2831
        %2833 = vrot.lane.b32.xlu0 %v2707, 32
        %v2834 = vpop.permute.xlu0 %2833
        %2835 = vrot.lane.b32.xlu0 %v2708, 32
        %v2836 = vpop.permute.xlu0 %2835
        %2901 = vrot.lane.b32.xlu0 %v2709, 64
        %v2902 = vpop.permute.xlu0 %2901
        %2903 = vrot.lane.b32.xlu0 %v2710, 64
        %v2904 = vpop.permute.xlu0 %2903
        %2905 = vrot.lane.b32.xlu0 %v2711, 64
        %v2906 = vpop.permute.xlu0 %2905
        %2907 = vrot.lane.b32.xlu0 %v2712, 64
        %v2908 = vpop.permute.xlu0 %2907
        %2909 = vrot.lane.b32.xlu0 %v2713, 64
        %v2910 = vpop.permute.xlu0 %2909
        %2911 = vrot.lane.b32.xlu0 %v2714, 64
        %v2912 = vpop.permute.xlu0 %2911
        %2913 = vrot.lane.b32.xlu0 %v2715, 64
        %v2914 = vpop.permute.xlu0 %2913
        %2915 = vrot.lane.b32.xlu0 %v2716, 64
        %v2916 = vpop.permute.xlu0 %2915
        %2917 = vrot.lane.b32.xlu0 %v2717, 64
        %v2918 = vpop.permute.xlu0 %2917
        %2919 = vrot.lane.b32.xlu0 %v2718, 64
        %v2920 = vpop.permute.xlu0 %2919
        %2921 = vrot.lane.b32.xlu0 %v2719, 64
        %v2922 = vpop.permute.xlu0 %2921
        %2923 = vrot.lane.b32.xlu0 %v2720, 64
        %v2924 = vpop.permute.xlu0 %2923
        %2925 = vrot.lane.b32.xlu0 %v2721, 64
        %v2926 = vpop.permute.xlu0 %2925
        %2927 = vrot.lane.b32.xlu0 %v2722, 64
        %v2928 = vpop.permute.xlu0 %2927
        %2929 = vrot.lane.b32.xlu0 %v2723, 64
        %v2930 = vpop.permute.xlu0 %2929
        %2931 = vrot.lane.b32.xlu0 %v2724, 64
        %v2932 = vpop.permute.xlu0 %2931
        %2933 = vrot.lane.b32.xlu0 %v2725, 64
        %v2934 = vpop.permute.xlu0 %2933
        %2935 = vrot.lane.b32.xlu0 %v2726, 64
        %v2936 = vpop.permute.xlu0 %2935
        %2937 = vrot.lane.b32.xlu0 %v2727, 64
        %v2938 = vpop.permute.xlu0 %2937
        %2939 = vrot.lane.b32.xlu0 %v2728, 64
        %v2940 = vpop.permute.xlu0 %2939
        %2941 = vrot.lane.b32.xlu0 %v2729, 64
        %v2942 = vpop.permute.xlu0 %2941
        %2943 = vrot.lane.b32.xlu0 %v2730, 64
        %v2944 = vpop.permute.xlu0 %2943
        %2945 = vrot.lane.b32.xlu0 %v2731, 64
        %v2946 = vpop.permute.xlu0 %2945
        %2947 = vrot.lane.b32.xlu0 %v2732, 64
        %v2948 = vpop.permute.xlu0 %2947
        %2949 = vrot.lane.b32.xlu0 %v2733, 64
        %v2950 = vpop.permute.xlu0 %2949
        %2951 = vrot.lane.b32.xlu0 %v2734, 64
        %v2952 = vpop.permute.xlu0 %2951
        %2953 = vrot.lane.b32.xlu0 %v2735, 64
        %v2954 = vpop.permute.xlu0 %2953
        %2955 = vrot.lane.b32.xlu0 %v2736, 64
        %v2956 = vpop.permute.xlu0 %2955
        %2957 = vrot.lane.b32.xlu0 %v2737, 64
        %v2958 = vpop.permute.xlu0 %2957
        %2959 = vrot.lane.b32.xlu0 %v2738, 64
        %v2960 = vpop.permute.xlu0 %2959
        %2961 = vrot.lane.b32.xlu0 %v2739, 64
        %v2962 = vpop.permute.xlu0 %2961
        %2963 = vrot.lane.b32.xlu0 %v2740, 64
        %v2964 = vpop.permute.xlu0 %2963
        %v2997 = vsel %vm438, %v2645, %v2774
        %v2998 = vsel %vm438, %v2646, %v2776
        %v2999 = vsel %vm438, %v2647, %v2778
        %v3000 = vsel %vm438, %v2648, %v2780
        %v3001 = vsel %vm438, %v2649, %v2782
        %v3002 = vsel %vm438, %v2650, %v2784
        %v3003 = vsel %vm438, %v2651, %v2786
        %v3004 = vsel %vm438, %v2652, %v2788
        %v3005 = vsel %vm438, %v2653, %v2790
        %v3006 = vsel %vm438, %v2654, %v2792
        %v3007 = vsel %vm438, %v2655, %v2794
        %v3008 = vsel %vm438, %v2656, %v2796
        %v3009 = vsel %vm438, %v2657, %v2798
        %v3010 = vsel %vm438, %v2658, %v2800
        %v3011 = vsel %vm438, %v2659, %v2802
        %v3012 = vsel %vm438, %v2660, %v2804
        %v3013 = vsel %vm438, %v2661, %v2806
        %v3014 = vsel %vm438, %v2662, %v2808
        %v3015 = vsel %vm438, %v2663, %v2810
        %v3016 = vsel %vm438, %v2664, %v2812
        %v3017 = vsel %vm438, %v2665, %v2814
        %v3018 = vsel %vm438, %v2666, %v2816
        %v3019 = vsel %vm438, %v2667, %v2818
        %v3020 = vsel %vm438, %v2668, %v2820
        %v3021 = vsel %vm438, %v2669, %v2822
        %v3022 = vsel %vm438, %v2670, %v2824
        %v3023 = vsel %vm438, %v2671, %v2826
        %v3024 = vsel %vm438, %v2672, %v2828
        %v3025 = vsel %vm438, %v2673, %v2830
        %v3026 = vsel %vm438, %v2674, %v2832
        %v3027 = vsel %vm438, %v2675, %v2834
        %v3028 = vsel %vm438, %v2676, %v2836
        %v3029 = vsel %vm901, %v2997, %v2902
        %v3030 = vsel %vm901, %v2998, %v2904
        %v3031 = vsel %vm901, %v2999, %v2906
        %v3032 = vsel %vm901, %v3000, %v2908
        %v3033 = vsel %vm901, %v3001, %v2910
        %v3034 = vsel %vm901, %v3002, %v2912
        %v3035 = vsel %vm901, %v3003, %v2914
        %v3036 = vsel %vm901, %v3004, %v2916
        %v3037 = vsel %vm901, %v3005, %v2918
        %v3038 = vsel %vm901, %v3006, %v2920
        %v3039 = vsel %vm901, %v3007, %v2922
        %v3040 = vsel %vm901, %v3008, %v2924
        %v3041 = vsel %vm901, %v3009, %v2926
        %v3042 = vsel %vm901, %v3010, %v2928
        %v3043 = vsel %vm901, %v3011, %v2930
        %v3044 = vsel %vm901, %v3012, %v2932
        %v3045 = vsel %vm901, %v3013, %v2934
        %v3046 = vsel %vm901, %v3014, %v2936
        %v3047 = vsel %vm901, %v3015, %v2938
        %v3048 = vsel %vm901, %v3016, %v2940
        %v3049 = vsel %vm901, %v3017, %v2942
        %v3050 = vsel %vm901, %v3018, %v2944
        %v3051 = vsel %vm901, %v3019, %v2946
        %v3052 = vsel %vm901, %v3020, %v2948
        %v3053 = vsel %vm901, %v3021, %v2950
        %v3054 = vsel %vm901, %v3022, %v2952
        %v3055 = vsel %vm901, %v3023, %v2954
        %v3056 = vsel %vm901, %v3024, %v2956
        %v3057 = vsel %vm901, %v3025, %v2958
        %v3058 = vsel %vm901, %v3026, %v2960
        %v3059 = vsel %vm901, %v3027, %v2962
        %v3060 = vsel %vm901, %v3028, %v2964
        %v3061 = vld [vmem:[#allocation9] sm:$0xff]
        %v3062 = vld [vmem:[#allocation9 + $0x8] sm:$0xff]
        %v3063 = vld [vmem:[#allocation9 + $0x10] sm:$0xff]
        %v3064 = vld [vmem:[#allocation9 + $0x18] sm:$0xff]
        %v3065 = vld [vmem:[#allocation9 + $0x20] sm:$0xff]
        %v3066 = vld [vmem:[#allocation9 + $0x28] sm:$0xff]
        %v3067 = vld [vmem:[#allocation9 + $0x30] sm:$0xff]
        %v3068 = vld [vmem:[#allocation9 + $0x38] sm:$0xff]
        %v3069 = vld [vmem:[#allocation9 + $0x40] sm:$0xff]
        %v3070 = vld [vmem:[#allocation9 + $0x48] sm:$0xff]
        %v3071 = vld [vmem:[#allocation9 + $0x50] sm:$0xff]
        %v3072 = vld [vmem:[#allocation9 + $0x58] sm:$0xff]
        %v3073 = vld [vmem:[%s2612] sm:$0xff]
        %v3074 = vld [vmem:[%s2612 + $0x8] sm:$0xff]
        %v3075 = vld [vmem:[%s2612 + $0x18] sm:$0xff]
        %v3076 = vld [vmem:[%s2612 + $0x20] sm:$0xff]
        %v3077 = vld [vmem:[%s2612 + $0x30] sm:$0xff]
        %v3078 = vld [vmem:[%s2612 + $0x38] sm:$0xff]
        %v3079 = vld [vmem:[%s2612 + $0x48] sm:$0xff]
        %v3080 = vld [vmem:[%s2612 + $0x50] sm:$0xff]
        %v3081 = vld [vmem:[%s2612 + $0x60] sm:$0xff]
        %v3082 = vld [vmem:[%s2612 + $0x68] sm:$0xff]
        %v3083 = vld [vmem:[%s2612 + $0x78] sm:$0xff]
        %v3084 = vld [vmem:[%s2612 + $0x80] sm:$0xff]
        %v3085 = vld [vmem:[%s2612 + $0x90] sm:$0xff]
        %v3086 = vld [vmem:[%s2612 + $0x98] sm:$0xff]
        %v3087 = vld [vmem:[%s2612 + $0xa8] sm:$0xff]
        %v3088 = vld [vmem:[%s2612 + $0xb0] sm:$0xff]
        %v3089 = vld [vmem:[%s2612 + $0xc0] sm:$0xff]
        %v3090 = vld [vmem:[%s2612 + $0xc8] sm:$0xff]
        %v3091 = vld [vmem:[%s2612 + $0xd8] sm:$0xff]
        %v3092 = vld [vmem:[%s2612 + $0xe0] sm:$0xff]
        %v3093 = vld [vmem:[%s2612 + $0xf0] sm:$0xff]
        %v3094 = vld [vmem:[%s2612 + $0xf8] sm:$0xff]
        %v3095 = vld [vmem:[%s2612 + $0x108] sm:$0xff]
        %v3096 = vld [vmem:[%s2612 + $0x110] sm:$0xff]
        %v3097 = vld [vmem:[%s2612 + $0x120] sm:$0xff]
        %v3098 = vld [vmem:[%s2612 + $0x128] sm:$0xff]
        %v3099 = vld [vmem:[%s2612 + $0x138] sm:$0xff]
        %v3100 = vld [vmem:[%s2612 + $0x140] sm:$0xff]
        %v3101 = vld [vmem:[%s2612 + $0x150] sm:$0xff]
        %v3102 = vld [vmem:[%s2612 + $0x158] sm:$0xff]
        %v3103 = vld [vmem:[%s2612 + $0x168] sm:$0xff]
        %v3104 = vld [vmem:[%s2612 + $0x170] sm:$0xff]
        %v3105 = vld [vmem:[%s2612 + $0x1] sm:$0xff]
        %v3106 = vld [vmem:[%s2612 + $0x9] sm:$0xff]
        %v3107 = vld [vmem:[%s2612 + $0x19] sm:$0xff]
        %v3108 = vld [vmem:[%s2612 + $0x21] sm:$0xff]
        %v3109 = vld [vmem:[%s2612 + $0x31] sm:$0xff]
        %v3110 = vld [vmem:[%s2612 + $0x39] sm:$0xff]
        %v3111 = vld [vmem:[%s2612 + $0x49] sm:$0xff]
        %v3112 = vld [vmem:[%s2612 + $0x51] sm:$0xff]
        %v3113 = vld [vmem:[%s2612 + $0x61] sm:$0xff]
        %v3114 = vld [vmem:[%s2612 + $0x69] sm:$0xff]
        %v3115 = vld [vmem:[%s2612 + $0x79] sm:$0xff]
        %v3116 = vld [vmem:[%s2612 + $0x81] sm:$0xff]
        %v3117 = vld [vmem:[%s2612 + $0x91] sm:$0xff]
        %v3118 = vld [vmem:[%s2612 + $0x99] sm:$0xff]
        %v3119 = vld [vmem:[%s2612 + $0xa9] sm:$0xff]
        %v3120 = vld [vmem:[%s2612 + $0xb1] sm:$0xff]
        %v3121 = vld [vmem:[%s2612 + $0xc1] sm:$0xff]
        %v3122 = vld [vmem:[%s2612 + $0xc9] sm:$0xff]
        %v3123 = vld [vmem:[%s2612 + $0xd9] sm:$0xff]
        %v3124 = vld [vmem:[%s2612 + $0xe1] sm:$0xff]
        %v3125 = vld [vmem:[%s2612 + $0xf1] sm:$0xff]
        %v3126 = vld [vmem:[%s2612 + $0xf9] sm:$0xff]
        %v3127 = vld [vmem:[%s2612 + $0x109] sm:$0xff]
        %v3128 = vld [vmem:[%s2612 + $0x111] sm:$0xff]
        %v3129 = vld [vmem:[%s2612 + $0x121] sm:$0xff]
        %v3130 = vld [vmem:[%s2612 + $0x129] sm:$0xff]
        %v3131 = vld [vmem:[%s2612 + $0x139] sm:$0xff]
        %v3132 = vld [vmem:[%s2612 + $0x141] sm:$0xff]
        %v3133 = vld [vmem:[%s2612 + $0x151] sm:$0xff]
        %v3134 = vld [vmem:[%s2612 + $0x159] sm:$0xff]
        %v3135 = vld [vmem:[%s2612 + $0x169] sm:$0xff]
        %v3136 = vld [vmem:[%s2612 + $0x171] sm:$0xff]
        %v3137 = vld [vmem:[%s2612 + $0x2] sm:$0xff]
        %v3138 = vld [vmem:[%s2612 + $0xa] sm:$0xff]
        %v3139 = vld [vmem:[%s2612 + $0x1a] sm:$0xff]
        %v3140 = vld [vmem:[%s2612 + $0x22] sm:$0xff]
        %v3141 = vld [vmem:[%s2612 + $0x32] sm:$0xff]
        %v3142 = vld [vmem:[%s2612 + $0x3a] sm:$0xff]
        %v3143 = vld [vmem:[%s2612 + $0x4a] sm:$0xff]
        %v3144 = vld [vmem:[%s2612 + $0x52] sm:$0xff]
        %v3145 = vld [vmem:[%s2612 + $0x62] sm:$0xff]
        %v3146 = vld [vmem:[%s2612 + $0x6a] sm:$0xff]
        %v3147 = vld [vmem:[%s2612 + $0x7a] sm:$0xff]
        %v3148 = vld [vmem:[%s2612 + $0x82] sm:$0xff]
        %v3149 = vld [vmem:[%s2612 + $0x92] sm:$0xff]
        %v3150 = vld [vmem:[%s2612 + $0x9a] sm:$0xff]
        %v3151 = vld [vmem:[%s2612 + $0xaa] sm:$0xff]
        %v3152 = vld [vmem:[%s2612 + $0xb2] sm:$0xff]
        %v3153 = vld [vmem:[%s2612 + $0xc2] sm:$0xff]
        %v3154 = vld [vmem:[%s2612 + $0xca] sm:$0xff]
        %v3155 = vld [vmem:[%s2612 + $0xda] sm:$0xff]
        %v3156 = vld [vmem:[%s2612 + $0xe2] sm:$0xff]
        %v3157 = vld [vmem:[%s2612 + $0xf2] sm:$0xff]
        %v3158 = vld [vmem:[%s2612 + $0xfa] sm:$0xff]
        %v3159 = vld [vmem:[%s2612 + $0x10a] sm:$0xff]
        %v3160 = vld [vmem:[%s2612 + $0x112] sm:$0xff]
        %v3161 = vld [vmem:[%s2612 + $0x122] sm:$0xff]
        %v3162 = vld [vmem:[%s2612 + $0x12a] sm:$0xff]
        %v3163 = vld [vmem:[%s2612 + $0x13a] sm:$0xff]
        %v3164 = vld [vmem:[%s2612 + $0x142] sm:$0xff]
        %v3165 = vld [vmem:[%s2612 + $0x152] sm:$0xff]
        %v3166 = vld [vmem:[%s2612 + $0x15a] sm:$0xff]
        %v3167 = vld [vmem:[%s2612 + $0x16a] sm:$0xff]
        %v3168 = vld [vmem:[%s2612 + $0x172] sm:$0xff]
        %3201 = vrot.lane.b32.xlu0 %v3105, 32
        %v3202 = vpop.permute.xlu0 %3201
        %3203 = vrot.lane.b32.xlu0 %v3106, 32
        %v3204 = vpop.permute.xlu0 %3203
        %3205 = vrot.lane.b32.xlu0 %v3107, 32
        %v3206 = vpop.permute.xlu0 %3205
        %3207 = vrot.lane.b32.xlu0 %v3108, 32
        %v3208 = vpop.permute.xlu0 %3207
        %3209 = vrot.lane.b32.xlu0 %v3109, 32
        %v3210 = vpop.permute.xlu0 %3209
        %3211 = vrot.lane.b32.xlu0 %v3110, 32
        %v3212 = vpop.permute.xlu0 %3211
        %3213 = vrot.lane.b32.xlu0 %v3111, 32
        %v3214 = vpop.permute.xlu0 %3213
        %3215 = vrot.lane.b32.xlu0 %v3112, 32
        %v3216 = vpop.permute.xlu0 %3215
        %3217 = vrot.lane.b32.xlu0 %v3113, 32
        %v3218 = vpop.permute.xlu0 %3217
        %3219 = vrot.lane.b32.xlu0 %v3114, 32
        %v3220 = vpop.permute.xlu0 %3219
        %3221 = vrot.lane.b32.xlu0 %v3115, 32
        %v3222 = vpop.permute.xlu0 %3221
        %3223 = vrot.lane.b32.xlu0 %v3116, 32
        %v3224 = vpop.permute.xlu0 %3223
        %3225 = vrot.lane.b32.xlu0 %v3117, 32
        %v3226 = vpop.permute.xlu0 %3225
        %3227 = vrot.lane.b32.xlu0 %v3118, 32
        %v3228 = vpop.permute.xlu0 %3227
        %3229 = vrot.lane.b32.xlu0 %v3119, 32
        %v3230 = vpop.permute.xlu0 %3229
        %3231 = vrot.lane.b32.xlu0 %v3120, 32
        %v3232 = vpop.permute.xlu0 %3231
        %3233 = vrot.lane.b32.xlu0 %v3121, 32
        %v3234 = vpop.permute.xlu0 %3233
        %3235 = vrot.lane.b32.xlu0 %v3122, 32
        %v3236 = vpop.permute.xlu0 %3235
        %3237 = vrot.lane.b32.xlu0 %v3123, 32
        %v3238 = vpop.permute.xlu0 %3237
        %3239 = vrot.lane.b32.xlu0 %v3124, 32
        %v3240 = vpop.permute.xlu0 %3239
        %3241 = vrot.lane.b32.xlu0 %v3125, 32
        %v3242 = vpop.permute.xlu0 %3241
        %3243 = vrot.lane.b32.xlu0 %v3126, 32
        %v3244 = vpop.permute.xlu0 %3243
        %3245 = vrot.lane.b32.xlu0 %v3127, 32
        %v3246 = vpop.permute.xlu0 %3245
        %3247 = vrot.lane.b32.xlu0 %v3128, 32
        %v3248 = vpop.permute.xlu0 %3247
        %3249 = vrot.lane.b32.xlu0 %v3129, 32
        %v3250 = vpop.permute.xlu0 %3249
        %3251 = vrot.lane.b32.xlu0 %v3130, 32
        %v3252 = vpop.permute.xlu0 %3251
        %3253 = vrot.lane.b32.xlu0 %v3131, 32
        %v3254 = vpop.permute.xlu0 %3253
        %3255 = vrot.lane.b32.xlu0 %v3132, 32
        %v3256 = vpop.permute.xlu0 %3255
        %3257 = vrot.lane.b32.xlu0 %v3133, 32
        %v3258 = vpop.permute.xlu0 %3257
        %3259 = vrot.lane.b32.xlu0 %v3134, 32
        %v3260 = vpop.permute.xlu0 %3259
        %3261 = vrot.lane.b32.xlu0 %v3135, 32
        %v3262 = vpop.permute.xlu0 %3261
        %3263 = vrot.lane.b32.xlu0 %v3136, 32
        %v3264 = vpop.permute.xlu0 %3263
        %3329 = vrot.lane.b32.xlu0 %v3137, 64
        %v3330 = vpop.permute.xlu0 %3329
        %3331 = vrot.lane.b32.xlu0 %v3138, 64
        %v3332 = vpop.permute.xlu0 %3331
        %3333 = vrot.lane.b32.xlu0 %v3139, 64
        %v3334 = vpop.permute.xlu0 %3333
        %3335 = vrot.lane.b32.xlu0 %v3140, 64
        %v3336 = vpop.permute.xlu0 %3335
        %3337 = vrot.lane.b32.xlu0 %v3141, 64
        %v3338 = vpop.permute.xlu0 %3337
        %3339 = vrot.lane.b32.xlu0 %v3142, 64
        %v3340 = vpop.permute.xlu0 %3339
        %3341 = vrot.lane.b32.xlu0 %v3143, 64
        %v3342 = vpop.permute.xlu0 %3341
        %3343 = vrot.lane.b32.xlu0 %v3144, 64
        %v3344 = vpop.permute.xlu0 %3343
        %3345 = vrot.lane.b32.xlu0 %v3145, 64
        %v3346 = vpop.permute.xlu0 %3345
        %3347 = vrot.lane.b32.xlu0 %v3146, 64
        %v3348 = vpop.permute.xlu0 %3347
        %3349 = vrot.lane.b32.xlu0 %v3147, 64
        %v3350 = vpop.permute.xlu0 %3349
        %3351 = vrot.lane.b32.xlu0 %v3148, 64
        %v3352 = vpop.permute.xlu0 %3351
        %3353 = vrot.lane.b32.xlu0 %v3149, 64
        %v3354 = vpop.permute.xlu0 %3353
        %3355 = vrot.lane.b32.xlu0 %v3150, 64
        %v3356 = vpop.permute.xlu0 %3355
        %3357 = vrot.lane.b32.xlu0 %v3151, 64
        %v3358 = vpop.permute.xlu0 %3357
        %3359 = vrot.lane.b32.xlu0 %v3152, 64
        %v3360 = vpop.permute.xlu0 %3359
        %3361 = vrot.lane.b32.xlu0 %v3153, 64
        %v3362 = vpop.permute.xlu0 %3361
        %3363 = vrot.lane.b32.xlu0 %v3154, 64
        %v3364 = vpop.permute.xlu0 %3363
        %3365 = vrot.lane.b32.xlu0 %v3155, 64
        %v3366 = vpop.permute.xlu0 %3365
        %3367 = vrot.lane.b32.xlu0 %v3156, 64
        %v3368 = vpop.permute.xlu0 %3367
        %3369 = vrot.lane.b32.xlu0 %v3157, 64
        %v3370 = vpop.permute.xlu0 %3369
        %3371 = vrot.lane.b32.xlu0 %v3158, 64
        %v3372 = vpop.permute.xlu0 %3371
        %3373 = vrot.lane.b32.xlu0 %v3159, 64
        %v3374 = vpop.permute.xlu0 %3373
        %3375 = vrot.lane.b32.xlu0 %v3160, 64
        %v3376 = vpop.permute.xlu0 %3375
        %3377 = vrot.lane.b32.xlu0 %v3161, 64
        %v3378 = vpop.permute.xlu0 %3377
        %3379 = vrot.lane.b32.xlu0 %v3162, 64
        %v3380 = vpop.permute.xlu0 %3379
        %3381 = vrot.lane.b32.xlu0 %v3163, 64
        %v3382 = vpop.permute.xlu0 %3381
        %3383 = vrot.lane.b32.xlu0 %v3164, 64
        %v3384 = vpop.permute.xlu0 %3383
        %3385 = vrot.lane.b32.xlu0 %v3165, 64
        %v3386 = vpop.permute.xlu0 %3385
        %3387 = vrot.lane.b32.xlu0 %v3166, 64
        %v3388 = vpop.permute.xlu0 %3387
        %3389 = vrot.lane.b32.xlu0 %v3167, 64
        %v3390 = vpop.permute.xlu0 %3389
        %3391 = vrot.lane.b32.xlu0 %v3168, 64
        %v3392 = vpop.permute.xlu0 %3391
        %v3425 = vsel %vm438, %v3073, %v3202
        %v3426 = vsel %vm438, %v3074, %v3204
        %v3427 = vsel %vm438, %v3075, %v3206
        %v3428 = vsel %vm438, %v3076, %v3208
        %v3429 = vsel %vm438, %v3077, %v3210
        %v3430 = vsel %vm438, %v3078, %v3212
        %v3431 = vsel %vm438, %v3079, %v3214
        %v3432 = vsel %vm438, %v3080, %v3216
        %v3433 = vsel %vm438, %v3081, %v3218
        %v3434 = vsel %vm438, %v3082, %v3220
        %v3435 = vsel %vm438, %v3083, %v3222
        %v3436 = vsel %vm438, %v3084, %v3224
        %v3437 = vsel %vm438, %v3085, %v3226
        %v3438 = vsel %vm438, %v3086, %v3228
        %v3439 = vsel %vm438, %v3087, %v3230
        %v3440 = vsel %vm438, %v3088, %v3232
        %v3441 = vsel %vm438, %v3089, %v3234
        %v3442 = vsel %vm438, %v3090, %v3236
        %v3443 = vsel %vm438, %v3091, %v3238
        %v3444 = vsel %vm438, %v3092, %v3240
        %v3445 = vsel %vm438, %v3093, %v3242
        %v3446 = vsel %vm438, %v3094, %v3244
        %v3447 = vsel %vm438, %v3095, %v3246
        %v3448 = vsel %vm438, %v3096, %v3248
        %v3449 = vsel %vm438, %v3097, %v3250
        %v3450 = vsel %vm438, %v3098, %v3252
        %v3451 = vsel %vm438, %v3099, %v3254
        %v3452 = vsel %vm438, %v3100, %v3256
        %v3453 = vsel %vm438, %v3101, %v3258
        %v3454 = vsel %vm438, %v3102, %v3260
        %v3455 = vsel %vm438, %v3103, %v3262
        %v3456 = vsel %vm438, %v3104, %v3264
        %v3457 = vsel %vm901, %v3425, %v3330
        %v3458 = vsel %vm901, %v3426, %v3332
        %v3459 = vsel %vm901, %v3427, %v3334
        %v3460 = vsel %vm901, %v3428, %v3336
        %v3461 = vsel %vm901, %v3429, %v3338
        %v3462 = vsel %vm901, %v3430, %v3340
        %v3463 = vsel %vm901, %v3431, %v3342
        %v3464 = vsel %vm901, %v3432, %v3344
        %v3465 = vsel %vm901, %v3433, %v3346
        %v3466 = vsel %vm901, %v3434, %v3348
        %v3467 = vsel %vm901, %v3435, %v3350
        %v3468 = vsel %vm901, %v3436, %v3352
        %v3469 = vsel %vm901, %v3437, %v3354
        %v3470 = vsel %vm901, %v3438, %v3356
        %v3471 = vsel %vm901, %v3439, %v3358
        %v3472 = vsel %vm901, %v3440, %v3360
        %v3473 = vsel %vm901, %v3441, %v3362
        %v3474 = vsel %vm901, %v3442, %v3364
        %v3475 = vsel %vm901, %v3443, %v3366
        %v3476 = vsel %vm901, %v3444, %v3368
        %v3477 = vsel %vm901, %v3445, %v3370
        %v3478 = vsel %vm901, %v3446, %v3372
        %v3479 = vsel %vm901, %v3447, %v3374
        %v3480 = vsel %vm901, %v3448, %v3376
        %v3481 = vsel %vm901, %v3449, %v3378
        %v3482 = vsel %vm901, %v3450, %v3380
        %v3483 = vsel %vm901, %v3451, %v3382
        %v3484 = vsel %vm901, %v3452, %v3384
        %v3485 = vsel %vm901, %v3453, %v3386
        %v3486 = vsel %vm901, %v3454, %v3388
        %v3487 = vsel %vm901, %v3455, %v3390
        %v3488 = vsel %vm901, %v3456, %v3392
        %s3489 = scalar_lea.vmem [#allocation9], 96
        %v3490 = vld [vmem:[%s3489] sm:$0xff]
        %v3491 = vld [vmem:[%s3489 + $0x8] sm:$0xff]
        %v3492 = vld [vmem:[%s3489 + $0x10] sm:$0xff]
        %v3493 = vld [vmem:[%s3489 + $0x18] sm:$0xff]
        %v3494 = vld [vmem:[%s3489 + $0x20] sm:$0xff]
        %v3495 = vld [vmem:[%s3489 + $0x28] sm:$0xff]
        %v3496 = vld [vmem:[%s3489 + $0x30] sm:$0xff]
        %v3497 = vld [vmem:[%s3489 + $0x38] sm:$0xff]
        %v3498 = vld [vmem:[%s3489 + $0x40] sm:$0xff]
        %v3499 = vld [vmem:[%s3489 + $0x48] sm:$0xff]
        %v3500 = vld [vmem:[%s3489 + $0x50] sm:$0xff]
        %v3501 = vld [vmem:[%s3489 + $0x58] sm:$0xff]
        %v3503 = vsel %vm1375, %v3457, 0
        %v3506 = vsel %vm1375, %v3458, 0
        %v3509 = vsel %vm1375, %v3459, 0
        %v3512 = vsel %vm1375, %v3460, 0
        %v3515 = vsel %vm1375, %v3461, 0
        %v3518 = vsel %vm1375, %v3462, 0
        %v3521 = vsel %vm1375, %v3463, 0
        %v3524 = vsel %vm1375, %v3464, 0
        %v3527 = vsel %vm1375, %v3465, 0
        %v3530 = vsel %vm1375, %v3466, 0
        %v3533 = vsel %vm1375, %v3467, 0
        %v3536 = vsel %vm1375, %v3468, 0
        %v3539 = vsel %vm1375, %v3469, 0
        %v3542 = vsel %vm1375, %v3470, 0
        %v3545 = vsel %vm1375, %v3471, 0
        %v3548 = vsel %vm1375, %v3472, 0
        %v3551 = vsel %vm1375, %v3473, 0
        %v3554 = vsel %vm1375, %v3474, 0
        %v3557 = vsel %vm1375, %v3475, 0
        %v3560 = vsel %vm1375, %v3476, 0
        %v3563 = vsel %vm1375, %v3477, 0
        %v3566 = vsel %vm1375, %v3478, 0
        %v3569 = vsel %vm1375, %v3479, 0
        %v3572 = vsel %vm1375, %v3480, 0
        %v3575 = vsel %vm1375, %v3481, 0
        %v3578 = vsel %vm1375, %v3482, 0
        %v3581 = vsel %vm1375, %v3483, 0
        %v3584 = vsel %vm1375, %v3484, 0
        %v3587 = vsel %vm1375, %v3485, 0
        %v3590 = vsel %vm1375, %v3486, 0
        %v3593 = vsel %vm1375, %v3487, 0
        %v3596 = vsel %vm1375, %v3488, 0
        %3598 = vmatpush.msra.mxu0 0.0
        %3599 = vmatpush.msra.mxu0 0.0
        %3600 = vmatpush.msra.mxu0 0.0
        %3601 = vmatpush.msra.mxu0 0.0
        %3602 = vmatpush.msra.mxu0 %v3501
        %3603 = vmatpush.msra.mxu0 %v3500
        %3604 = vmatpush.msra.mxu0 %v3499
        %3605 = vmatpush.msra.mxu0 %v3498
        %3606 = vmatpush.msra.mxu0 %v3497
        %3607 = vmatpush.msra.mxu0 %v3496
        %3608 = vmatpush.msra.mxu0 %v3495
        %3609 = vmatpush.msra.mxu0 %v3494
        %3610 = vmatpush.msra.mxu0 %v3493
        %3611 = vmatpush.msra.mxu0 %v3492
        %3612 = vmatpush.msra.mxu0 %v3491
        %3613 = vmatpush.msra.mxu0 %v3490
        %3614 = vmatmul.f32.gmra.mxu0 %v3503
        %v3615 = vpop.f32.mrf.mxu0
        %v3616 = vadd.f32 0.0, %v3615
        %3617 = vmatmul.f32.gmra.mxu0 %v3506
        %v3618 = vpop.f32.mrf.mxu0
        %v3619 = vadd.f32 0.0, %v3618
        %3620 = vmatmul.f32.gmra.mxu0 %v3509
        %v3621 = vpop.f32.mrf.mxu0
        %v3622 = vadd.f32 0.0, %v3621
        %3623 = vmatmul.f32.gmra.mxu0 %v3512
        %v3624 = vpop.f32.mrf.mxu0
        %v3625 = vadd.f32 0.0, %v3624
        %3626 = vmatmul.f32.gmra.mxu0 %v3515
        %v3627 = vpop.f32.mrf.mxu0
        %v3628 = vadd.f32 0.0, %v3627
        %3629 = vmatmul.f32.gmra.mxu0 %v3518
        %v3630 = vpop.f32.mrf.mxu0
        %v3631 = vadd.f32 0.0, %v3630
        %3632 = vmatmul.f32.gmra.mxu0 %v3521
        %v3633 = vpop.f32.mrf.mxu0
        %v3634 = vadd.f32 0.0, %v3633
        %3635 = vmatmul.f32.gmra.mxu0 %v3524
        %v3636 = vpop.f32.mrf.mxu0
        %v3637 = vadd.f32 0.0, %v3636
        %3638 = vmatmul.f32.gmra.mxu0 %v3527
        %v3639 = vpop.f32.mrf.mxu0
        %v3640 = vadd.f32 0.0, %v3639
        %3641 = vmatmul.f32.gmra.mxu0 %v3530
        %v3642 = vpop.f32.mrf.mxu0
        %v3643 = vadd.f32 0.0, %v3642
        %3644 = vmatmul.f32.gmra.mxu0 %v3533
        %v3645 = vpop.f32.mrf.mxu0
        %v3646 = vadd.f32 0.0, %v3645
        %3647 = vmatmul.f32.gmra.mxu0 %v3536
        %v3648 = vpop.f32.mrf.mxu0
        %v3649 = vadd.f32 0.0, %v3648
        %3650 = vmatmul.f32.gmra.mxu0 %v3539
        %v3651 = vpop.f32.mrf.mxu0
        %v3652 = vadd.f32 0.0, %v3651
        %3653 = vmatmul.f32.gmra.mxu0 %v3542
        %v3654 = vpop.f32.mrf.mxu0
        %v3655 = vadd.f32 0.0, %v3654
        %3656 = vmatmul.f32.gmra.mxu0 %v3545
        %v3657 = vpop.f32.mrf.mxu0
        %v3658 = vadd.f32 0.0, %v3657
        %3659 = vmatmul.f32.gmra.mxu0 %v3548
        %v3660 = vpop.f32.mrf.mxu0
        %v3661 = vadd.f32 0.0, %v3660
        %3662 = vmatmul.f32.gmra.mxu0 %v3551
        %v3663 = vpop.f32.mrf.mxu0
        %v3664 = vadd.f32 0.0, %v3663
        %3665 = vmatmul.f32.gmra.mxu0 %v3554
        %v3666 = vpop.f32.mrf.mxu0
        %v3667 = vadd.f32 0.0, %v3666
        %3668 = vmatmul.f32.gmra.mxu0 %v3557
        %v3669 = vpop.f32.mrf.mxu0
        %v3670 = vadd.f32 0.0, %v3669
        %3671 = vmatmul.f32.gmra.mxu0 %v3560
        %v3672 = vpop.f32.mrf.mxu0
        %v3673 = vadd.f32 0.0, %v3672
        %3674 = vmatmul.f32.gmra.mxu0 %v3563
        %v3675 = vpop.f32.mrf.mxu0
        %v3676 = vadd.f32 0.0, %v3675
        %3677 = vmatmul.f32.gmra.mxu0 %v3566
        %v3678 = vpop.f32.mrf.mxu0
        %v3679 = vadd.f32 0.0, %v3678
        %3680 = vmatmul.f32.gmra.mxu0 %v3569
        %v3681 = vpop.f32.mrf.mxu0
        %v3682 = vadd.f32 0.0, %v3681
        %3683 = vmatmul.f32.gmra.mxu0 %v3572
        %v3684 = vpop.f32.mrf.mxu0
        %v3685 = vadd.f32 0.0, %v3684
        %3686 = vmatmul.f32.gmra.mxu0 %v3575
        %v3687 = vpop.f32.mrf.mxu0
        %v3688 = vadd.f32 0.0, %v3687
        %3689 = vmatmul.f32.gmra.mxu0 %v3578
        %v3690 = vpop.f32.mrf.mxu0
        %v3691 = vadd.f32 0.0, %v3690
        %3692 = vmatmul.f32.gmra.mxu0 %v3581
        %v3693 = vpop.f32.mrf.mxu0
        %v3694 = vadd.f32 0.0, %v3693
        %3695 = vmatmul.f32.gmra.mxu0 %v3584
        %v3696 = vpop.f32.mrf.mxu0
        %v3697 = vadd.f32 0.0, %v3696
        %3698 = vmatmul.f32.gmra.mxu0 %v3587
        %v3699 = vpop.f32.mrf.mxu0
        %v3700 = vadd.f32 0.0, %v3699
        %3701 = vmatmul.f32.gmra.mxu0 %v3590
        %v3702 = vpop.f32.mrf.mxu0
        %v3703 = vadd.f32 0.0, %v3702
        %3704 = vmatmul.f32.gmra.mxu0 %v3593
        %v3705 = vpop.f32.mrf.mxu0
        %v3706 = vadd.f32 0.0, %v3705
        %3707 = vmatmul.f32.gmra.mxu0 %v3596
        %v3708 = vpop.f32.mrf.mxu0
        %v3709 = vadd.f32 0.0, %v3708
        %3710 = vdwg.mxu0
        %v3712 = vsel %vm1375, %v3029, 0
        %v3715 = vsel %vm1375, %v3030, 0
        %v3718 = vsel %vm1375, %v3031, 0
        %v3721 = vsel %vm1375, %v3032, 0
        %v3724 = vsel %vm1375, %v3033, 0
        %v3727 = vsel %vm1375, %v3034, 0
        %v3730 = vsel %vm1375, %v3035, 0
        %v3733 = vsel %vm1375, %v3036, 0
        %v3736 = vsel %vm1375, %v3037, 0
        %v3739 = vsel %vm1375, %v3038, 0
        %v3742 = vsel %vm1375, %v3039, 0
        %v3745 = vsel %vm1375, %v3040, 0
        %v3748 = vsel %vm1375, %v3041, 0
        %v3751 = vsel %vm1375, %v3042, 0
        %v3754 = vsel %vm1375, %v3043, 0
        %v3757 = vsel %vm1375, %v3044, 0
        %v3760 = vsel %vm1375, %v3045, 0
        %v3763 = vsel %vm1375, %v3046, 0
        %v3766 = vsel %vm1375, %v3047, 0
        %v3769 = vsel %vm1375, %v3048, 0
        %v3772 = vsel %vm1375, %v3049, 0
        %v3775 = vsel %vm1375, %v3050, 0
        %v3778 = vsel %vm1375, %v3051, 0
        %v3781 = vsel %vm1375, %v3052, 0
        %v3784 = vsel %vm1375, %v3053, 0
        %v3787 = vsel %vm1375, %v3054, 0
        %v3790 = vsel %vm1375, %v3055, 0
        %v3793 = vsel %vm1375, %v3056, 0
        %v3796 = vsel %vm1375, %v3057, 0
        %v3799 = vsel %vm1375, %v3058, 0
        %v3802 = vsel %vm1375, %v3059, 0
        %v3805 = vsel %vm1375, %v3060, 0
        %3807 = vmatpush.msra.mxu0 0.0
        %3808 = vmatpush.msra.mxu0 0.0
        %3809 = vmatpush.msra.mxu0 0.0
        %3810 = vmatpush.msra.mxu0 0.0
        %3811 = vmatpush.msra.mxu0 %v3072
        %3812 = vmatpush.msra.mxu0 %v3071
        %3813 = vmatpush.msra.mxu0 %v3070
        %3814 = vmatpush.msra.mxu0 %v3069
        %3815 = vmatpush.msra.mxu0 %v3068
        %3816 = vmatpush.msra.mxu0 %v3067
        %3817 = vmatpush.msra.mxu0 %v3066
        %3818 = vmatpush.msra.mxu0 %v3065
        %3819 = vmatpush.msra.mxu0 %v3064
        %3820 = vmatpush.msra.mxu0 %v3063
        %3821 = vmatpush.msra.mxu0 %v3062
        %3822 = vmatpush.msra.mxu0 %v3061
        %3823 = vmatmul.f32.gmra.mxu0 %v3712
        %v3824 = vpop.f32.mrf.mxu0
        %v3825 = vadd.f32 %v3616, %v3824
        %3826 = vmatmul.f32.gmra.mxu0 %v3715
        %v3827 = vpop.f32.mrf.mxu0
        %v3828 = vadd.f32 %v3619, %v3827
        %3829 = vmatmul.f32.gmra.mxu0 %v3718
        %v3830 = vpop.f32.mrf.mxu0
        %v3831 = vadd.f32 %v3622, %v3830
        %3832 = vmatmul.f32.gmra.mxu0 %v3721
        %v3833 = vpop.f32.mrf.mxu0
        %v3834 = vadd.f32 %v3625, %v3833
        %3835 = vmatmul.f32.gmra.mxu0 %v3724
        %v3836 = vpop.f32.mrf.mxu0
        %v3837 = vadd.f32 %v3628, %v3836
        %3838 = vmatmul.f32.gmra.mxu0 %v3727
        %v3839 = vpop.f32.mrf.mxu0
        %v3840 = vadd.f32 %v3631, %v3839
        %3841 = vmatmul.f32.gmra.mxu0 %v3730
        %v3842 = vpop.f32.mrf.mxu0
        %v3843 = vadd.f32 %v3634, %v3842
        %3844 = vmatmul.f32.gmra.mxu0 %v3733
        %v3845 = vpop.f32.mrf.mxu0
        %v3846 = vadd.f32 %v3637, %v3845
        %3847 = vmatmul.f32.gmra.mxu0 %v3736
        %v3848 = vpop.f32.mrf.mxu0
        %v3849 = vadd.f32 %v3640, %v3848
        %3850 = vmatmul.f32.gmra.mxu0 %v3739
        %v3851 = vpop.f32.mrf.mxu0
        %v3852 = vadd.f32 %v3643, %v3851
        %3853 = vmatmul.f32.gmra.mxu0 %v3742
        %v3854 = vpop.f32.mrf.mxu0
        %v3855 = vadd.f32 %v3646, %v3854
        %3856 = vmatmul.f32.gmra.mxu0 %v3745
        %v3857 = vpop.f32.mrf.mxu0
        %v3858 = vadd.f32 %v3649, %v3857
        %3859 = vmatmul.f32.gmra.mxu0 %v3748
        %v3860 = vpop.f32.mrf.mxu0
        %v3861 = vadd.f32 %v3652, %v3860
        %3862 = vmatmul.f32.gmra.mxu0 %v3751
        %v3863 = vpop.f32.mrf.mxu0
        %v3864 = vadd.f32 %v3655, %v3863
        %3865 = vmatmul.f32.gmra.mxu0 %v3754
        %v3866 = vpop.f32.mrf.mxu0
        %v3867 = vadd.f32 %v3658, %v3866
        %3868 = vmatmul.f32.gmra.mxu0 %v3757
        %v3869 = vpop.f32.mrf.mxu0
        %v3870 = vadd.f32 %v3661, %v3869
        %3871 = vmatmul.f32.gmra.mxu0 %v3760
        %v3872 = vpop.f32.mrf.mxu0
        %v3873 = vadd.f32 %v3664, %v3872
        %3874 = vmatmul.f32.gmra.mxu0 %v3763
        %v3875 = vpop.f32.mrf.mxu0
        %v3876 = vadd.f32 %v3667, %v3875
        %3877 = vmatmul.f32.gmra.mxu0 %v3766
        %v3878 = vpop.f32.mrf.mxu0
        %v3879 = vadd.f32 %v3670, %v3878
        %3880 = vmatmul.f32.gmra.mxu0 %v3769
        %v3881 = vpop.f32.mrf.mxu0
        %v3882 = vadd.f32 %v3673, %v3881
        %3883 = vmatmul.f32.gmra.mxu0 %v3772
        %v3884 = vpop.f32.mrf.mxu0
        %v3885 = vadd.f32 %v3676, %v3884
        %3886 = vmatmul.f32.gmra.mxu0 %v3775
        %v3887 = vpop.f32.mrf.mxu0
        %v3888 = vadd.f32 %v3679, %v3887
        %3889 = vmatmul.f32.gmra.mxu0 %v3778
        %v3890 = vpop.f32.mrf.mxu0
        %v3891 = vadd.f32 %v3682, %v3890
        %3892 = vmatmul.f32.gmra.mxu0 %v3781
        %v3893 = vpop.f32.mrf.mxu0
        %v3894 = vadd.f32 %v3685, %v3893
        %3895 = vmatmul.f32.gmra.mxu0 %v3784
        %v3896 = vpop.f32.mrf.mxu0
        %v3897 = vadd.f32 %v3688, %v3896
        %3898 = vmatmul.f32.gmra.mxu0 %v3787
        %v3899 = vpop.f32.mrf.mxu0
        %v3900 = vadd.f32 %v3691, %v3899
        %3901 = vmatmul.f32.gmra.mxu0 %v3790
        %v3902 = vpop.f32.mrf.mxu0
        %v3903 = vadd.f32 %v3694, %v3902
        %3904 = vmatmul.f32.gmra.mxu0 %v3793
        %v3905 = vpop.f32.mrf.mxu0
        %v3906 = vadd.f32 %v3697, %v3905
        %3907 = vmatmul.f32.gmra.mxu0 %v3796
        %v3908 = vpop.f32.mrf.mxu0
        %v3909 = vadd.f32 %v3700, %v3908
        %3910 = vmatmul.f32.gmra.mxu0 %v3799
        %v3911 = vpop.f32.mrf.mxu0
        %v3912 = vadd.f32 %v3703, %v3911
        %3913 = vmatmul.f32.gmra.mxu0 %v3802
        %v3914 = vpop.f32.mrf.mxu0
        %v3915 = vadd.f32 %v3706, %v3914
        %3916 = vmatmul.f32.gmra.mxu0 %v3805
        %v3917 = vpop.f32.mrf.mxu0
        %v3918 = vadd.f32 %v3709, %v3917
        %3919 = vdwg.mxu0
        %s3920 = scalar_lea.vmem [#allocation3], 48
        %v3921 = vld [vmem:[%s3920] sm:$0xff]
        %v3922 = vld [vmem:[%s3920 + $0x8] sm:$0xff]
        %v3923 = vld [vmem:[%s3920 + $0x18] sm:$0xff]
        %v3924 = vld [vmem:[%s3920 + $0x20] sm:$0xff]
        %v3925 = vld [vmem:[%s3920 + $0x30] sm:$0xff]
        %v3926 = vld [vmem:[%s3920 + $0x38] sm:$0xff]
        %v3927 = vld [vmem:[%s3920 + $0x48] sm:$0xff]
        %v3928 = vld [vmem:[%s3920 + $0x50] sm:$0xff]
        %v3929 = vld [vmem:[%s3920 + $0x60] sm:$0xff]
        %v3930 = vld [vmem:[%s3920 + $0x68] sm:$0xff]
        %v3931 = vld [vmem:[%s3920 + $0x78] sm:$0xff]
        %v3932 = vld [vmem:[%s3920 + $0x80] sm:$0xff]
        %v3933 = vld [vmem:[%s3920 + $0x90] sm:$0xff]
        %v3934 = vld [vmem:[%s3920 + $0x98] sm:$0xff]
        %v3935 = vld [vmem:[%s3920 + $0xa8] sm:$0xff]
        %v3936 = vld [vmem:[%s3920 + $0xb0] sm:$0xff]
        %v3937 = vld [vmem:[%s3920 + $0xc0] sm:$0xff]
        %v3938 = vld [vmem:[%s3920 + $0xc8] sm:$0xff]
        %v3939 = vld [vmem:[%s3920 + $0xd8] sm:$0xff]
        %v3940 = vld [vmem:[%s3920 + $0xe0] sm:$0xff]
        %v3941 = vld [vmem:[%s3920 + $0xf0] sm:$0xff]
        %v3942 = vld [vmem:[%s3920 + $0xf8] sm:$0xff]
        %v3943 = vld [vmem:[%s3920 + $0x108] sm:$0xff]
        %v3944 = vld [vmem:[%s3920 + $0x110] sm:$0xff]
        %v3945 = vld [vmem:[%s3920 + $0x120] sm:$0xff]
        %v3946 = vld [vmem:[%s3920 + $0x128] sm:$0xff]
        %v3947 = vld [vmem:[%s3920 + $0x138] sm:$0xff]
        %v3948 = vld [vmem:[%s3920 + $0x140] sm:$0xff]
        %v3949 = vld [vmem:[%s3920 + $0x150] sm:$0xff]
        %v3950 = vld [vmem:[%s3920 + $0x158] sm:$0xff]
        %v3951 = vld [vmem:[%s3920 + $0x168] sm:$0xff]
        %v3952 = vld [vmem:[%s3920 + $0x170] sm:$0xff]
        %v3953 = vld [vmem:[%s3920 + $0x1] sm:$0xff]
        %v3954 = vld [vmem:[%s3920 + $0x9] sm:$0xff]
        %v3955 = vld [vmem:[%s3920 + $0x19] sm:$0xff]
        %v3956 = vld [vmem:[%s3920 + $0x21] sm:$0xff]
        %v3957 = vld [vmem:[%s3920 + $0x31] sm:$0xff]
        %v3958 = vld [vmem:[%s3920 + $0x39] sm:$0xff]
        %v3959 = vld [vmem:[%s3920 + $0x49] sm:$0xff]
        %v3960 = vld [vmem:[%s3920 + $0x51] sm:$0xff]
        %v3961 = vld [vmem:[%s3920 + $0x61] sm:$0xff]
        %v3962 = vld [vmem:[%s3920 + $0x69] sm:$0xff]
        %v3963 = vld [vmem:[%s3920 + $0x79] sm:$0xff]
        %v3964 = vld [vmem:[%s3920 + $0x81] sm:$0xff]
        %v3965 = vld [vmem:[%s3920 + $0x91] sm:$0xff]
        %v3966 = vld [vmem:[%s3920 + $0x99] sm:$0xff]
        %v3967 = vld [vmem:[%s3920 + $0xa9] sm:$0xff]
        %v3968 = vld [vmem:[%s3920 + $0xb1] sm:$0xff]
        %v3969 = vld [vmem:[%s3920 + $0xc1] sm:$0xff]
        %v3970 = vld [vmem:[%s3920 + $0xc9] sm:$0xff]
        %v3971 = vld [vmem:[%s3920 + $0xd9] sm:$0xff]
        %v3972 = vld [vmem:[%s3920 + $0xe1] sm:$0xff]
        %v3973 = vld [vmem:[%s3920 + $0xf1] sm:$0xff]
        %v3974 = vld [vmem:[%s3920 + $0xf9] sm:$0xff]
        %v3975 = vld [vmem:[%s3920 + $0x109] sm:$0xff]
        %v3976 = vld [vmem:[%s3920 + $0x111] sm:$0xff]
        %v3977 = vld [vmem:[%s3920 + $0x121] sm:$0xff]
        %v3978 = vld [vmem:[%s3920 + $0x129] sm:$0xff]
        %v3979 = vld [vmem:[%s3920 + $0x139] sm:$0xff]
        %v3980 = vld [vmem:[%s3920 + $0x141] sm:$0xff]
        %v3981 = vld [vmem:[%s3920 + $0x151] sm:$0xff]
        %v3982 = vld [vmem:[%s3920 + $0x159] sm:$0xff]
        %v3983 = vld [vmem:[%s3920 + $0x169] sm:$0xff]
        %v3984 = vld [vmem:[%s3920 + $0x171] sm:$0xff]
        %v3985 = vld [vmem:[%s3920 + $0x2] sm:$0xff]
        %v3986 = vld [vmem:[%s3920 + $0xa] sm:$0xff]
        %v3987 = vld [vmem:[%s3920 + $0x1a] sm:$0xff]
        %v3988 = vld [vmem:[%s3920 + $0x22] sm:$0xff]
        %v3989 = vld [vmem:[%s3920 + $0x32] sm:$0xff]
        %v3990 = vld [vmem:[%s3920 + $0x3a] sm:$0xff]
        %v3991 = vld [vmem:[%s3920 + $0x4a] sm:$0xff]
        %v3992 = vld [vmem:[%s3920 + $0x52] sm:$0xff]
        %v3993 = vld [vmem:[%s3920 + $0x62] sm:$0xff]
        %v3994 = vld [vmem:[%s3920 + $0x6a] sm:$0xff]
        %v3995 = vld [vmem:[%s3920 + $0x7a] sm:$0xff]
        %v3996 = vld [vmem:[%s3920 + $0x82] sm:$0xff]
        %v3997 = vld [vmem:[%s3920 + $0x92] sm:$0xff]
        %v3998 = vld [vmem:[%s3920 + $0x9a] sm:$0xff]
        %v3999 = vld [vmem:[%s3920 + $0xaa] sm:$0xff]
        %v4000 = vld [vmem:[%s3920 + $0xb2] sm:$0xff]
        %v4001 = vld [vmem:[%s3920 + $0xc2] sm:$0xff]
        %v4002 = vld [vmem:[%s3920 + $0xca] sm:$0xff]
        %v4003 = vld [vmem:[%s3920 + $0xda] sm:$0xff]
        %v4004 = vld [vmem:[%s3920 + $0xe2] sm:$0xff]
        %v4005 = vld [vmem:[%s3920 + $0xf2] sm:$0xff]
        %v4006 = vld [vmem:[%s3920 + $0xfa] sm:$0xff]
        %v4007 = vld [vmem:[%s3920 + $0x10a] sm:$0xff]
        %v4008 = vld [vmem:[%s3920 + $0x112] sm:$0xff]
        %v4009 = vld [vmem:[%s3920 + $0x122] sm:$0xff]
        %v4010 = vld [vmem:[%s3920 + $0x12a] sm:$0xff]
        %v4011 = vld [vmem:[%s3920 + $0x13a] sm:$0xff]
        %v4012 = vld [vmem:[%s3920 + $0x142] sm:$0xff]
        %v4013 = vld [vmem:[%s3920 + $0x152] sm:$0xff]
        %v4014 = vld [vmem:[%s3920 + $0x15a] sm:$0xff]
        %v4015 = vld [vmem:[%s3920 + $0x16a] sm:$0xff]
        %v4016 = vld [vmem:[%s3920 + $0x172] sm:$0xff]
        %4049 = vrot.lane.b32.xlu0 %v3953, 32
        %v4050 = vpop.permute.xlu0 %4049
        %4051 = vrot.lane.b32.xlu0 %v3954, 32
        %v4052 = vpop.permute.xlu0 %4051
        %4053 = vrot.lane.b32.xlu0 %v3955, 32
        %v4054 = vpop.permute.xlu0 %4053
        %4055 = vrot.lane.b32.xlu0 %v3956, 32
        %v4056 = vpop.permute.xlu0 %4055
        %4057 = vrot.lane.b32.xlu0 %v3957, 32
        %v4058 = vpop.permute.xlu0 %4057
        %4059 = vrot.lane.b32.xlu0 %v3958, 32
        %v4060 = vpop.permute.xlu0 %4059
        %4061 = vrot.lane.b32.xlu0 %v3959, 32
        %v4062 = vpop.permute.xlu0 %4061
        %4063 = vrot.lane.b32.xlu0 %v3960, 32
        %v4064 = vpop.permute.xlu0 %4063
        %4065 = vrot.lane.b32.xlu0 %v3961, 32
        %v4066 = vpop.permute.xlu0 %4065
        %4067 = vrot.lane.b32.xlu0 %v3962, 32
        %v4068 = vpop.permute.xlu0 %4067
        %4069 = vrot.lane.b32.xlu0 %v3963, 32
        %v4070 = vpop.permute.xlu0 %4069
        %4071 = vrot.lane.b32.xlu0 %v3964, 32
        %v4072 = vpop.permute.xlu0 %4071
        %4073 = vrot.lane.b32.xlu0 %v3965, 32
        %v4074 = vpop.permute.xlu0 %4073
        %4075 = vrot.lane.b32.xlu0 %v3966, 32
        %v4076 = vpop.permute.xlu0 %4075
        %4077 = vrot.lane.b32.xlu0 %v3967, 32
        %v4078 = vpop.permute.xlu0 %4077
        %4079 = vrot.lane.b32.xlu0 %v3968, 32
        %v4080 = vpop.permute.xlu0 %4079
        %4081 = vrot.lane.b32.xlu0 %v3969, 32
        %v4082 = vpop.permute.xlu0 %4081
        %4083 = vrot.lane.b32.xlu0 %v3970, 32
        %v4084 = vpop.permute.xlu0 %4083
        %4085 = vrot.lane.b32.xlu0 %v3971, 32
        %v4086 = vpop.permute.xlu0 %4085
        %4087 = vrot.lane.b32.xlu0 %v3972, 32
        %v4088 = vpop.permute.xlu0 %4087
        %4089 = vrot.lane.b32.xlu0 %v3973, 32
        %v4090 = vpop.permute.xlu0 %4089
        %4091 = vrot.lane.b32.xlu0 %v3974, 32
        %v4092 = vpop.permute.xlu0 %4091
        %4093 = vrot.lane.b32.xlu0 %v3975, 32
        %v4094 = vpop.permute.xlu0 %4093
        %4095 = vrot.lane.b32.xlu0 %v3976, 32
        %v4096 = vpop.permute.xlu0 %4095
        %4097 = vrot.lane.b32.xlu0 %v3977, 32
        %v4098 = vpop.permute.xlu0 %4097
        %4099 = vrot.lane.b32.xlu0 %v3978, 32
        %v4100 = vpop.permute.xlu0 %4099
        %4101 = vrot.lane.b32.xlu0 %v3979, 32
        %v4102 = vpop.permute.xlu0 %4101
        %4103 = vrot.lane.b32.xlu0 %v3980, 32
        %v4104 = vpop.permute.xlu0 %4103
        %4105 = vrot.lane.b32.xlu0 %v3981, 32
        %v4106 = vpop.permute.xlu0 %4105
        %4107 = vrot.lane.b32.xlu0 %v3982, 32
        %v4108 = vpop.permute.xlu0 %4107
        %4109 = vrot.lane.b32.xlu0 %v3983, 32
        %v4110 = vpop.permute.xlu0 %4109
        %4111 = vrot.lane.b32.xlu0 %v3984, 32
        %v4112 = vpop.permute.xlu0 %4111
        %4177 = vrot.lane.b32.xlu0 %v3985, 64
        %v4178 = vpop.permute.xlu0 %4177
        %4179 = vrot.lane.b32.xlu0 %v3986, 64
        %v4180 = vpop.permute.xlu0 %4179
        %4181 = vrot.lane.b32.xlu0 %v3987, 64
        %v4182 = vpop.permute.xlu0 %4181
        %4183 = vrot.lane.b32.xlu0 %v3988, 64
        %v4184 = vpop.permute.xlu0 %4183
        %4185 = vrot.lane.b32.xlu0 %v3989, 64
        %v4186 = vpop.permute.xlu0 %4185
        %4187 = vrot.lane.b32.xlu0 %v3990, 64
        %v4188 = vpop.permute.xlu0 %4187
        %4189 = vrot.lane.b32.xlu0 %v3991, 64
        %v4190 = vpop.permute.xlu0 %4189
        %4191 = vrot.lane.b32.xlu0 %v3992, 64
        %v4192 = vpop.permute.xlu0 %4191
        %4193 = vrot.lane.b32.xlu0 %v3993, 64
        %v4194 = vpop.permute.xlu0 %4193
        %4195 = vrot.lane.b32.xlu0 %v3994, 64
        %v4196 = vpop.permute.xlu0 %4195
        %4197 = vrot.lane.b32.xlu0 %v3995, 64
        %v4198 = vpop.permute.xlu0 %4197
        %4199 = vrot.lane.b32.xlu0 %v3996, 64
        %v4200 = vpop.permute.xlu0 %4199
        %4201 = vrot.lane.b32.xlu0 %v3997, 64
        %v4202 = vpop.permute.xlu0 %4201
        %4203 = vrot.lane.b32.xlu0 %v3998, 64
        %v4204 = vpop.permute.xlu0 %4203
        %4205 = vrot.lane.b32.xlu0 %v3999, 64
        %v4206 = vpop.permute.xlu0 %4205
        %4207 = vrot.lane.b32.xlu0 %v4000, 64
        %v4208 = vpop.permute.xlu0 %4207
        %4209 = vrot.lane.b32.xlu0 %v4001, 64
        %v4210 = vpop.permute.xlu0 %4209
        %4211 = vrot.lane.b32.xlu0 %v4002, 64
        %v4212 = vpop.permute.xlu0 %4211
        %4213 = vrot.lane.b32.xlu0 %v4003, 64
        %v4214 = vpop.permute.xlu0 %4213
        %4215 = vrot.lane.b32.xlu0 %v4004, 64
        %v4216 = vpop.permute.xlu0 %4215
        %4217 = vrot.lane.b32.xlu0 %v4005, 64
        %v4218 = vpop.permute.xlu0 %4217
        %4219 = vrot.lane.b32.xlu0 %v4006, 64
        %v4220 = vpop.permute.xlu0 %4219
        %4221 = vrot.lane.b32.xlu0 %v4007, 64
        %v4222 = vpop.permute.xlu0 %4221
        %4223 = vrot.lane.b32.xlu0 %v4008, 64
        %v4224 = vpop.permute.xlu0 %4223
        %4225 = vrot.lane.b32.xlu0 %v4009, 64
        %v4226 = vpop.permute.xlu0 %4225
        %4227 = vrot.lane.b32.xlu0 %v4010, 64
        %v4228 = vpop.permute.xlu0 %4227
        %4229 = vrot.lane.b32.xlu0 %v4011, 64
        %v4230 = vpop.permute.xlu0 %4229
        %4231 = vrot.lane.b32.xlu0 %v4012, 64
        %v4232 = vpop.permute.xlu0 %4231
        %4233 = vrot.lane.b32.xlu0 %v4013, 64
        %v4234 = vpop.permute.xlu0 %4233
        %4235 = vrot.lane.b32.xlu0 %v4014, 64
        %v4236 = vpop.permute.xlu0 %4235
        %4237 = vrot.lane.b32.xlu0 %v4015, 64
        %v4238 = vpop.permute.xlu0 %4237
        %4239 = vrot.lane.b32.xlu0 %v4016, 64
        %v4240 = vpop.permute.xlu0 %4239
        %v4273 = vsel %vm438, %v3921, %v4050
        %v4274 = vsel %vm438, %v3922, %v4052
        %v4275 = vsel %vm438, %v3923, %v4054
        %v4276 = vsel %vm438, %v3924, %v4056
        %v4277 = vsel %vm438, %v3925, %v4058
        %v4278 = vsel %vm438, %v3926, %v4060
        %v4279 = vsel %vm438, %v3927, %v4062
        %v4280 = vsel %vm438, %v3928, %v4064
        %v4281 = vsel %vm438, %v3929, %v4066
        %v4282 = vsel %vm438, %v3930, %v4068
        %v4283 = vsel %vm438, %v3931, %v4070
        %v4284 = vsel %vm438, %v3932, %v4072
        %v4285 = vsel %vm438, %v3933, %v4074
        %v4286 = vsel %vm438, %v3934, %v4076
        %v4287 = vsel %vm438, %v3935, %v4078
        %v4288 = vsel %vm438, %v3936, %v4080
        %v4289 = vsel %vm438, %v3937, %v4082
        %v4290 = vsel %vm438, %v3938, %v4084
        %v4291 = vsel %vm438, %v3939, %v4086
        %v4292 = vsel %vm438, %v3940, %v4088
        %v4293 = vsel %vm438, %v3941, %v4090
        %v4294 = vsel %vm438, %v3942, %v4092
        %v4295 = vsel %vm438, %v3943, %v4094
        %v4296 = vsel %vm438, %v3944, %v4096
        %v4297 = vsel %vm438, %v3945, %v4098
        %v4298 = vsel %vm438, %v3946, %v4100
        %v4299 = vsel %vm438, %v3947, %v4102
        %v4300 = vsel %vm438, %v3948, %v4104
        %v4301 = vsel %vm438, %v3949, %v4106
        %v4302 = vsel %vm438, %v3950, %v4108
        %v4303 = vsel %vm438, %v3951, %v4110
        %v4304 = vsel %vm438, %v3952, %v4112
        %v4305 = vsel %vm901, %v4273, %v4178
        %v4306 = vsel %vm901, %v4274, %v4180
        %v4307 = vsel %vm901, %v4275, %v4182
        %v4308 = vsel %vm901, %v4276, %v4184
        %v4309 = vsel %vm901, %v4277, %v4186
        %v4310 = vsel %vm901, %v4278, %v4188
        %v4311 = vsel %vm901, %v4279, %v4190
        %v4312 = vsel %vm901, %v4280, %v4192
        %v4313 = vsel %vm901, %v4281, %v4194
        %v4314 = vsel %vm901, %v4282, %v4196
        %v4315 = vsel %vm901, %v4283, %v4198
        %v4316 = vsel %vm901, %v4284, %v4200
        %v4317 = vsel %vm901, %v4285, %v4202
        %v4318 = vsel %vm901, %v4286, %v4204
        %v4319 = vsel %vm901, %v4287, %v4206
        %v4320 = vsel %vm901, %v4288, %v4208
        %v4321 = vsel %vm901, %v4289, %v4210
        %v4322 = vsel %vm901, %v4290, %v4212
        %v4323 = vsel %vm901, %v4291, %v4214
        %v4324 = vsel %vm901, %v4292, %v4216
        %v4325 = vsel %vm901, %v4293, %v4218
        %v4326 = vsel %vm901, %v4294, %v4220
        %v4327 = vsel %vm901, %v4295, %v4222
        %v4328 = vsel %vm901, %v4296, %v4224
        %v4329 = vsel %vm901, %v4297, %v4226
        %v4330 = vsel %vm901, %v4298, %v4228
        %v4331 = vsel %vm901, %v4299, %v4230
        %v4332 = vsel %vm901, %v4300, %v4232
        %v4333 = vsel %vm901, %v4301, %v4234
        %v4334 = vsel %vm901, %v4302, %v4236
        %v4335 = vsel %vm901, %v4303, %v4238
        %v4336 = vsel %vm901, %v4304, %v4240
        %s4337 = scalar_lea.vmem [#allocation9], 192
        %v4338 = vld [vmem:[%s4337] sm:$0xff]
        %v4339 = vld [vmem:[%s4337 + $0x8] sm:$0xff]
        %v4340 = vld [vmem:[%s4337 + $0x10] sm:$0xff]
        %v4341 = vld [vmem:[%s4337 + $0x18] sm:$0xff]
        %v4342 = vld [vmem:[%s4337 + $0x20] sm:$0xff]
        %v4343 = vld [vmem:[%s4337 + $0x28] sm:$0xff]
        %v4344 = vld [vmem:[%s4337 + $0x30] sm:$0xff]
        %v4345 = vld [vmem:[%s4337 + $0x38] sm:$0xff]
        %v4346 = vld [vmem:[%s4337 + $0x40] sm:$0xff]
        %v4347 = vld [vmem:[%s4337 + $0x48] sm:$0xff]
        %v4348 = vld [vmem:[%s4337 + $0x50] sm:$0xff]
        %v4349 = vld [vmem:[%s4337 + $0x58] sm:$0xff]
        %v4351 = vsel %vm1375, %v4305, 0
        %v4354 = vsel %vm1375, %v4306, 0
        %v4357 = vsel %vm1375, %v4307, 0
        %v4360 = vsel %vm1375, %v4308, 0
        %v4363 = vsel %vm1375, %v4309, 0
        %v4366 = vsel %vm1375, %v4310, 0
        %v4369 = vsel %vm1375, %v4311, 0
        %v4372 = vsel %vm1375, %v4312, 0
        %v4375 = vsel %vm1375, %v4313, 0
        %v4378 = vsel %vm1375, %v4314, 0
        %v4381 = vsel %vm1375, %v4315, 0
        %v4384 = vsel %vm1375, %v4316, 0
        %v4387 = vsel %vm1375, %v4317, 0
        %v4390 = vsel %vm1375, %v4318, 0
        %v4393 = vsel %vm1375, %v4319, 0
        %v4396 = vsel %vm1375, %v4320, 0
        %v4399 = vsel %vm1375, %v4321, 0
        %v4402 = vsel %vm1375, %v4322, 0
        %v4405 = vsel %vm1375, %v4323, 0
        %v4408 = vsel %vm1375, %v4324, 0
        %v4411 = vsel %vm1375, %v4325, 0
        %v4414 = vsel %vm1375, %v4326, 0
        %v4417 = vsel %vm1375, %v4327, 0
        %v4420 = vsel %vm1375, %v4328, 0
        %v4423 = vsel %vm1375, %v4329, 0
        %v4426 = vsel %vm1375, %v4330, 0
        %v4429 = vsel %vm1375, %v4331, 0
        %v4432 = vsel %vm1375, %v4332, 0
        %v4435 = vsel %vm1375, %v4333, 0
        %v4438 = vsel %vm1375, %v4334, 0
        %v4441 = vsel %vm1375, %v4335, 0
        %v4444 = vsel %vm1375, %v4336, 0
        %4446 = vmatpush.msra.mxu0 0.0
        %4447 = vmatpush.msra.mxu0 0.0
        %4448 = vmatpush.msra.mxu0 0.0
        %4449 = vmatpush.msra.mxu0 0.0
        %4450 = vmatpush.msra.mxu0 %v4349
        %4451 = vmatpush.msra.mxu0 %v4348
        %4452 = vmatpush.msra.mxu0 %v4347
        %4453 = vmatpush.msra.mxu0 %v4346
        %4454 = vmatpush.msra.mxu0 %v4345
        %4455 = vmatpush.msra.mxu0 %v4344
        %4456 = vmatpush.msra.mxu0 %v4343
        %4457 = vmatpush.msra.mxu0 %v4342
        %4458 = vmatpush.msra.mxu0 %v4341
        %4459 = vmatpush.msra.mxu0 %v4340
        %4460 = vmatpush.msra.mxu0 %v4339
        %4461 = vmatpush.msra.mxu0 %v4338
        %4462 = vmatmul.f32.gmra.mxu0 %v4351
        %v4463 = vpop.f32.mrf.mxu0
        %v4464 = vadd.f32 0.0, %v4463
        %4465 = vmatmul.f32.gmra.mxu0 %v4354
        %v4466 = vpop.f32.mrf.mxu0
        %v4467 = vadd.f32 0.0, %v4466
        %4468 = vmatmul.f32.gmra.mxu0 %v4357
        %v4469 = vpop.f32.mrf.mxu0
        %v4470 = vadd.f32 0.0, %v4469
        %4471 = vmatmul.f32.gmra.mxu0 %v4360
        %v4472 = vpop.f32.mrf.mxu0
        %v4473 = vadd.f32 0.0, %v4472
        %4474 = vmatmul.f32.gmra.mxu0 %v4363
        %v4475 = vpop.f32.mrf.mxu0
        %v4476 = vadd.f32 0.0, %v4475
        %4477 = vmatmul.f32.gmra.mxu0 %v4366
        %v4478 = vpop.f32.mrf.mxu0
        %v4479 = vadd.f32 0.0, %v4478
        %4480 = vmatmul.f32.gmra.mxu0 %v4369
        %v4481 = vpop.f32.mrf.mxu0
        %v4482 = vadd.f32 0.0, %v4481
        %4483 = vmatmul.f32.gmra.mxu0 %v4372
        %v4484 = vpop.f32.mrf.mxu0
        %v4485 = vadd.f32 0.0, %v4484
        %4486 = vmatmul.f32.gmra.mxu0 %v4375
        %v4487 = vpop.f32.mrf.mxu0
        %v4488 = vadd.f32 0.0, %v4487
        %4489 = vmatmul.f32.gmra.mxu0 %v4378
        %v4490 = vpop.f32.mrf.mxu0
        %v4491 = vadd.f32 0.0, %v4490
        %4492 = vmatmul.f32.gmra.mxu0 %v4381
        %v4493 = vpop.f32.mrf.mxu0
        %v4494 = vadd.f32 0.0, %v4493
        %4495 = vmatmul.f32.gmra.mxu0 %v4384
        %v4496 = vpop.f32.mrf.mxu0
        %v4497 = vadd.f32 0.0, %v4496
        %4498 = vmatmul.f32.gmra.mxu0 %v4387
        %v4499 = vpop.f32.mrf.mxu0
        %v4500 = vadd.f32 0.0, %v4499
        %4501 = vmatmul.f32.gmra.mxu0 %v4390
        %v4502 = vpop.f32.mrf.mxu0
        %v4503 = vadd.f32 0.0, %v4502
        %4504 = vmatmul.f32.gmra.mxu0 %v4393
        %v4505 = vpop.f32.mrf.mxu0
        %v4506 = vadd.f32 0.0, %v4505
        %4507 = vmatmul.f32.gmra.mxu0 %v4396
        %v4508 = vpop.f32.mrf.mxu0
        %v4509 = vadd.f32 0.0, %v4508
        %4510 = vmatmul.f32.gmra.mxu0 %v4399
        %v4511 = vpop.f32.mrf.mxu0
        %v4512 = vadd.f32 0.0, %v4511
        %4513 = vmatmul.f32.gmra.mxu0 %v4402
        %v4514 = vpop.f32.mrf.mxu0
        %v4515 = vadd.f32 0.0, %v4514
        %4516 = vmatmul.f32.gmra.mxu0 %v4405
        %v4517 = vpop.f32.mrf.mxu0
        %v4518 = vadd.f32 0.0, %v4517
        %4519 = vmatmul.f32.gmra.mxu0 %v4408
        %v4520 = vpop.f32.mrf.mxu0
        %v4521 = vadd.f32 0.0, %v4520
        %4522 = vmatmul.f32.gmra.mxu0 %v4411
        %v4523 = vpop.f32.mrf.mxu0
        %v4524 = vadd.f32 0.0, %v4523
        %4525 = vmatmul.f32.gmra.mxu0 %v4414
        %v4526 = vpop.f32.mrf.mxu0
        %v4527 = vadd.f32 0.0, %v4526
        %4528 = vmatmul.f32.gmra.mxu0 %v4417
        %v4529 = vpop.f32.mrf.mxu0
        %v4530 = vadd.f32 0.0, %v4529
        %4531 = vmatmul.f32.gmra.mxu0 %v4420
        %v4532 = vpop.f32.mrf.mxu0
        %v4533 = vadd.f32 0.0, %v4532
        %4534 = vmatmul.f32.gmra.mxu0 %v4423
        %v4535 = vpop.f32.mrf.mxu0
        %v4536 = vadd.f32 0.0, %v4535
        %4537 = vmatmul.f32.gmra.mxu0 %v4426
        %v4538 = vpop.f32.mrf.mxu0
        %v4539 = vadd.f32 0.0, %v4538
        %4540 = vmatmul.f32.gmra.mxu0 %v4429
        %v4541 = vpop.f32.mrf.mxu0
        %v4542 = vadd.f32 0.0, %v4541
        %4543 = vmatmul.f32.gmra.mxu0 %v4432
        %v4544 = vpop.f32.mrf.mxu0
        %v4545 = vadd.f32 0.0, %v4544
        %4546 = vmatmul.f32.gmra.mxu0 %v4435
        %v4547 = vpop.f32.mrf.mxu0
        %v4548 = vadd.f32 0.0, %v4547
        %4549 = vmatmul.f32.gmra.mxu0 %v4438
        %v4550 = vpop.f32.mrf.mxu0
        %v4551 = vadd.f32 0.0, %v4550
        %4552 = vmatmul.f32.gmra.mxu0 %v4441
        %v4553 = vpop.f32.mrf.mxu0
        %v4554 = vadd.f32 0.0, %v4553
        %4555 = vmatmul.f32.gmra.mxu0 %v4444
        %v4556 = vpop.f32.mrf.mxu0
        %v4557 = vadd.f32 0.0, %v4556
        %4558 = vdwg.mxu0
        %v4559 = vadd.f32 %v3825, %v4464
        %v4560 = vadd.f32 %v3828, %v4467
        %v4561 = vadd.f32 %v3831, %v4470
        %v4562 = vadd.f32 %v3834, %v4473
        %v4563 = vadd.f32 %v3837, %v4476
        %v4564 = vadd.f32 %v3840, %v4479
        %v4565 = vadd.f32 %v3843, %v4482
        %v4566 = vadd.f32 %v3846, %v4485
        %v4567 = vadd.f32 %v3849, %v4488
        %v4568 = vadd.f32 %v3852, %v4491
        %v4569 = vadd.f32 %v3855, %v4494
        %v4570 = vadd.f32 %v3858, %v4497
        %v4571 = vadd.f32 %v3861, %v4500
        %v4572 = vadd.f32 %v3864, %v4503
        %v4573 = vadd.f32 %v3867, %v4506
        %v4574 = vadd.f32 %v3870, %v4509
        %v4575 = vadd.f32 %v3873, %v4512
        %v4576 = vadd.f32 %v3876, %v4515
        %v4577 = vadd.f32 %v3879, %v4518
        %v4578 = vadd.f32 %v3882, %v4521
        %v4579 = vadd.f32 %v3885, %v4524
        %v4580 = vadd.f32 %v3888, %v4527
        %v4581 = vadd.f32 %v3891, %v4530
        %v4582 = vadd.f32 %v3894, %v4533
        %v4583 = vadd.f32 %v3897, %v4536
        %v4584 = vadd.f32 %v3900, %v4539
        %v4585 = vadd.f32 %v3903, %v4542
        %v4586 = vadd.f32 %v3906, %v4545
        %v4587 = vadd.f32 %v3909, %v4548
        %v4588 = vadd.f32 %v3912, %v4551
        %v4589 = vadd.f32 %v3915, %v4554
        %v4590 = vadd.f32 %v3918, %v4557
        %v4591 = vld [vmem:[%s402] sm:$0x1]
        %v4593 = vperm.slane %v4591, 0
        %v4595 = vmul.f32 %v4559, %v4593
        %v4596 = vmul.f32 %v4560, %v4593
        %v4597 = vmul.f32 %v4561, %v4593
        %v4598 = vmul.f32 %v4562, %v4593
        %v4599 = vmul.f32 %v4563, %v4593
        %v4600 = vmul.f32 %v4564, %v4593
        %v4601 = vmul.f32 %v4565, %v4593
        %v4602 = vmul.f32 %v4566, %v4593
        %v4603 = vmul.f32 %v4567, %v4593
        %v4604 = vmul.f32 %v4568, %v4593
        %v4605 = vmul.f32 %v4569, %v4593
        %v4606 = vmul.f32 %v4570, %v4593
        %v4607 = vmul.f32 %v4571, %v4593
        %v4608 = vmul.f32 %v4572, %v4593
        %v4609 = vmul.f32 %v4573, %v4593
        %v4610 = vmul.f32 %v4574, %v4593
        %v4611 = vmul.f32 %v4575, %v4593
        %v4612 = vmul.f32 %v4576, %v4593
        %v4613 = vmul.f32 %v4577, %v4593
        %v4614 = vmul.f32 %v4578, %v4593
        %v4615 = vmul.f32 %v4579, %v4593
        %v4616 = vmul.f32 %v4580, %v4593
        %v4617 = vmul.f32 %v4581, %v4593
        %v4618 = vmul.f32 %v4582, %v4593
        %v4619 = vmul.f32 %v4583, %v4593
        %v4620 = vmul.f32 %v4584, %v4593
        %v4621 = vmul.f32 %v4585, %v4593
        %v4622 = vmul.f32 %v4586, %v4593
        %v4623 = vmul.f32 %v4587, %v4593
        %v4624 = vmul.f32 %v4588, %v4593
        %v4625 = vmul.f32 %v4589, %v4593
        %v4626 = vmul.f32 %v4590, %v4593
        %v4627 = vld [vmem:[%s405] sm:$0x1]
        %v4629 = vperm.slane %v4627, 0
        %v4631 = vadd.f32 %v4595, %v4629
        %v4632 = vadd.f32 %v4596, %v4629
        %v4633 = vadd.f32 %v4597, %v4629
        %v4634 = vadd.f32 %v4598, %v4629
        %v4635 = vadd.f32 %v4599, %v4629
        %v4636 = vadd.f32 %v4600, %v4629
        %v4637 = vadd.f32 %v4601, %v4629
        %v4638 = vadd.f32 %v4602, %v4629
        %v4639 = vadd.f32 %v4603, %v4629
        %v4640 = vadd.f32 %v4604, %v4629
        %v4641 = vadd.f32 %v4605, %v4629
        %v4642 = vadd.f32 %v4606, %v4629
        %v4643 = vadd.f32 %v4607, %v4629
        %v4644 = vadd.f32 %v4608, %v4629
        %v4645 = vadd.f32 %v4609, %v4629
        %v4646 = vadd.f32 %v4610, %v4629
        %v4647 = vadd.f32 %v4611, %v4629
        %v4648 = vadd.f32 %v4612, %v4629
        %v4649 = vadd.f32 %v4613, %v4629
        %v4650 = vadd.f32 %v4614, %v4629
        %v4651 = vadd.f32 %v4615, %v4629
        %v4652 = vadd.f32 %v4616, %v4629
        %v4653 = vadd.f32 %v4617, %v4629
        %v4654 = vadd.f32 %v4618, %v4629
        %v4655 = vadd.f32 %v4619, %v4629
        %v4656 = vadd.f32 %v4620, %v4629
        %v4657 = vadd.f32 %v4621, %v4629
        %v4658 = vadd.f32 %v4622, %v4629
        %v4659 = vadd.f32 %v4623, %v4629
        %v4660 = vadd.f32 %v4624, %v4629
        %v4661 = vadd.f32 %v4625, %v4629
        %v4662 = vadd.f32 %v4626, %v4629
        %v4663 = vld [vmem:[%s340] sm:$0xff]
        %v4664 = vld [vmem:[%s340 + $0x8] sm:$0xff]
        %v4665 = vld [vmem:[%s340 + $0x10] sm:$0xff]
        %v4666 = vld [vmem:[%s340 + $0x18] sm:$0xff]
        %v4667 = vld [vmem:[%s340 + $0x20] sm:$0xff]
        %v4668 = vld [vmem:[%s340 + $0x28] sm:$0xff]
        %v4669 = vld [vmem:[%s340 + $0x30] sm:$0xff]
        %v4670 = vld [vmem:[%s340 + $0x38] sm:$0xff]
        %v4671 = vld [vmem:[%s340 + $0x40] sm:$0xff]
        %v4672 = vld [vmem:[%s340 + $0x48] sm:$0xff]
        %v4673 = vld [vmem:[%s340 + $0x50] sm:$0xff]
        %v4674 = vld [vmem:[%s340 + $0x58] sm:$0xff]
        %v4675 = vld [vmem:[%s340 + $0x60] sm:$0xff]
        %v4676 = vld [vmem:[%s340 + $0x68] sm:$0xff]
        %v4677 = vld [vmem:[%s340 + $0x70] sm:$0xff]
        %v4678 = vld [vmem:[%s340 + $0x78] sm:$0xff]
        %v4679 = vld [vmem:[%s340 + $0x80] sm:$0xff]
        %v4680 = vld [vmem:[%s340 + $0x88] sm:$0xff]
        %v4681 = vld [vmem:[%s340 + $0x90] sm:$0xff]
        %v4682 = vld [vmem:[%s340 + $0x98] sm:$0xff]
        %v4683 = vld [vmem:[%s340 + $0xa0] sm:$0xff]
        %v4684 = vld [vmem:[%s340 + $0xa8] sm:$0xff]
        %v4685 = vld [vmem:[%s340 + $0xb0] sm:$0xff]
        %v4686 = vld [vmem:[%s340 + $0xb8] sm:$0xff]
        %v4687 = vld [vmem:[%s340 + $0xc0] sm:$0xff]
        %v4688 = vld [vmem:[%s340 + $0xc8] sm:$0xff]
        %v4689 = vld [vmem:[%s340 + $0xd0] sm:$0xff]
        %v4690 = vld [vmem:[%s340 + $0xd8] sm:$0xff]
        %v4691 = vld [vmem:[%s340 + $0xe0] sm:$0xff]
        %v4692 = vld [vmem:[%s340 + $0xe8] sm:$0xff]
        %v4693 = vld [vmem:[%s340 + $0xf0] sm:$0xff]
        %v4694 = vld [vmem:[%s340 + $0xf8] sm:$0xff]
        %v4695 = vadd.f32 %v4631, %v4663
        %v4696 = vadd.f32 %v4632, %v4664
        %v4697 = vadd.f32 %v4633, %v4665
        %v4698 = vadd.f32 %v4634, %v4666
        %v4699 = vadd.f32 %v4635, %v4667
        %v4700 = vadd.f32 %v4636, %v4668
        %v4701 = vadd.f32 %v4637, %v4669
        %v4702 = vadd.f32 %v4638, %v4670
        %v4703 = vadd.f32 %v4639, %v4671
        %v4704 = vadd.f32 %v4640, %v4672
        %v4705 = vadd.f32 %v4641, %v4673
        %v4706 = vadd.f32 %v4642, %v4674
        %v4707 = vadd.f32 %v4643, %v4675
        %v4708 = vadd.f32 %v4644, %v4676
        %v4709 = vadd.f32 %v4645, %v4677
        %v4710 = vadd.f32 %v4646, %v4678
        %v4711 = vadd.f32 %v4647, %v4679
        %v4712 = vadd.f32 %v4648, %v4680
        %v4713 = vadd.f32 %v4649, %v4681
        %v4714 = vadd.f32 %v4650, %v4682
        %v4715 = vadd.f32 %v4651, %v4683
        %v4716 = vadd.f32 %v4652, %v4684
        %v4717 = vadd.f32 %v4653, %v4685
        %v4718 = vadd.f32 %v4654, %v4686
        %v4719 = vadd.f32 %v4655, %v4687
        %v4720 = vadd.f32 %v4656, %v4688
        %v4721 = vadd.f32 %v4657, %v4689
        %v4722 = vadd.f32 %v4658, %v4690
        %v4723 = vadd.f32 %v4659, %v4691
        %v4724 = vadd.f32 %v4660, %v4692
        %v4725 = vadd.f32 %v4661, %v4693
        %v4726 = vadd.f32 %v4662, %v4694
        %v4727 = vmax.f32 %v4695, 0.0
        %v4728 = vmax.f32 %v4696, 0.0
        %v4729 = vmax.f32 %v4697, 0.0
        %v4730 = vmax.f32 %v4698, 0.0
        %v4731 = vmax.f32 %v4699, 0.0
        %v4732 = vmax.f32 %v4700, 0.0
        %v4733 = vmax.f32 %v4701, 0.0
        %v4734 = vmax.f32 %v4702, 0.0
        %v4735 = vmax.f32 %v4703, 0.0
        %v4736 = vmax.f32 %v4704, 0.0
        %v4737 = vmax.f32 %v4705, 0.0
        %v4738 = vmax.f32 %v4706, 0.0
        %v4739 = vmax.f32 %v4707, 0.0
        %v4740 = vmax.f32 %v4708, 0.0
        %v4741 = vmax.f32 %v4709, 0.0
        %v4742 = vmax.f32 %v4710, 0.0
        %v4743 = vmax.f32 %v4711, 0.0
        %v4744 = vmax.f32 %v4712, 0.0
        %v4745 = vmax.f32 %v4713, 0.0
        %v4746 = vmax.f32 %v4714, 0.0
        %v4747 = vmax.f32 %v4715, 0.0
        %v4748 = vmax.f32 %v4716, 0.0
        %v4749 = vmax.f32 %v4717, 0.0
        %v4750 = vmax.f32 %v4718, 0.0
        %v4751 = vmax.f32 %v4719, 0.0
        %v4752 = vmax.f32 %v4720, 0.0
        %v4753 = vmax.f32 %v4721, 0.0
        %v4754 = vmax.f32 %v4722, 0.0
        %v4755 = vmax.f32 %v4723, 0.0
        %v4756 = vmax.f32 %v4724, 0.0
        %v4757 = vmax.f32 %v4725, 0.0
        %v4758 = vmax.f32 %v4726, 0.0
        %4759 = vst.msk [vmem:[%s393] sm:$0xff] %vm438, %v4727
        %4760 = vst.msk [vmem:[%s393 + $0x8] sm:$0xff] %vm438, %v4728
        %4761 = vst.msk [vmem:[%s393 + $0x10] sm:$0xff] %vm438, %v4729
        %4762 = vst.msk [vmem:[%s393 + $0x18] sm:$0xff] %vm438, %v4730
        %4763 = vst.msk [vmem:[%s393 + $0x20] sm:$0xff] %vm438, %v4731
        %4764 = vst.msk [vmem:[%s393 + $0x28] sm:$0xff] %vm438, %v4732
        %4765 = vst.msk [vmem:[%s393 + $0x30] sm:$0xff] %vm438, %v4733
        %4766 = vst.msk [vmem:[%s393 + $0x38] sm:$0xff] %vm438, %v4734
        %4767 = vst.msk [vmem:[%s393 + $0x40] sm:$0xff] %vm438, %v4735
        %4768 = vst.msk [vmem:[%s393 + $0x48] sm:$0xff] %vm438, %v4736
        %4769 = vst.msk [vmem:[%s393 + $0x50] sm:$0xff] %vm438, %v4737
        %4770 = vst.msk [vmem:[%s393 + $0x58] sm:$0xff] %vm438, %v4738
        %4771 = vst.msk [vmem:[%s393 + $0x60] sm:$0xff] %vm438, %v4739
        %4772 = vst.msk [vmem:[%s393 + $0x68] sm:$0xff] %vm438, %v4740
        %4773 = vst.msk [vmem:[%s393 + $0x70] sm:$0xff] %vm438, %v4741
        %4774 = vst.msk [vmem:[%s393 + $0x78] sm:$0xff] %vm438, %v4742
        %4775 = vst.msk [vmem:[%s393 + $0x80] sm:$0xff] %vm438, %v4743
        %4776 = vst.msk [vmem:[%s393 + $0x88] sm:$0xff] %vm438, %v4744
        %4777 = vst.msk [vmem:[%s393 + $0x90] sm:$0xff] %vm438, %v4745
        %4778 = vst.msk [vmem:[%s393 + $0x98] sm:$0xff] %vm438, %v4746
        %4779 = vst.msk [vmem:[%s393 + $0xa0] sm:$0xff] %vm438, %v4747
        %4780 = vst.msk [vmem:[%s393 + $0xa8] sm:$0xff] %vm438, %v4748
        %4781 = vst.msk [vmem:[%s393 + $0xb0] sm:$0xff] %vm438, %v4749
        %4782 = vst.msk [vmem:[%s393 + $0xb8] sm:$0xff] %vm438, %v4750
        %4783 = vst.msk [vmem:[%s393 + $0xc0] sm:$0xff] %vm438, %v4751
        %4784 = vst.msk [vmem:[%s393 + $0xc8] sm:$0xff] %vm438, %v4752
        %4785 = vst.msk [vmem:[%s393 + $0xd0] sm:$0xff] %vm438, %v4753
        %4786 = vst.msk [vmem:[%s393 + $0xd8] sm:$0xff] %vm438, %v4754
        %4787 = vst.msk [vmem:[%s393 + $0xe0] sm:$0xff] %vm438, %v4755
        %4788 = vst.msk [vmem:[%s393 + $0xe8] sm:$0xff] %vm438, %v4756
        %4789 = vst.msk [vmem:[%s393 + $0xf0] sm:$0xff] %vm438, %v4757
        %4790 = vst.msk [vmem:[%s393 + $0xf8] sm:$0xff] %vm438, %v4758
        %s4791 = sand.u32 %s221, 1
        %s4792 = scalar_lea.sflag [#allocation6], %s4791
        %s4793 = sand.u32 %s221, 1
        %s4794 = smul.addr %s4793, 256
        %s4795 = scalar_lea.vmem [#allocation10], %s4794
        // Predicated region
        $region61: #{_forward_impl.1} parent=47 // pred_check
          %p4796 = pneg %p231
        $region62: #{_forward_impl.1} parent=47 // pred_check_branch
          %4798 = sbr.rel (%p4796) target = $region64
        $region63: #{_forward_impl.1} parent=47 // pred_region
          %4800 = vsyncadd %s4792, 0
          %s4801 = smul.addr %s30, 32
          %s4802 = smul.addr %s29, 64
          %s4803 = sadd.s32 %s4801, %s4802
          %s4804 = smul.addr %s4803, 8
          %s4805 = scalar_lea.hbm %s7, %s4804
          %s4806 = sshll.u32 %s4795, 4
          %s4807 = int_to_ptr.vmem [resolvable:$true] %s4806
          %s4808 = sshll.u32 %s4805, 4
          %s4809 = int_to_ptr.hbm [resolvable:$true] %s4808
          %4814 = dma.vmem_to_hbm [thread:$0]  %s4807, 4096, %s4809, %s4792, 128, 128, 8
        $region64: #{_forward_impl.1} parent=47 // pred_fallthru
          _
      $region48: #{_forward_impl.1} parent=5 // pred_fallthru
        _
      %p4815 = scmp.le.s32.totalorder 2, %s20
      // Predicated region
      $region65: #{_forward_impl.1} parent=5 // pred_check
        %p4816 = pneg %p4815
      $region66: #{_forward_impl.1} parent=5 // pred_check_branch
        %4818 = sbr.rel (%p4816) target = $region68
      $region67: #{_forward_impl.1} parent=5 // pred_region
        %s4819 = ssub.s32 %s20, 2
        // Predicated region
        $region69: #{_forward_impl.1} parent=67 // pred_check
          %p4820 = pneg %p237
        $region70: #{_forward_impl.1} parent=67 // pred_check_branch
          %4822 = sbr.rel (%p4820) target = $region72
        $region71: #{_forward_impl.1} parent=67 // pred_region
          %s4823 = sand.u32 %s222, 1
          %s4824 = scalar_lea.sflag [#allocation6], %s4823
          %s4825 = sand.u32 %s222, 1
          %s4826 = smul.addr %s4825, 256
          %s4827 = scalar_lea.vmem [#allocation10], %s4826
          %4829 = dma.done %s4824, 4096
        $region72: #{_forward_impl.1} parent=67 // pred_fallthru
          _
      $region68: #{_forward_impl.1} parent=5 // pred_fallthru
        _
    $region6: #{_forward_impl.1} parent=1 // loop_footer
      %s24 = sadd.s32 1, %s20
    $region7: #{_forward_impl.1} parent=1 // loop_footer_branch
      %19 = sbr.rel target = $region3
    $region8: #{_forward_impl.1} parent=1 // loop_exit
      _
    %4830 = vsyncpa [#allocation5], 1
    %s4831 = scalar_lea.sflag [#allocation5], 1
    %4832 = vsyncpa %s4831, 1
    %4833 = vsyncpa [#allocation8], 1
    %4834 = vsyncpa [#allocation6], 1
    %s4835 = scalar_lea.sflag [#allocation6], 1
    %4836 = vsyncpa %s4835, 1

</llo_original>
